<compile_context>
chip_gen: v6e
topology: v6e:2x2x1
jax: 0.10.0
libtpu: 0.0.40
codegen_flags: <defaults>
</compile_context>

<pallas_src>
import math

import jax
import jax.numpy as jnp
from jax.experimental import pallas as pl
from jax.experimental.pallas import tpu as pltpu


_VMEM_LIMIT_BYTES = 48 * 1024 * 1024   # > default scoped limit, < physical on v5e/v6e/v7x
_MAX_FUSED_NODES = 2048                # bf16 A_hat (double buffered) <= ~16 MiB at this size


def _compiler_params(dims):
    return pltpu.CompilerParams(dimension_semantics=dims,
                                vmem_limit_bytes=_VMEM_LIMIT_BYTES)


def _const_spec(shape):
    # Small resident parameter (weights / bias): constant block index.
    return pl.BlockSpec(shape, lambda i, k, _n=len(shape): (0,) * _n)


# ----------------------------------------------------------------------------
# Fused whole-network kernel (A_hat VMEM-resident across all 5 layers)
# ----------------------------------------------------------------------------
def _fused_kernel(a_ref, x_ref,
                  w1_ref, b1_ref, r1w_ref, r1b_ref,
                  w2_ref, b2_ref, r2w_ref, r2b_ref,
                  wmp_ref, bmp_ref,
                  w3_ref, b3_ref, r3w_ref, r3b_ref,
                  w4_ref, b4_ref, r4w_ref, r4b_ref,
                  o_ref):
    a = a_ref[...]  # (Np, Np) bf16, read from VMEM once, reused by every layer

    def gcn(x, w_ref, b_ref):
        ax = jnp.dot(a, x.astype(jnp.bfloat16), preferred_element_type=jnp.float32)
        return jnp.dot(ax, w_ref[...], preferred_element_type=jnp.float32) + b_ref[...]

    def block(x, w_ref, b_ref, rw_ref, rb_ref):
        ident = jnp.dot(x, rw_ref[...], preferred_element_type=jnp.float32) + rb_ref[...]
        return jnp.maximum(gcn(x, w_ref, b_ref), 0.0) + ident

    x0 = x_ref[...]
    x1 = block(x0, w1_ref, b1_ref, r1w_ref, r1b_ref)          # encoder.layer1
    x2 = block(x1, w2_ref, b2_ref, r2w_ref, r2b_ref)          # encoder.layer2
    dec_in = x1 + gcn(x2, wmp_ref, bmp_ref)                   # message_passing + skip
    d1 = block(dec_in, w3_ref, b3_ref, r3w_ref, r3b_ref)      # decoder.layer1
    out = block(d1, w4_ref, b4_ref, r4w_ref, r4b_ref)         # decoder.layer2
    o_ref[...] = out.astype(o_ref.dtype)


def _fused_forward(a, x, enc1, enc2, mp, dec1, dec2):
    np_ = a.shape[0]
    cout = dec2[0].shape[1]
    args = [a, x, *enc1, *enc2, *mp, *dec1, *dec2]
    in_specs = [pl.BlockSpec(v.shape, lambda i, _n=v.ndim: (0,) * _n) for v in args]
    return pl.pallas_call(
        _fused_kernel,
        out_shape=jax.ShapeDtypeStruct((np_, cout), x.dtype),
        grid_spec=pltpu.PrefetchScalarGridSpec(
            num_scalar_prefetch=0,
            grid=(1,),
            in_specs=in_specs,
            out_specs=pl.BlockSpec((np_, cout), lambda i: (0, 0)),
        ),
        compiler_params=_compiler_params(("arbitrary",)),
    )(*args)


# ----------------------------------------------------------------------------
# Per-layer tiled kernels (large-graph fallback)
# ----------------------------------------------------------------------------
def _accumulate(a_ref, xk_ref, acc_ref):
    """acc += A[i_tile, k_tile] @ X[k_tile, :] (bf16 MXU, f32 accumulation)."""
    @pl.when(pl.program_id(1) == 0)
    def _():
        acc_ref[...] = jnp.zeros_like(acc_ref)

    acc_ref[...] += jnp.dot(a_ref[...], xk_ref[...].astype(jnp.bfloat16),
                            preferred_element_type=jnp.float32)


def _gcn_block_kernel(a_ref, xk_ref, xi_ref, w_ref, b_ref, rw_ref, rb_ref,
                      o_ref, acc_ref):
    """ConvResidualBlock (BN folded into w/b; residual always explicit linear)."""
    _accumulate(a_ref, xk_ref, acc_ref)

    @pl.when(pl.program_id(1) == pl.num_programs(1) - 1)
    def _():
        h = jnp.dot(acc_ref[...], w_ref[...],
                    preferred_element_type=jnp.float32) + b_ref[...]
        ident = jnp.dot(xi_ref[...], rw_ref[...],
                        preferred_element_type=jnp.float32) + rb_ref[...]
        o_ref[...] = (jnp.maximum(h, 0.0) + ident).astype(o_ref.dtype)


def _gcn_skip_kernel(a_ref, xk_ref, skip_ref, w_ref, b_ref, o_ref, acc_ref):
    """message_passing GCNConv fused with the 'x1 + gcn(x2)' skip add."""
    _accumulate(a_ref, xk_ref, acc_ref)

    @pl.when(pl.program_id(1) == pl.num_programs(1) - 1)
    def _():
        h = jnp.dot(acc_ref[...], w_ref[...],
                    preferred_element_type=jnp.float32) + b_ref[...]
        o_ref[...] = (h + skip_ref[...].astype(jnp.float32)).astype(o_ref.dtype)


def gcn_residual_block(a, x, w, b, rw, rb, *, tile_i=512, tile_k=512):
    np_ = a.shape[0]
    cin, cout = w.shape
    assert np_ % tile_i == 0 and np_ % tile_k == 0
    grid = (np_ // tile_i, np_ // tile_k)
    in_specs = [
        pl.BlockSpec((tile_i, tile_k), lambda i, k: (i, k)),  # A_hat tile (bf16)
        pl.BlockSpec((tile_k, cin), lambda i, k: (k, 0)),     # X rows for reduction
        pl.BlockSpec((tile_i, cin), lambda i, k: (i, 0)),     # X rows for residual
        _const_spec((cin, cout)),                             # W (BN folded)
        _const_spec((1, cout)),                               # b (BN folded)
        _const_spec((cin, cout)),                             # residual W (eye if identity)
        _const_spec((1, cout)),                               # residual b
    ]
    return pl.pallas_call(
        _gcn_block_kernel,
        out_shape=jax.ShapeDtypeStruct((np_, cout), x.dtype),
        grid_spec=pltpu.PrefetchScalarGridSpec(
            num_scalar_prefetch=0,
            grid=grid,
            in_specs=in_specs,
            out_specs=pl.BlockSpec((tile_i, cout), lambda i, k: (i, 0)),
            scratch_shapes=[pltpu.VMEM((tile_i, cin), jnp.float32)],
        ),
        compiler_params=_compiler_params(("parallel", "arbitrary")),
    )(a, x, x, w, b, rw, rb)


def gcn_plus_skip(a, x, skip, w, b, *, tile_i=512, tile_k=512):
    np_ = a.shape[0]
    cin, cout = w.shape
    assert np_ % tile_i == 0 and np_ % tile_k == 0
    grid = (np_ // tile_i, np_ // tile_k)
    in_specs = [
        pl.BlockSpec((tile_i, tile_k), lambda i, k: (i, k)),
        pl.BlockSpec((tile_k, cin), lambda i, k: (k, 0)),
        pl.BlockSpec((tile_i, cout), lambda i, k: (i, 0)),
        _const_spec((cin, cout)),
        _const_spec((1, cout)),
    ]
    return pl.pallas_call(
        _gcn_skip_kernel,
        out_shape=jax.ShapeDtypeStruct((np_, cout), x.dtype),
        grid_spec=pltpu.PrefetchScalarGridSpec(
            num_scalar_prefetch=0,
            grid=grid,
            in_specs=in_specs,
            out_specs=pl.BlockSpec((tile_i, cout), lambda i, k: (i, 0)),
            scratch_shapes=[pltpu.VMEM((tile_i, cin), jnp.float32)],
        ),
        compiler_params=_compiler_params(("parallel", "arbitrary")),
    )(a, x, skip, w, b)


# ----------------------------------------------------------------------------
# Graph preprocessing (built directly at padded size) & parameter folding
# ----------------------------------------------------------------------------
def gcn_norm_dense_padded(edge_index, num_nodes, padded_nodes):
    """Dense D^{-1/2}(A+I)D^{-1/2} at padded size; padding rows/cols stay zero."""
    src, dst = edge_index[0], edge_index[1]
    a = jnp.zeros((padded_nodes, padded_nodes), jnp.float32).at[dst, src].add(1.0)
    idx = jnp.arange(num_nodes)
    a = a.at[idx, idx].set(1.0)        # exactly one unit self loop per real node
    deg = a.sum(axis=1)
    d_inv_sqrt = jnp.where(deg > 0, jax.lax.rsqrt(deg), 0.0)
    return d_inv_sqrt[:, None] * a * d_inv_sqrt[None, :]


def _fold_block(p):
    """Fold eval-mode BatchNorm into (w, b); normalize residual to explicit linear."""
    w, b, scale, shift = p[:4]
    cin, cout = w.shape
    if len(p) == 6:
        rw, rb = p[4], p[5]
    else:
        rw = jnp.eye(cin, cout, dtype=w.dtype)
        rb = jnp.zeros((1, cout), w.dtype)
    return w * scale, b * scale + shift, rw, rb


# ----------------------------------------------------------------------------
# Full forward
# ----------------------------------------------------------------------------
def encoder_decoder_forward(x, edge_index, params, *, tile_i=512, tile_k=512,
                            max_fused_nodes=_MAX_FUSED_NODES,
                            a_dtype=jnp.bfloat16):
    n, cin = x.shape
    enc1 = _fold_block(params["enc1"])
    enc2 = _fold_block(params["enc2"])
    mp = params["mp"]
    dec1 = _fold_block(params["dec1"])
    dec2 = _fold_block(params["dec2"])

    fused = n <= max_fused_nodes
    step = 128 if fused else math.lcm(tile_i, tile_k)
    np_ = -(-n // step) * step

    a = gcn_norm_dense_padded(edge_index, n, np_).astype(a_dtype)
    x_pad = jnp.zeros((np_, cin), x.dtype).at[:n].set(x)

    if fused:
        out = _fused_forward(a, x_pad, enc1, enc2, mp, dec1, dec2)
    else:
        # n > max_fused_nodes guarantees >= 2 row tiles -> both v7x cores busy.
        x1 = gcn_residual_block(a, x_pad, *enc1, tile_i=tile_i, tile_k=tile_k)
        x2 = gcn_residual_block(a, x1, *enc2, tile_i=tile_i, tile_k=tile_k)
        dec_in = gcn_plus_skip(a, x2, x1, *mp, tile_i=tile_i, tile_k=tile_k)
        d1 = gcn_residual_block(a, dec_in, *dec1, tile_i=tile_i, tile_k=tile_k)
        out = gcn_residual_block(a, d1, *dec2, tile_i=tile_i, tile_k=tile_k)
    return out[:n]


# ----------------------------------------------------------------------------
# Pure-JAX reference (mirrors the PyTorch forward, eval-mode BatchNorm, f32 A)
# ----------------------------------------------------------------------------
def encoder_decoder_ref(x, edge_index, params):
    n = x.shape[0]
    a = gcn_norm_dense_padded(edge_index, n, n)

    def gcn(h, w, b):
        return a @ (h @ w) + b

    def block(h, p):
        w, b, scale, shift = p[:4]
        ident = h @ p[4] + p[5] if len(p) == 6 else h
        return jnp.maximum(gcn(h, w, b) * scale + shift, 0.0) + ident

    x1 = block(x, params["enc1"])
    x2 = block(x1, params["enc2"])
    dec_in = x1 + gcn(x2, *params["mp"])
    d1 = block(dec_in, params["dec1"])
    return block(d1, params["dec2"])


# ----------------------------------------------------------------------------
# Demo / self-check
# ----------------------------------------------------------------------------
def _uniform(key, shape, bound):
    return jax.random.uniform(key, shape, minval=-bound, maxval=bound,
                              dtype=jnp.float32)


def _make_matbias(key, cin, cout):
    kw, kb = jax.random.split(key)
    bound = 1.0 / (cin ** 0.5)
    return _uniform(kw, (cin, cout), bound), _uniform(kb, (1, cout), bound)


def _make_bn(key, c, eps=1e-5):
    kg, kb, km, kv = jax.random.split(key, 4)
    gamma = 1.0 + 0.1 * jax.random.normal(kg, (1, c), dtype=jnp.float32)
    beta = 0.1 * jax.random.normal(kb, (1, c), dtype=jnp.float32)
    mean = 0.1 * jax.random.normal(km, (1, c), dtype=jnp.float32)
    var = jax.random.uniform(kv, (1, c), minval=0.5, maxval=1.5, dtype=jnp.float32)
    scale = gamma / jnp.sqrt(var + eps)       # folded inference-mode BN
    shift = beta - mean * scale
    return scale, shift


if __name__ == "__main__":
    key = jax.random.PRNGKey(0)
    k_x, k_e, k_p = jax.random.split(key, 3)

    in_ch, hid, out_ch = 16, 32, 8
    n_nodes, n_edges = 200, 800

    x = jax.random.normal(k_x, (n_nodes, in_ch), dtype=jnp.float32)
    edge_index = jax.random.randint(k_e, (2, n_edges), 0, n_nodes, dtype=jnp.int32)

    ks = jax.random.split(k_p, 11)
    params = {
        # ConvResidualBlock(in_ch -> hid): Linear residual
        "enc1": (*_make_matbias(ks[0], in_ch, hid), *_make_bn(ks[1], hid),
                 *_make_matbias(ks[2], in_ch, hid)),
        # ConvResidualBlock(hid -> hid): identity residual
        "enc2": (*_make_matbias(ks[3], hid, hid), *_make_bn(ks[4], hid)),
        # message_passing GCNConv(hid -> hid)
        "mp": _make_matbias(ks[5], hid, hid),
        # ConvResidualBlock(hid -> hid): identity residual
        "dec1": (*_make_matbias(ks[6], hid, hid), *_make_bn(ks[7], hid)),
        # ConvResidualBlock(hid -> out_ch): Linear residual
        "dec2": (*_make_matbias(ks[8], hid, out_ch), *_make_bn(ks[9], out_ch),
                 *_make_matbias(ks[10], hid, out_ch)),
    }

    # Path 1: fused whole-network kernel (default for small graphs).
    out_fused = jax.block_until_ready(
        encoder_decoder_forward(x, edge_index, params))
    # Path 2: tiled per-layer kernels (forced, small tiles to exercise the k-loop).
    out_tiled = jax.block_until_ready(
        encoder_decoder_forward(x, edge_index, params,
                                tile_i=128, tile_k=128, max_fused_nodes=0))

    ref = encoder_decoder_ref(x, edge_index, params)
    assert out_fused.shape == (n_nodes, out_ch)
    assert out_tiled.shape == (n_nodes, out_ch)
    # bf16 A_hat / bf16 A@X operands -> loosened tolerance vs the f32 reference.
    assert jnp.allclose(out_fused, ref, atol=5e-2, rtol=5e-2), "fused path mismatch"
    assert jnp.allclose(out_tiled, ref, atol=5e-2, rtol=5e-2), "tiled path mismatch"

    print("KERNEL_OK")
</pallas_src>

<mosaic_0001>
module attributes {stable_mosaic.version = 11 : i64} {
  func.func @_fused_kernel(%arg0: i32, %arg1: memref<256x256xbf16, #tpu.memory_space<vmem>>, %arg2: memref<256x16xf32, #tpu.memory_space<vmem>>, %arg3: memref<16x32xf32, #tpu.memory_space<vmem>>, %arg4: memref<1x32xf32, #tpu.memory_space<vmem>>, %arg5: memref<16x32xf32, #tpu.memory_space<vmem>>, %arg6: memref<1x32xf32, #tpu.memory_space<vmem>>, %arg7: memref<32x32xf32, #tpu.memory_space<vmem>>, %arg8: memref<1x32xf32, #tpu.memory_space<vmem>>, %arg9: memref<32x32xf32, #tpu.memory_space<vmem>>, %arg10: memref<1x32xf32, #tpu.memory_space<vmem>>, %arg11: memref<32x32xf32, #tpu.memory_space<vmem>>, %arg12: memref<1x32xf32, #tpu.memory_space<vmem>>, %arg13: memref<32x32xf32, #tpu.memory_space<vmem>>, %arg14: memref<1x32xf32, #tpu.memory_space<vmem>>, %arg15: memref<32x32xf32, #tpu.memory_space<vmem>>, %arg16: memref<1x32xf32, #tpu.memory_space<vmem>>, %arg17: memref<32x8xf32, #tpu.memory_space<vmem>>, %arg18: memref<1x8xf32, #tpu.memory_space<vmem>>, %arg19: memref<32x8xf32, #tpu.memory_space<vmem>>, %arg20: memref<1x8xf32, #tpu.memory_space<vmem>>, %arg21: memref<256x8xf32, #tpu.memory_space<vmem>>) attributes {dimension_semantics = [#tpu.dimension_semantics<arbitrary>], iteration_bounds = array<i64: 1>, scalar_prefetch = 0 : i64, scratch_operands = 0 : i64, tpu.core_type = #tpu.core_type<tc>, window_params = [{pipeline_mode = #tpu.pipeline_mode<synchronous>, transform_indices = @transform_0, window_bounds = array<i64: 256, 256>}, {pipeline_mode = #tpu.pipeline_mode<synchronous>, transform_indices = @transform_1, window_bounds = array<i64: 256, 16>}, {pipeline_mode = #tpu.pipeline_mode<synchronous>, transform_indices = @transform_2, window_bounds = array<i64: 16, 32>}, {pipeline_mode = #tpu.pipeline_mode<synchronous>, transform_indices = @transform_3, window_bounds = array<i64: 1, 32>}, {pipeline_mode = #tpu.pipeline_mode<synchronous>, transform_indices = @transform_4, window_bounds = array<i64: 16, 32>}, {pipeline_mode = #tpu.pipeline_mode<synchronous>, transform_indices = @transform_5, window_bounds = array<i64: 1, 32>}, {pipeline_mode = #tpu.pipeline_mode<synchronous>, transform_indices = @transform_6, window_bounds = array<i64: 32, 32>}, {pipeline_mode = #tpu.pipeline_mode<synchronous>, transform_indices = @transform_7, window_bounds = array<i64: 1, 32>}, {pipeline_mode = #tpu.pipeline_mode<synchronous>, transform_indices = @transform_8, window_bounds = array<i64: 32, 32>}, {pipeline_mode = #tpu.pipeline_mode<synchronous>, transform_indices = @transform_9, window_bounds = array<i64: 1, 32>}, {pipeline_mode = #tpu.pipeline_mode<synchronous>, transform_indices = @transform_10, window_bounds = array<i64: 32, 32>}, {pipeline_mode = #tpu.pipeline_mode<synchronous>, transform_indices = @transform_11, window_bounds = array<i64: 1, 32>}, {pipeline_mode = #tpu.pipeline_mode<synchronous>, transform_indices = @transform_12, window_bounds = array<i64: 32, 32>}, {pipeline_mode = #tpu.pipeline_mode<synchronous>, transform_indices = @transform_13, window_bounds = array<i64: 1, 32>}, {pipeline_mode = #tpu.pipeline_mode<synchronous>, transform_indices = @transform_14, window_bounds = array<i64: 32, 32>}, {pipeline_mode = #tpu.pipeline_mode<synchronous>, transform_indices = @transform_15, window_bounds = array<i64: 1, 32>}, {pipeline_mode = #tpu.pipeline_mode<synchronous>, transform_indices = @transform_16, window_bounds = array<i64: 32, 8>}, {pipeline_mode = #tpu.pipeline_mode<synchronous>, transform_indices = @transform_17, window_bounds = array<i64: 1, 8>}, {pipeline_mode = #tpu.pipeline_mode<synchronous>, transform_indices = @transform_18, window_bounds = array<i64: 32, 8>}, {pipeline_mode = #tpu.pipeline_mode<synchronous>, transform_indices = @transform_19, window_bounds = array<i64: 1, 8>}, {pipeline_mode = #tpu.pipeline_mode<synchronous>, transform_indices = @transform_20, window_bounds = array<i64: 256, 8>}]} {
    %c0 = arith.constant 0 : index
    %c0_0 = arith.constant 0 : index
    %0 = vector.load %arg1[%c0, %c0_0] : memref<256x256xbf16, #tpu.memory_space<vmem>>, vector<256x256xbf16>
    %c0_1 = arith.constant 0 : index
    %c0_2 = arith.constant 0 : index
    %1 = vector.load %arg2[%c0_1, %c0_2] : memref<256x16xf32, #tpu.memory_space<vmem>>, vector<256x16xf32>
    %c0_3 = arith.constant 0 : index
    %c0_4 = arith.constant 0 : index
    %2 = vector.load %arg5[%c0_3, %c0_4] : memref<16x32xf32, #tpu.memory_space<vmem>>, vector<16x32xf32>
    %cst = arith.constant dense<0.000000e+00> : vector<256x32xf32>
    %3 = tpu.matmul %1, %2, %cst {dimension_numbers = #tpu.dot_dimension_numbers<[1], [0], [0], [1], [0, 0, 1, 1], [], []>} : vector<256x16xf32>, vector<16x32xf32>, vector<256x32xf32> -> vector<256x32xf32>
    %c0_5 = arith.constant 0 : index
    %c0_6 = arith.constant 0 : index
    %4 = vector.load %arg6[%c0_5, %c0_6] : memref<1x32xf32, #tpu.memory_space<vmem>>, vector<1x32xf32>
    %5 = vector.broadcast %4 : vector<1x32xf32> to vector<256x32xf32>
    %6 = arith.addf %3, %5 : vector<256x32xf32>
    %7 = arith.truncf %1 : vector<256x16xf32> to vector<256x16xbf16>
    %cst_7 = arith.constant dense<0.000000e+00> : vector<256x16xf32>
    %8 = tpu.matmul %0, %7, %cst_7 {dimension_numbers = #tpu.dot_dimension_numbers<[1], [0], [0], [1], [0, 0, 1, 1], [], []>} : vector<256x256xbf16>, vector<256x16xbf16>, vector<256x16xf32> -> vector<256x16xf32>
    %c0_8 = arith.constant 0 : index
    %c0_9 = arith.constant 0 : index
    %9 = vector.load %arg3[%c0_8, %c0_9] : memref<16x32xf32, #tpu.memory_space<vmem>>, vector<16x32xf32>
    %cst_10 = arith.constant dense<0.000000e+00> : vector<256x32xf32>
    %10 = tpu.matmul %8, %9, %cst_10 {dimension_numbers = #tpu.dot_dimension_numbers<[1], [0], [0], [1], [0, 0, 1, 1], [], []>} : vector<256x16xf32>, vector<16x32xf32>, vector<256x32xf32> -> vector<256x32xf32>
    %c0_11 = arith.constant 0 : index
    %c0_12 = arith.constant 0 : index
    %11 = vector.load %arg4[%c0_11, %c0_12] : memref<1x32xf32, #tpu.memory_space<vmem>>, vector<1x32xf32>
    %12 = vector.broadcast %11 : vector<1x32xf32> to vector<256x32xf32>
    %13 = arith.addf %10, %12 : vector<256x32xf32>
    %cst_13 = arith.constant 0.000000e+00 : f32
    %14 = vector.broadcast %cst_13 : f32 to vector<256x32xf32>
    %15 = arith.maximumf %13, %14 : vector<256x32xf32>
    %16 = arith.addf %15, %6 : vector<256x32xf32>
    %c0_14 = arith.constant 0 : index
    %c0_15 = arith.constant 0 : index
    %17 = vector.load %arg9[%c0_14, %c0_15] : memref<32x32xf32, #tpu.memory_space<vmem>>, vector<32x32xf32>
    %cst_16 = arith.constant dense<0.000000e+00> : vector<256x32xf32>
    %18 = tpu.matmul %16, %17, %cst_16 {dimension_numbers = #tpu.dot_dimension_numbers<[1], [0], [0], [1], [0, 0, 1, 1], [], []>} : vector<256x32xf32>, vector<32x32xf32>, vector<256x32xf32> -> vector<256x32xf32>
    %c0_17 = arith.constant 0 : index
    %c0_18 = arith.constant 0 : index
    %19 = vector.load %arg10[%c0_17, %c0_18] : memref<1x32xf32, #tpu.memory_space<vmem>>, vector<1x32xf32>
    %20 = vector.broadcast %19 : vector<1x32xf32> to vector<256x32xf32>
    %21 = arith.addf %18, %20 : vector<256x32xf32>
    %22 = arith.truncf %16 : vector<256x32xf32> to vector<256x32xbf16>
    %cst_19 = arith.constant dense<0.000000e+00> : vector<256x32xf32>
    %23 = tpu.matmul %0, %22, %cst_19 {dimension_numbers = #tpu.dot_dimension_numbers<[1], [0], [0], [1], [0, 0, 1, 1], [], []>} : vector<256x256xbf16>, vector<256x32xbf16>, vector<256x32xf32> -> vector<256x32xf32>
    %c0_20 = arith.constant 0 : index
    %c0_21 = arith.constant 0 : index
    %24 = vector.load %arg7[%c0_20, %c0_21] : memref<32x32xf32, #tpu.memory_space<vmem>>, vector<32x32xf32>
    %cst_22 = arith.constant dense<0.000000e+00> : vector<256x32xf32>
    %25 = tpu.matmul %23, %24, %cst_22 {dimension_numbers = #tpu.dot_dimension_numbers<[1], [0], [0], [1], [0, 0, 1, 1], [], []>} : vector<256x32xf32>, vector<32x32xf32>, vector<256x32xf32> -> vector<256x32xf32>
    %c0_23 = arith.constant 0 : index
    %c0_24 = arith.constant 0 : index
    %26 = vector.load %arg8[%c0_23, %c0_24] : memref<1x32xf32, #tpu.memory_space<vmem>>, vector<1x32xf32>
    %27 = vector.broadcast %26 : vector<1x32xf32> to vector<256x32xf32>
    %28 = arith.addf %25, %27 : vector<256x32xf32>
    %cst_25 = arith.constant 0.000000e+00 : f32
    %29 = vector.broadcast %cst_25 : f32 to vector<256x32xf32>
    %30 = arith.maximumf %28, %29 : vector<256x32xf32>
    %31 = arith.addf %30, %21 : vector<256x32xf32>
    %32 = arith.truncf %31 : vector<256x32xf32> to vector<256x32xbf16>
    %cst_26 = arith.constant dense<0.000000e+00> : vector<256x32xf32>
    %33 = tpu.matmul %0, %32, %cst_26 {dimension_numbers = #tpu.dot_dimension_numbers<[1], [0], [0], [1], [0, 0, 1, 1], [], []>} : vector<256x256xbf16>, vector<256x32xbf16>, vector<256x32xf32> -> vector<256x32xf32>
    %c0_27 = arith.constant 0 : index
    %c0_28 = arith.constant 0 : index
    %34 = vector.load %arg11[%c0_27, %c0_28] : memref<32x32xf32, #tpu.memory_space<vmem>>, vector<32x32xf32>
    %cst_29 = arith.constant dense<0.000000e+00> : vector<256x32xf32>
    %35 = tpu.matmul %33, %34, %cst_29 {dimension_numbers = #tpu.dot_dimension_numbers<[1], [0], [0], [1], [0, 0, 1, 1], [], []>} : vector<256x32xf32>, vector<32x32xf32>, vector<256x32xf32> -> vector<256x32xf32>
    %c0_30 = arith.constant 0 : index
    %c0_31 = arith.constant 0 : index
    %36 = vector.load %arg12[%c0_30, %c0_31] : memref<1x32xf32, #tpu.memory_space<vmem>>, vector<1x32xf32>
    %37 = vector.broadcast %36 : vector<1x32xf32> to vector<256x32xf32>
    %38 = arith.addf %35, %37 : vector<256x32xf32>
    %39 = arith.addf %16, %38 : vector<256x32xf32>
    %c0_32 = arith.constant 0 : index
    %c0_33 = arith.constant 0 : index
    %40 = vector.load %arg15[%c0_32, %c0_33] : memref<32x32xf32, #tpu.memory_space<vmem>>, vector<32x32xf32>
    %cst_34 = arith.constant dense<0.000000e+00> : vector<256x32xf32>
    %41 = tpu.matmul %39, %40, %cst_34 {dimension_numbers = #tpu.dot_dimension_numbers<[1], [0], [0], [1], [0, 0, 1, 1], [], []>} : vector<256x32xf32>, vector<32x32xf32>, vector<256x32xf32> -> vector<256x32xf32>
    %c0_35 = arith.constant 0 : index
    %c0_36 = arith.constant 0 : index
    %42 = vector.load %arg16[%c0_35, %c0_36] : memref<1x32xf32, #tpu.memory_space<vmem>>, vector<1x32xf32>
    %43 = vector.broadcast %42 : vector<1x32xf32> to vector<256x32xf32>
    %44 = arith.addf %41, %43 : vector<256x32xf32>
    %45 = arith.truncf %39 : vector<256x32xf32> to vector<256x32xbf16>
    %cst_37 = arith.constant dense<0.000000e+00> : vector<256x32xf32>
    %46 = tpu.matmul %0, %45, %cst_37 {dimension_numbers = #tpu.dot_dimension_numbers<[1], [0], [0], [1], [0, 0, 1, 1], [], []>} : vector<256x256xbf16>, vector<256x32xbf16>, vector<256x32xf32> -> vector<256x32xf32>
    %c0_38 = arith.constant 0 : index
    %c0_39 = arith.constant 0 : index
    %47 = vector.load %arg13[%c0_38, %c0_39] : memref<32x32xf32, #tpu.memory_space<vmem>>, vector<32x32xf32>
    %cst_40 = arith.constant dense<0.000000e+00> : vector<256x32xf32>
    %48 = tpu.matmul %46, %47, %cst_40 {dimension_numbers = #tpu.dot_dimension_numbers<[1], [0], [0], [1], [0, 0, 1, 1], [], []>} : vector<256x32xf32>, vector<32x32xf32>, vector<256x32xf32> -> vector<256x32xf32>
    %c0_41 = arith.constant 0 : index
    %c0_42 = arith.constant 0 : index
    %49 = vector.load %arg14[%c0_41, %c0_42] : memref<1x32xf32, #tpu.memory_space<vmem>>, vector<1x32xf32>
    %50 = vector.broadcast %49 : vector<1x32xf32> to vector<256x32xf32>
    %51 = arith.addf %48, %50 : vector<256x32xf32>
    %cst_43 = arith.constant 0.000000e+00 : f32
    %52 = vector.broadcast %cst_43 : f32 to vector<256x32xf32>
    %53 = arith.maximumf %51, %52 : vector<256x32xf32>
    %54 = arith.addf %53, %44 : vector<256x32xf32>
    %c0_44 = arith.constant 0 : index
    %c0_45 = arith.constant 0 : index
    %55 = vector.load %arg19[%c0_44, %c0_45] : memref<32x8xf32, #tpu.memory_space<vmem>>, vector<32x8xf32>
    %cst_46 = arith.constant dense<0.000000e+00> : vector<256x8xf32>
    %56 = tpu.matmul %54, %55, %cst_46 {dimension_numbers = #tpu.dot_dimension_numbers<[1], [0], [0], [1], [0, 0, 1, 1], [], []>} : vector<256x32xf32>, vector<32x8xf32>, vector<256x8xf32> -> vector<256x8xf32>
    %c0_47 = arith.constant 0 : index
    %c0_48 = arith.constant 0 : index
    %57 = vector.load %arg20[%c0_47, %c0_48] : memref<1x8xf32, #tpu.memory_space<vmem>>, vector<1x8xf32>
    %58 = vector.broadcast %57 : vector<1x8xf32> to vector<256x8xf32>
    %59 = arith.addf %56, %58 : vector<256x8xf32>
    %60 = arith.truncf %54 : vector<256x32xf32> to vector<256x32xbf16>
    %cst_49 = arith.constant dense<0.000000e+00> : vector<256x32xf32>
    %61 = tpu.matmul %0, %60, %cst_49 {dimension_numbers = #tpu.dot_dimension_numbers<[1], [0], [0], [1], [0, 0, 1, 1], [], []>} : vector<256x256xbf16>, vector<256x32xbf16>, vector<256x32xf32> -> vector<256x32xf32>
    %c0_50 = arith.constant 0 : index
    %c0_51 = arith.constant 0 : index
    %62 = vector.load %arg17[%c0_50, %c0_51] : memref<32x8xf32, #tpu.memory_space<vmem>>, vector<32x8xf32>
    %cst_52 = arith.constant dense<0.000000e+00> : vector<256x8xf32>
    %63 = tpu.matmul %61, %62, %cst_52 {dimension_numbers = #tpu.dot_dimension_numbers<[1], [0], [0], [1], [0, 0, 1, 1], [], []>} : vector<256x32xf32>, vector<32x8xf32>, vector<256x8xf32> -> vector<256x8xf32>
    %c0_53 = arith.constant 0 : index
    %c0_54 = arith.constant 0 : index
    %64 = vector.load %arg18[%c0_53, %c0_54] : memref<1x8xf32, #tpu.memory_space<vmem>>, vector<1x8xf32>
    %65 = vector.broadcast %64 : vector<1x8xf32> to vector<256x8xf32>
    %66 = arith.addf %63, %65 : vector<256x8xf32>
    %cst_55 = arith.constant 0.000000e+00 : f32
    %67 = vector.broadcast %cst_55 : f32 to vector<256x8xf32>
    %68 = arith.maximumf %66, %67 : vector<256x8xf32>
    %69 = arith.addf %68, %59 : vector<256x8xf32>
    %c0_56 = arith.constant 0 : index
    %c0_57 = arith.constant 0 : index
    %70 = vector.load %arg21[%c0_56, %c0_57] : memref<256x8xf32, #tpu.memory_space<vmem>>, vector<256x8xf32>
    tpu.vector_store %arg21[%c0_56, %c0_57], %69 {strides = array<i32>} : memref<256x8xf32, #tpu.memory_space<vmem>>, vector<256x8xf32>,
    return
  }
  func.func @transform_0(%arg0: i32) -> (i32, i32) {
    %c0_i32 = arith.constant 0 : i32
    %c0_i32_0 = arith.constant 0 : i32
    %c0_i32_1 = arith.constant 0 : i32
    return %c0_i32, %c0_i32_0 : i32, i32
  }
  func.func @transform_1(%arg0: i32) -> (i32, i32) {
    %c0_i32 = arith.constant 0 : i32
    %c0_i32_0 = arith.constant 0 : i32
    %c0_i32_1 = arith.constant 0 : i32
    return %c0_i32, %c0_i32_0 : i32, i32
  }
  func.func @transform_2(%arg0: i32) -> (i32, i32) {
    %c0_i32 = arith.constant 0 : i32
    %c0_i32_0 = arith.constant 0 : i32
    %c0_i32_1 = arith.constant 0 : i32
    return %c0_i32, %c0_i32_0 : i32, i32
  }
  func.func @transform_3(%arg0: i32) -> (i32, i32) {
    %c0_i32 = arith.constant 0 : i32
    %c0_i32_0 = arith.constant 0 : i32
    %c0_i32_1 = arith.constant 0 : i32
    return %c0_i32, %c0_i32_0 : i32, i32
  }
  func.func @transform_4(%arg0: i32) -> (i32, i32) {
    %c0_i32 = arith.constant 0 : i32
    %c0_i32_0 = arith.constant 0 : i32
    %c0_i32_1 = arith.constant 0 : i32
    return %c0_i32, %c0_i32_0 : i32, i32
  }
  func.func @transform_5(%arg0: i32) -> (i32, i32) {
    %c0_i32 = arith.constant 0 : i32
    %c0_i32_0 = arith.constant 0 : i32
    %c0_i32_1 = arith.constant 0 : i32
    return %c0_i32, %c0_i32_0 : i32, i32
  }
  func.func @transform_6(%arg0: i32) -> (i32, i32) {
    %c0_i32 = arith.constant 0 : i32
    %c0_i32_0 = arith.constant 0 : i32
    %c0_i32_1 = arith.constant 0 : i32
    return %c0_i32, %c0_i32_0 : i32, i32
  }
  func.func @transform_7(%arg0: i32) -> (i32, i32) {
    %c0_i32 = arith.constant 0 : i32
    %c0_i32_0 = arith.constant 0 : i32
    %c0_i32_1 = arith.constant 0 : i32
    return %c0_i32, %c0_i32_0 : i32, i32
  }
  func.func @transform_8(%arg0: i32) -> (i32, i32) {
    %c0_i32 = arith.constant 0 : i32
    %c0_i32_0 = arith.constant 0 : i32
    %c0_i32_1 = arith.constant 0 : i32
    return %c0_i32, %c0_i32_0 : i32, i32
  }
  func.func @transform_9(%arg0: i32) -> (i32, i32) {
    %c0_i32 = arith.constant 0 : i32
    %c0_i32_0 = arith.constant 0 : i32
    %c0_i32_1 = arith.constant 0 : i32
    return %c0_i32, %c0_i32_0 : i32, i32
  }
  func.func @transform_10(%arg0: i32) -> (i32, i32) {
    %c0_i32 = arith.constant 0 : i32
    %c0_i32_0 = arith.constant 0 : i32
    %c0_i32_1 = arith.constant 0 : i32
    return %c0_i32, %c0_i32_0 : i32, i32
  }
  func.func @transform_11(%arg0: i32) -> (i32, i32) {
    %c0_i32 = arith.constant 0 : i32
    %c0_i32_0 = arith.constant 0 : i32
    %c0_i32_1 = arith.constant 0 : i32
    return %c0_i32, %c0_i32_0 : i32, i32
  }
  func.func @transform_12(%arg0: i32) -> (i32, i32) {
    %c0_i32 = arith.constant 0 : i32
    %c0_i32_0 = arith.constant 0 : i32
    %c0_i32_1 = arith.constant 0 : i32
    return %c0_i32, %c0_i32_0 : i32, i32
  }
  func.func @transform_13(%arg0: i32) -> (i32, i32) {
    %c0_i32 = arith.constant 0 : i32
    %c0_i32_0 = arith.constant 0 : i32
    %c0_i32_1 = arith.constant 0 : i32
    return %c0_i32, %c0_i32_0 : i32, i32
  }
  func.func @transform_14(%arg0: i32) -> (i32, i32) {
    %c0_i32 = arith.constant 0 : i32
    %c0_i32_0 = arith.constant 0 : i32
    %c0_i32_1 = arith.constant 0 : i32
    return %c0_i32, %c0_i32_0 : i32, i32
  }
  func.func @transform_15(%arg0: i32) -> (i32, i32) {
    %c0_i32 = arith.constant 0 : i32
    %c0_i32_0 = arith.constant 0 : i32
    %c0_i32_1 = arith.constant 0 : i32
    return %c0_i32, %c0_i32_0 : i32, i32
  }
  func.func @transform_16(%arg0: i32) -> (i32, i32) {
    %c0_i32 = arith.constant 0 : i32
    %c0_i32_0 = arith.constant 0 : i32
    %c0_i32_1 = arith.constant 0 : i32
    return %c0_i32, %c0_i32_0 : i32, i32
  }
  func.func @transform_17(%arg0: i32) -> (i32, i32) {
    %c0_i32 = arith.constant 0 : i32
    %c0_i32_0 = arith.constant 0 : i32
    %c0_i32_1 = arith.constant 0 : i32
    return %c0_i32, %c0_i32_0 : i32, i32
  }
  func.func @transform_18(%arg0: i32) -> (i32, i32) {
    %c0_i32 = arith.constant 0 : i32
    %c0_i32_0 = arith.constant 0 : i32
    %c0_i32_1 = arith.constant 0 : i32
    return %c0_i32, %c0_i32_0 : i32, i32
  }
  func.func @transform_19(%arg0: i32) -> (i32, i32) {
    %c0_i32 = arith.constant 0 : i32
    %c0_i32_0 = arith.constant 0 : i32
    %c0_i32_1 = arith.constant 0 : i32
    return %c0_i32, %c0_i32_0 : i32, i32
  }
  func.func @transform_20(%arg0: i32) -> (i32, i32) {
    %c0_i32 = arith.constant 0 : i32
    %c0_i32_0 = arith.constant 0 : i32
    %c0_i32_1 = arith.constant 0 : i32
    return %c0_i32, %c0_i32_0 : i32, i32
  }
}

</mosaic_0001>

<llo_original>
// kernel: tpu_custom_call.1
$region0: #{tpu_custom_call.1}
  #allocation0 [shape = 'u32[]', space=smem, size = 0x4, offset = 0x4, fixed_abs, tag = 'smem constant byte address 0x4 - core index']
  #allocation1 [shape = 'u32[144,128]{1,0:T(1,128)}', space=vmem, size = 0x12000, scoped, tag = 'internal scratch']
  %s0 = inlined_call_operand.vmem [shape: bf16[256,256], index: 0, kind: input, shape index: {}]
  %s1 = inlined_call_operand.vmem [shape: f32[256,16], index: 1, kind: input, shape index: {}]
  %s2 = inlined_call_operand.hbm [shape: f32[16,32], index: 2, kind: input, shape index: {}]
  %s3 = inlined_call_operand.hbm [shape: f32[1,32], index: 3, kind: input, shape index: {}]
  %s4 = inlined_call_operand.hbm [shape: f32[16,32], index: 4, kind: input, shape index: {}]
  %s5 = inlined_call_operand.hbm [shape: f32[1,32], index: 5, kind: input, shape index: {}]
  %s6 = inlined_call_operand.vmem [shape: f32[32,32], index: 6, kind: input, shape index: {}]
  %s7 = inlined_call_operand.hbm [shape: f32[1,32], index: 7, kind: input, shape index: {}]
  %s8 = inlined_call_operand.vmem [shape: f32[32,32], index: 8, kind: input, shape index: {}]
  %s9 = inlined_call_operand.hbm [shape: f32[1,32], index: 9, kind: input, shape index: {}]
  %s10 = inlined_call_operand.vmem [shape: f32[32,32], index: 10, kind: input, shape index: {}]
  %s11 = inlined_call_operand.hbm [shape: f32[1,32], index: 11, kind: input, shape index: {}]
  %s12 = inlined_call_operand.hbm [shape: f32[32,32], index: 12, kind: input, shape index: {}]
  %s13 = inlined_call_operand.hbm [shape: f32[1,32], index: 13, kind: input, shape index: {}]
  %s14 = inlined_call_operand.hbm [shape: f32[32,32], index: 14, kind: input, shape index: {}]
  %s15 = inlined_call_operand.hbm [shape: f32[1,32], index: 15, kind: input, shape index: {}]
  %s16 = inlined_call_operand.vmem [shape: f32[32,8], index: 16, kind: input, shape index: {}]
  %s17 = inlined_call_operand.hbm [shape: f32[1,8], index: 17, kind: input, shape index: {}]
  %s18 = inlined_call_operand.vmem [shape: f32[32,8], index: 18, kind: input, shape index: {}]
  %s19 = inlined_call_operand.hbm [shape: f32[1,8], index: 19, kind: input, shape index: {}]
  %s20 = inlined_call_operand.vmem [shape: f32[256,8], index: 20, kind: output, shape index: {}]
  %s21 = sld [smem:[#allocation0]]
  $region142: #{tpu_custom_call.1} parent=0
    _
  %s23 = ssub.s32 1, %s21
  %s24 = scalar_select 0, %s23, %s21
  $region1: #{tpu_custom_call.1} parent=0
    #allocation2 [shape = 'u8[8192]{0}', space=vmem, size = 0x2000, scoped, tag = 'input window, operand 2, single buffered']
    #allocation3 [shape = 's32[1]{0}', space=sflag, size = 0x4, scoped, tag = 'scoped memory for tpu_custom_call.1']
    #allocation4 [shape = 'u8[512]{0}', space=vmem, size = 0x400, scoped, tag = 'input window, operand 3, single buffered']
    #allocation5 [shape = 's32[1]{0}', space=sflag, size = 0x4, scoped, tag = 'scoped memory for tpu_custom_call.1']
    #allocation6 [shape = 'u8[8192]{0}', space=vmem, size = 0x2000, scoped, tag = 'input window, operand 4, single buffered']
    #allocation7 [shape = 'u8[512]{0}', space=vmem, size = 0x400, scoped, tag = 'input window, operand 5, single buffered']
    #allocation8 [shape = 's32[1]{0}', space=sflag, size = 0x4, scoped, tag = 'scoped memory for tpu_custom_call.1']
    #allocation9 [shape = 'u8[512]{0}', space=vmem, size = 0x400, scoped, tag = 'input window, operand 7, single buffered']
    #allocation10 [shape = 'u8[512]{0}', space=vmem, size = 0x400, scoped, tag = 'input window, operand 9, single buffered']
    #allocation11 [shape = 's32[1]{0}', space=sflag, size = 0x4, scoped, tag = 'scoped memory for tpu_custom_call.1']
    #allocation12 [shape = 'u8[512]{0}', space=vmem, size = 0x400, scoped, tag = 'input window, operand 11, single buffered']
    #allocation13 [shape = 'u8[16384]{0}', space=vmem, size = 0x4000, scoped, tag = 'input window, operand 12, single buffered']
    #allocation14 [shape = 's32[1]{0}', space=sflag, size = 0x4, scoped, tag = 'scoped memory for tpu_custom_call.1']
    #allocation15 [shape = 'u8[512]{0}', space=vmem, size = 0x400, scoped, tag = 'input window, operand 13, single buffered']
    #allocation16 [shape = 'u8[16384]{0}', space=vmem, size = 0x4000, scoped, tag = 'input window, operand 14, single buffered']
    #allocation17 [shape = 's32[1]{0}', space=sflag, size = 0x4, scoped, tag = 'scoped memory for tpu_custom_call.1']
    #allocation18 [shape = 'u8[512]{0}', space=vmem, size = 0x400, scoped, tag = 'input window, operand 15, single buffered']
    #allocation19 [shape = 'u8[512]{0}', space=vmem, size = 0x400, scoped, tag = 'input window, operand 17, single buffered']
    #allocation20 [shape = 's32[1]{0}', space=sflag, size = 0x4, scoped, tag = 'scoped memory for tpu_custom_call.1']
    #allocation21 [shape = 'u8[512]{0}', space=vmem, size = 0x400, scoped, tag = 'input window, operand 19, single buffered']
    %25 = vsyncpa [#allocation3], 0
    %26 = vsyncpa [#allocation5], 0
    %27 = vsyncpa [#allocation8], 0
    %28 = vsyncpa [#allocation11], 0
    %29 = vsyncpa [#allocation14], 0
    %30 = vsyncpa [#allocation17], 0
    %31 = vsyncpa [#allocation20], 0
    // Predicated region
    $region2: #{tpu_custom_call.1} parent=1 // pred_check
      _
    $region3: #{tpu_custom_call.1} parent=1 // pred_check_branch
      %33 = sbr.rel (0) target = $region5
    $region4: #{tpu_custom_call.1} parent=1 // pred_region
      _
    $region5: #{tpu_custom_call.1} parent=1 // pred_fallthru
      _
    // Predicated region
    $region6: #{tpu_custom_call.1} parent=1 // pred_check
      _
    $region7: #{tpu_custom_call.1} parent=1 // pred_check_branch
      %35 = sbr.rel (0) target = $region9
    $region8: #{tpu_custom_call.1} parent=1 // pred_region
      _
    $region9: #{tpu_custom_call.1} parent=1 // pred_fallthru
      _
    // Predicated region
    $region10: #{tpu_custom_call.1} parent=1 // pred_check
      _
    $region11: #{tpu_custom_call.1} parent=1 // pred_check_branch
      %37 = sbr.rel (0) target = $region13
    $region12: #{tpu_custom_call.1} parent=1 // pred_region
      %s39 = ssub.s32 256, 256
      %40 = vsyncadd [#allocation3], %s39
      %s41 = sshll.u32 [#allocation2], 4
      %s42 = int_to_ptr.vmem [resolvable:$true] %s41
      %47 = dma.hbm_to_vmem [thread:$0]  %s2, 256, %s42, [#allocation3], 128, 128, 8
    $region13: #{tpu_custom_call.1} parent=1 // pred_fallthru
      _
    // Predicated region
    $region14: #{tpu_custom_call.1} parent=1 // pred_check
      _
    $region15: #{tpu_custom_call.1} parent=1 // pred_check_branch
      %49 = sbr.rel (0) target = $region17
    $region16: #{tpu_custom_call.1} parent=1 // pred_region
      %s51 = ssub.s32 16, 16
      %52 = vsyncadd [#allocation5], %s51
      %s54 = sshll.u32 [#allocation4], 4
      %s55 = int_to_ptr.vmem [resolvable:$true] %s54
      %57 = dma.hbm_to_vmem [thread:$0]  %s3, 16, %s55, [#allocation5]
    $region17: #{tpu_custom_call.1} parent=1 // pred_fallthru
      _
    // Predicated region
    $region18: #{tpu_custom_call.1} parent=1 // pred_check
      _
    $region19: #{tpu_custom_call.1} parent=1 // pred_check_branch
      %59 = sbr.rel (0) target = $region21
    $region20: #{tpu_custom_call.1} parent=1 // pred_region
      %s61 = ssub.s32 256, 256
      %62 = vsyncadd [#allocation5], %s61
      %s63 = sshll.u32 [#allocation6], 4
      %s64 = int_to_ptr.vmem [resolvable:$true] %s63
      %69 = dma.hbm_to_vmem [thread:$0]  %s4, 256, %s64, [#allocation5], 128, 128, 8
    $region21: #{tpu_custom_call.1} parent=1 // pred_fallthru
      _
    // Predicated region
    $region22: #{tpu_custom_call.1} parent=1 // pred_check
      _
    $region23: #{tpu_custom_call.1} parent=1 // pred_check_branch
      %71 = sbr.rel (0) target = $region25
    $region24: #{tpu_custom_call.1} parent=1 // pred_region
      %s73 = ssub.s32 16, 16
      %74 = vsyncadd [#allocation8], %s73
      %s76 = sshll.u32 [#allocation7], 4
      %s77 = int_to_ptr.vmem [resolvable:$true] %s76
      %79 = dma.hbm_to_vmem [thread:$0]  %s5, 16, %s77, [#allocation8]
    $region25: #{tpu_custom_call.1} parent=1 // pred_fallthru
      _
    // Predicated region
    $region26: #{tpu_custom_call.1} parent=1 // pred_check
      _
    $region27: #{tpu_custom_call.1} parent=1 // pred_check_branch
      %81 = sbr.rel (0) target = $region29
    $region28: #{tpu_custom_call.1} parent=1 // pred_region
      _
    $region29: #{tpu_custom_call.1} parent=1 // pred_fallthru
      _
    // Predicated region
    $region30: #{tpu_custom_call.1} parent=1 // pred_check
      _
    $region31: #{tpu_custom_call.1} parent=1 // pred_check_branch
      %83 = sbr.rel (0) target = $region33
    $region32: #{tpu_custom_call.1} parent=1 // pred_region
      %s85 = ssub.s32 16, 16
      %86 = vsyncadd [#allocation8], %s85
      %s88 = sshll.u32 [#allocation9], 4
      %s89 = int_to_ptr.vmem [resolvable:$true] %s88
      %91 = dma.hbm_to_vmem [thread:$0]  %s7, 16, %s89, [#allocation8]
    $region33: #{tpu_custom_call.1} parent=1 // pred_fallthru
      _
    // Predicated region
    $region34: #{tpu_custom_call.1} parent=1 // pred_check
      _
    $region35: #{tpu_custom_call.1} parent=1 // pred_check_branch
      %93 = sbr.rel (0) target = $region37
    $region36: #{tpu_custom_call.1} parent=1 // pred_region
      _
    $region37: #{tpu_custom_call.1} parent=1 // pred_fallthru
      _
    // Predicated region
    $region38: #{tpu_custom_call.1} parent=1 // pred_check
      _
    $region39: #{tpu_custom_call.1} parent=1 // pred_check_branch
      %95 = sbr.rel (0) target = $region41
    $region40: #{tpu_custom_call.1} parent=1 // pred_region
      %s97 = ssub.s32 16, 16
      %98 = vsyncadd [#allocation11], %s97
      %s100 = sshll.u32 [#allocation10], 4
      %s101 = int_to_ptr.vmem [resolvable:$true] %s100
      %103 = dma.hbm_to_vmem [thread:$0]  %s9, 16, %s101, [#allocation11]
    $region41: #{tpu_custom_call.1} parent=1 // pred_fallthru
      _
    // Predicated region
    $region42: #{tpu_custom_call.1} parent=1 // pred_check
      _
    $region43: #{tpu_custom_call.1} parent=1 // pred_check_branch
      %105 = sbr.rel (0) target = $region45
    $region44: #{tpu_custom_call.1} parent=1 // pred_region
      _
    $region45: #{tpu_custom_call.1} parent=1 // pred_fallthru
      _
    // Predicated region
    $region46: #{tpu_custom_call.1} parent=1 // pred_check
      _
    $region47: #{tpu_custom_call.1} parent=1 // pred_check_branch
      %107 = sbr.rel (0) target = $region49
    $region48: #{tpu_custom_call.1} parent=1 // pred_region
      %s109 = ssub.s32 16, 16
      %110 = vsyncadd [#allocation11], %s109
      %s112 = sshll.u32 [#allocation12], 4
      %s113 = int_to_ptr.vmem [resolvable:$true] %s112
      %115 = dma.hbm_to_vmem [thread:$0]  %s11, 16, %s113, [#allocation11]
    $region49: #{tpu_custom_call.1} parent=1 // pred_fallthru
      _
    // Predicated region
    $region50: #{tpu_custom_call.1} parent=1 // pred_check
      _
    $region51: #{tpu_custom_call.1} parent=1 // pred_check_branch
      %117 = sbr.rel (0) target = $region53
    $region52: #{tpu_custom_call.1} parent=1 // pred_region
      %s119 = ssub.s32 512, 512
      %120 = vsyncadd [#allocation14], %s119
      %s121 = sshll.u32 [#allocation13], 4
      %s122 = int_to_ptr.vmem [resolvable:$true] %s121
      %127 = dma.hbm_to_vmem [thread:$0]  %s12, 512, %s122, [#allocation14], 128, 128, 8
    $region53: #{tpu_custom_call.1} parent=1 // pred_fallthru
      _
    // Predicated region
    $region54: #{tpu_custom_call.1} parent=1 // pred_check
      _
    $region55: #{tpu_custom_call.1} parent=1 // pred_check_branch
      %129 = sbr.rel (0) target = $region57
    $region56: #{tpu_custom_call.1} parent=1 // pred_region
      %s131 = ssub.s32 16, 16
      %132 = vsyncadd [#allocation14], %s131
      %s134 = sshll.u32 [#allocation15], 4
      %s135 = int_to_ptr.vmem [resolvable:$true] %s134
      %137 = dma.hbm_to_vmem [thread:$0]  %s13, 16, %s135, [#allocation14]
    $region57: #{tpu_custom_call.1} parent=1 // pred_fallthru
      _
    // Predicated region
    $region58: #{tpu_custom_call.1} parent=1 // pred_check
      _
    $region59: #{tpu_custom_call.1} parent=1 // pred_check_branch
      %139 = sbr.rel (0) target = $region61
    $region60: #{tpu_custom_call.1} parent=1 // pred_region
      %s141 = ssub.s32 512, 512
      %142 = vsyncadd [#allocation17], %s141
      %s143 = sshll.u32 [#allocation16], 4
      %s144 = int_to_ptr.vmem [resolvable:$true] %s143
      %149 = dma.hbm_to_vmem [thread:$0]  %s14, 512, %s144, [#allocation17], 128, 128, 8
    $region61: #{tpu_custom_call.1} parent=1 // pred_fallthru
      _
    // Predicated region
    $region62: #{tpu_custom_call.1} parent=1 // pred_check
      _
    $region63: #{tpu_custom_call.1} parent=1 // pred_check_branch
      %151 = sbr.rel (0) target = $region65
    $region64: #{tpu_custom_call.1} parent=1 // pred_region
      %s153 = ssub.s32 16, 16
      %154 = vsyncadd [#allocation17], %s153
      %s156 = sshll.u32 [#allocation18], 4
      %s157 = int_to_ptr.vmem [resolvable:$true] %s156
      %159 = dma.hbm_to_vmem [thread:$0]  %s15, 16, %s157, [#allocation17]
    $region65: #{tpu_custom_call.1} parent=1 // pred_fallthru
      _
    // Predicated region
    $region66: #{tpu_custom_call.1} parent=1 // pred_check
      _
    $region67: #{tpu_custom_call.1} parent=1 // pred_check_branch
      %161 = sbr.rel (0) target = $region69
    $region68: #{tpu_custom_call.1} parent=1 // pred_region
      _
    $region69: #{tpu_custom_call.1} parent=1 // pred_fallthru
      _
    // Predicated region
    $region70: #{tpu_custom_call.1} parent=1 // pred_check
      _
    $region71: #{tpu_custom_call.1} parent=1 // pred_check_branch
      %163 = sbr.rel (0) target = $region73
    $region72: #{tpu_custom_call.1} parent=1 // pred_region
      %s165 = ssub.s32 16, 16
      %166 = vsyncadd [#allocation20], %s165
      %s168 = sshll.u32 [#allocation19], 4
      %s169 = int_to_ptr.vmem [resolvable:$true] %s168
      %171 = dma.hbm_to_vmem [thread:$0]  %s17, 16, %s169, [#allocation20]
    $region73: #{tpu_custom_call.1} parent=1 // pred_fallthru
      _
    // Predicated region
    $region74: #{tpu_custom_call.1} parent=1 // pred_check
      _
    $region75: #{tpu_custom_call.1} parent=1 // pred_check_branch
      %173 = sbr.rel (0) target = $region77
    $region76: #{tpu_custom_call.1} parent=1 // pred_region
      _
    $region77: #{tpu_custom_call.1} parent=1 // pred_fallthru
      _
    // Predicated region
    $region78: #{tpu_custom_call.1} parent=1 // pred_check
      _
    $region79: #{tpu_custom_call.1} parent=1 // pred_check_branch
      %175 = sbr.rel (0) target = $region81
    $region80: #{tpu_custom_call.1} parent=1 // pred_region
      %s177 = ssub.s32 16, 16
      %178 = vsyncadd [#allocation20], %s177
      %s180 = sshll.u32 [#allocation21], 4
      %s181 = int_to_ptr.vmem [resolvable:$true] %s180
      %183 = dma.hbm_to_vmem [thread:$0]  %s19, 16, %s181, [#allocation20]
    $region81: #{tpu_custom_call.1} parent=1 // pred_fallthru
      _
    // Predicated region
    $region82: #{tpu_custom_call.1} parent=1 // pred_check
      _
    $region83: #{tpu_custom_call.1} parent=1 // pred_check_branch
      %185 = sbr.rel (0) target = $region85
    $region84: #{tpu_custom_call.1} parent=1 // pred_region
      %186 = dma.done [#allocation3], 256
    $region85: #{tpu_custom_call.1} parent=1 // pred_fallthru
      _
    // Predicated region
    $region86: #{tpu_custom_call.1} parent=1 // pred_check
      _
    $region87: #{tpu_custom_call.1} parent=1 // pred_check_branch
      %188 = sbr.rel (0) target = $region89
    $region88: #{tpu_custom_call.1} parent=1 // pred_region
      %189 = dma.done [#allocation5], 16
    $region89: #{tpu_custom_call.1} parent=1 // pred_fallthru
      _
    // Predicated region
    $region90: #{tpu_custom_call.1} parent=1 // pred_check
      _
    $region91: #{tpu_custom_call.1} parent=1 // pred_check_branch
      %191 = sbr.rel (0) target = $region93
    $region92: #{tpu_custom_call.1} parent=1 // pred_region
      %192 = dma.done [#allocation5], 256
    $region93: #{tpu_custom_call.1} parent=1 // pred_fallthru
      _
    // Predicated region
    $region94: #{tpu_custom_call.1} parent=1 // pred_check
      _
    $region95: #{tpu_custom_call.1} parent=1 // pred_check_branch
      %194 = sbr.rel (0) target = $region97
    $region96: #{tpu_custom_call.1} parent=1 // pred_region
      %195 = dma.done [#allocation8], 16
    $region97: #{tpu_custom_call.1} parent=1 // pred_fallthru
      _
    // Predicated region
    $region98: #{tpu_custom_call.1} parent=1 // pred_check
      _
    $region99: #{tpu_custom_call.1} parent=1 // pred_check_branch
      %197 = sbr.rel (0) target = $region101
    $region100: #{tpu_custom_call.1} parent=1 // pred_region
      %198 = dma.done [#allocation8], 16
    $region101: #{tpu_custom_call.1} parent=1 // pred_fallthru
      _
    // Predicated region
    $region102: #{tpu_custom_call.1} parent=1 // pred_check
      _
    $region103: #{tpu_custom_call.1} parent=1 // pred_check_branch
      %200 = sbr.rel (0) target = $region105
    $region104: #{tpu_custom_call.1} parent=1 // pred_region
      %201 = dma.done [#allocation11], 16
    $region105: #{tpu_custom_call.1} parent=1 // pred_fallthru
      _
    // Predicated region
    $region106: #{tpu_custom_call.1} parent=1 // pred_check
      _
    $region107: #{tpu_custom_call.1} parent=1 // pred_check_branch
      %203 = sbr.rel (0) target = $region109
    $region108: #{tpu_custom_call.1} parent=1 // pred_region
      %204 = dma.done [#allocation11], 16
    $region109: #{tpu_custom_call.1} parent=1 // pred_fallthru
      _
    // Predicated region
    $region110: #{tpu_custom_call.1} parent=1 // pred_check
      _
    $region111: #{tpu_custom_call.1} parent=1 // pred_check_branch
      %206 = sbr.rel (0) target = $region113
    $region112: #{tpu_custom_call.1} parent=1 // pred_region
      %207 = dma.done [#allocation14], 512
    $region113: #{tpu_custom_call.1} parent=1 // pred_fallthru
      _
    // Predicated region
    $region114: #{tpu_custom_call.1} parent=1 // pred_check
      _
    $region115: #{tpu_custom_call.1} parent=1 // pred_check_branch
      %209 = sbr.rel (0) target = $region117
    $region116: #{tpu_custom_call.1} parent=1 // pred_region
      %210 = dma.done [#allocation14], 16
    $region117: #{tpu_custom_call.1} parent=1 // pred_fallthru
      _
    // Predicated region
    $region118: #{tpu_custom_call.1} parent=1 // pred_check
      _
    $region119: #{tpu_custom_call.1} parent=1 // pred_check_branch
      %212 = sbr.rel (0) target = $region121
    $region120: #{tpu_custom_call.1} parent=1 // pred_region
      %213 = dma.done [#allocation17], 512
    $region121: #{tpu_custom_call.1} parent=1 // pred_fallthru
      _
    // Predicated region
    $region122: #{tpu_custom_call.1} parent=1 // pred_check
      _
    $region123: #{tpu_custom_call.1} parent=1 // pred_check_branch
      %215 = sbr.rel (0) target = $region125
    $region124: #{tpu_custom_call.1} parent=1 // pred_region
      %216 = dma.done [#allocation17], 16
    $region125: #{tpu_custom_call.1} parent=1 // pred_fallthru
      _
    // Predicated region
    $region126: #{tpu_custom_call.1} parent=1 // pred_check
      _
    $region127: #{tpu_custom_call.1} parent=1 // pred_check_branch
      %218 = sbr.rel (0) target = $region129
    $region128: #{tpu_custom_call.1} parent=1 // pred_region
      %219 = dma.done [#allocation20], 16
    $region129: #{tpu_custom_call.1} parent=1 // pred_fallthru
      _
    // Predicated region
    $region130: #{tpu_custom_call.1} parent=1 // pred_check
      _
    $region131: #{tpu_custom_call.1} parent=1 // pred_check_branch
      %221 = sbr.rel (0) target = $region133
    $region132: #{tpu_custom_call.1} parent=1 // pred_region
      %222 = dma.done [#allocation20], 16
    $region133: #{tpu_custom_call.1} parent=1 // pred_fallthru
      _
    %v224 = vld [vmem:[%s0] sm:$0xff]
    %v225 = vld [vmem:[%s0 + $0x8] sm:$0xff]
    %v226 = vld [vmem:[%s0 + $0x10] sm:$0xff]
    %v227 = vld [vmem:[%s0 + $0x18] sm:$0xff]
    %v228 = vld [vmem:[%s0 + $0x20] sm:$0xff]
    %v229 = vld [vmem:[%s0 + $0x28] sm:$0xff]
    %v230 = vld [vmem:[%s0 + $0x30] sm:$0xff]
    %v231 = vld [vmem:[%s0 + $0x38] sm:$0xff]
    %v232 = vld [vmem:[%s0 + $0x40] sm:$0xff]
    %v233 = vld [vmem:[%s0 + $0x48] sm:$0xff]
    %v234 = vld [vmem:[%s0 + $0x50] sm:$0xff]
    %v235 = vld [vmem:[%s0 + $0x58] sm:$0xff]
    %v236 = vld [vmem:[%s0 + $0x60] sm:$0xff]
    %v237 = vld [vmem:[%s0 + $0x68] sm:$0xff]
    %v238 = vld [vmem:[%s0 + $0x70] sm:$0xff]
    %v239 = vld [vmem:[%s0 + $0x78] sm:$0xff]
    %v240 = vld [vmem:[%s0 + $0x80] sm:$0xff]
    %v241 = vld [vmem:[%s0 + $0x88] sm:$0xff]
    %v242 = vld [vmem:[%s0 + $0x90] sm:$0xff]
    %v243 = vld [vmem:[%s0 + $0x98] sm:$0xff]
    %v244 = vld [vmem:[%s0 + $0xa0] sm:$0xff]
    %v245 = vld [vmem:[%s0 + $0xa8] sm:$0xff]
    %v246 = vld [vmem:[%s0 + $0xb0] sm:$0xff]
    %v247 = vld [vmem:[%s0 + $0xb8] sm:$0xff]
    %v248 = vld [vmem:[%s0 + $0xc0] sm:$0xff]
    %v249 = vld [vmem:[%s0 + $0xc8] sm:$0xff]
    %v250 = vld [vmem:[%s0 + $0xd0] sm:$0xff]
    %v251 = vld [vmem:[%s0 + $0xd8] sm:$0xff]
    %v252 = vld [vmem:[%s0 + $0xe0] sm:$0xff]
    %v253 = vld [vmem:[%s0 + $0xe8] sm:$0xff]
    %v254 = vld [vmem:[%s0 + $0xf0] sm:$0xff]
    %v255 = vld [vmem:[%s0 + $0xf8] sm:$0xff]
    %v256 = vld [vmem:[%s1] sm:$0xff]
    %v257 = vld [vmem:[%s1 + $0x8] sm:$0xff]
    %v258 = vld [vmem:[%s1 + $0x10] sm:$0xff]
    %v259 = vld [vmem:[%s1 + $0x18] sm:$0xff]
    %v260 = vld [vmem:[%s1 + $0x20] sm:$0xff]
    %v261 = vld [vmem:[%s1 + $0x28] sm:$0xff]
    %v262 = vld [vmem:[%s1 + $0x30] sm:$0xff]
    %v263 = vld [vmem:[%s1 + $0x38] sm:$0xff]
    %v264 = vld [vmem:[%s1 + $0x40] sm:$0xff]
    %v265 = vld [vmem:[%s1 + $0x48] sm:$0xff]
    %v266 = vld [vmem:[%s1 + $0x50] sm:$0xff]
    %v267 = vld [vmem:[%s1 + $0x58] sm:$0xff]
    %v268 = vld [vmem:[%s1 + $0x60] sm:$0xff]
    %v269 = vld [vmem:[%s1 + $0x68] sm:$0xff]
    %v270 = vld [vmem:[%s1 + $0x70] sm:$0xff]
    %v271 = vld [vmem:[%s1 + $0x78] sm:$0xff]
    %v272 = vld [vmem:[%s1 + $0x80] sm:$0xff]
    %v273 = vld [vmem:[%s1 + $0x88] sm:$0xff]
    %v274 = vld [vmem:[%s1 + $0x90] sm:$0xff]
    %v275 = vld [vmem:[%s1 + $0x98] sm:$0xff]
    %v276 = vld [vmem:[%s1 + $0xa0] sm:$0xff]
    %v277 = vld [vmem:[%s1 + $0xa8] sm:$0xff]
    %v278 = vld [vmem:[%s1 + $0xb0] sm:$0xff]
    %v279 = vld [vmem:[%s1 + $0xb8] sm:$0xff]
    %v280 = vld [vmem:[%s1 + $0xc0] sm:$0xff]
    %v281 = vld [vmem:[%s1 + $0xc8] sm:$0xff]
    %v282 = vld [vmem:[%s1 + $0xd0] sm:$0xff]
    %v283 = vld [vmem:[%s1 + $0xd8] sm:$0xff]
    %v284 = vld [vmem:[%s1 + $0xe0] sm:$0xff]
    %v285 = vld [vmem:[%s1 + $0xe8] sm:$0xff]
    %v286 = vld [vmem:[%s1 + $0xf0] sm:$0xff]
    %v287 = vld [vmem:[%s1 + $0xf8] sm:$0xff]
    %v288 = vld [vmem:[#allocation6] sm:$0xff]
    %v289 = vld [vmem:[#allocation6 + $0x8] sm:$0xff]
    %v290 = vld [vmem:[#allocation7] sm:$0x1]
    %v292 = vlaneseq
    %v293 = vshrl.u32 %v292, 7
    %v294 = vsub.s32 0, %v293
    %v295 = vrot.slane %v290, %v294
    %vm297 = vcmask 130048
    %v299 = vsel %vm297, %v256, 0
    %v302 = vsel %vm297, %v257, 0
    %v305 = vsel %vm297, %v258, 0
    %v308 = vsel %vm297, %v259, 0
    %v311 = vsel %vm297, %v260, 0
    %v314 = vsel %vm297, %v261, 0
    %v317 = vsel %vm297, %v262, 0
    %v320 = vsel %vm297, %v263, 0
    %v323 = vsel %vm297, %v264, 0
    %v326 = vsel %vm297, %v265, 0
    %v329 = vsel %vm297, %v266, 0
    %v332 = vsel %vm297, %v267, 0
    %v335 = vsel %vm297, %v268, 0
    %v338 = vsel %vm297, %v269, 0
    %v341 = vsel %vm297, %v270, 0
    %v344 = vsel %vm297, %v271, 0
    %v347 = vsel %vm297, %v272, 0
    %v350 = vsel %vm297, %v273, 0
    %v353 = vsel %vm297, %v274, 0
    %v356 = vsel %vm297, %v275, 0
    %v359 = vsel %vm297, %v276, 0
    %v362 = vsel %vm297, %v277, 0
    %v365 = vsel %vm297, %v278, 0
    %v368 = vsel %vm297, %v279, 0
    %v371 = vsel %vm297, %v280, 0
    %v374 = vsel %vm297, %v281, 0
    %v377 = vsel %vm297, %v282, 0
    %v380 = vsel %vm297, %v283, 0
    %v383 = vsel %vm297, %v284, 0
    %v386 = vsel %vm297, %v285, 0
    %v389 = vsel %vm297, %v286, 0
    %v392 = vsel %vm297, %v287, 0
    %394 = vmatprep.subr.mxu0 0.0
    %395 = vmatpush1.msra.mxu0 0.0
    %396 = vmatprep.subr.mxu0 0.0
    %397 = vmatpush1.msra.mxu0 0.0
    %398 = vmatprep.subr.mxu0 0.0
    %399 = vmatpush1.msra.mxu0 0.0
    %400 = vmatprep.subr.mxu0 0.0
    %401 = vmatpush1.msra.mxu0 0.0
    %402 = vmatprep.subr.mxu0 0.0
    %403 = vmatpush1.msra.mxu0 0.0
    %404 = vmatprep.subr.mxu0 0.0
    %405 = vmatpush1.msra.mxu0 0.0
    %406 = vmatprep.subr.mxu0 0.0
    %407 = vmatpush1.msra.mxu0 0.0
    %408 = vmatprep.subr.mxu0 0.0
    %409 = vmatpush1.msra.mxu0 0.0
    %410 = vmatprep.subr.mxu0 0.0
    %411 = vmatpush1.msra.mxu0 0.0
    %412 = vmatprep.subr.mxu0 0.0
    %413 = vmatpush1.msra.mxu0 0.0
    %414 = vmatprep.subr.mxu0 0.0
    %415 = vmatpush1.msra.mxu0 0.0
    %416 = vmatprep.subr.mxu0 0.0
    %417 = vmatpush1.msra.mxu0 0.0
    %418 = vmatprep.subr.mxu0 0.0
    %419 = vmatpush1.msra.mxu0 0.0
    %420 = vmatprep.subr.mxu0 0.0
    %421 = vmatpush1.msra.mxu0 0.0
    %422 = vmatprep.subr.mxu0 0.0
    %423 = vmatpush1.msra.mxu0 %v289
    %424 = vmatprep.subr.mxu0 0.0
    %425 = vmatpush1.msra.mxu0 %v288
    %426 = vmatprep.subr.mxu0 0.0
    %427 = vmatpush2.msra.mxu0 0.0
    %428 = vmatprep.subr.mxu0 0.0
    %429 = vmatpush2.msra.mxu0 0.0
    %430 = vmatprep.subr.mxu0 0.0
    %431 = vmatpush2.msra.mxu0 0.0
    %432 = vmatprep.subr.mxu0 0.0
    %433 = vmatpush2.msra.mxu0 0.0
    %434 = vmatprep.subr.mxu0 0.0
    %435 = vmatpush2.msra.mxu0 0.0
    %436 = vmatprep.subr.mxu0 0.0
    %437 = vmatpush2.msra.mxu0 0.0
    %438 = vmatprep.subr.mxu0 0.0
    %439 = vmatpush2.msra.mxu0 0.0
    %440 = vmatprep.subr.mxu0 0.0
    %441 = vmatpush2.msra.mxu0 0.0
    %442 = vmatprep.subr.mxu0 0.0
    %443 = vmatpush2.msra.mxu0 0.0
    %444 = vmatprep.subr.mxu0 0.0
    %445 = vmatpush2.msra.mxu0 0.0
    %446 = vmatprep.subr.mxu0 0.0
    %447 = vmatpush2.msra.mxu0 0.0
    %448 = vmatprep.subr.mxu0 0.0
    %449 = vmatpush2.msra.mxu0 0.0
    %450 = vmatprep.subr.mxu0 0.0
    %451 = vmatpush2.msra.mxu0 0.0
    %452 = vmatprep.subr.mxu0 0.0
    %453 = vmatpush2.msra.mxu0 0.0
    %454 = vmatprep.subr.mxu0 0.0
    %455 = vmatpush2.msra.mxu0 0.0
    %456 = vmatprep.subr.mxu0 0.0
    %457 = vmatpush2.msra.mxu0 0.0
    %458 = vmatprep.mubr.f32.mxu0 0.0
    %459 = vmatmul.mubr.f32.gmra.mxu0 %v299
    %v460 = vpop.f32.mrf.mxu0
    %v461 = vadd.f32 %v295, %v460
    %v462 = vpop.f32.mrf.mxu0
    %463 = vmatprep.mubr.f32.mxu0 0.0
    %464 = vmatmul.mubr.f32.gmra.mxu0 %v302
    %v465 = vpop.f32.mrf.mxu0
    %v466 = vadd.f32 %v295, %v465
    %v467 = vpop.f32.mrf.mxu0
    %468 = vmatprep.mubr.f32.mxu0 0.0
    %469 = vmatmul.mubr.f32.gmra.mxu0 %v305
    %v470 = vpop.f32.mrf.mxu0
    %v471 = vadd.f32 %v295, %v470
    %v472 = vpop.f32.mrf.mxu0
    %473 = vmatprep.mubr.f32.mxu0 0.0
    %474 = vmatmul.mubr.f32.gmra.mxu0 %v308
    %v475 = vpop.f32.mrf.mxu0
    %v476 = vadd.f32 %v295, %v475
    %v477 = vpop.f32.mrf.mxu0
    %478 = vmatprep.mubr.f32.mxu0 0.0
    %479 = vmatmul.mubr.f32.gmra.mxu0 %v311
    %v480 = vpop.f32.mrf.mxu0
    %v481 = vadd.f32 %v295, %v480
    %v482 = vpop.f32.mrf.mxu0
    %483 = vmatprep.mubr.f32.mxu0 0.0
    %484 = vmatmul.mubr.f32.gmra.mxu0 %v314
    %v485 = vpop.f32.mrf.mxu0
    %v486 = vadd.f32 %v295, %v485
    %v487 = vpop.f32.mrf.mxu0
    %488 = vmatprep.mubr.f32.mxu0 0.0
    %489 = vmatmul.mubr.f32.gmra.mxu0 %v317
    %v490 = vpop.f32.mrf.mxu0
    %v491 = vadd.f32 %v295, %v490
    %v492 = vpop.f32.mrf.mxu0
    %493 = vmatprep.mubr.f32.mxu0 0.0
    %494 = vmatmul.mubr.f32.gmra.mxu0 %v320
    %v495 = vpop.f32.mrf.mxu0
    %v496 = vadd.f32 %v295, %v495
    %v497 = vpop.f32.mrf.mxu0
    %498 = vmatprep.mubr.f32.mxu0 0.0
    %499 = vmatmul.mubr.f32.gmra.mxu0 %v323
    %v500 = vpop.f32.mrf.mxu0
    %v501 = vadd.f32 %v295, %v500
    %v502 = vpop.f32.mrf.mxu0
    %503 = vmatprep.mubr.f32.mxu0 0.0
    %504 = vmatmul.mubr.f32.gmra.mxu0 %v326
    %v505 = vpop.f32.mrf.mxu0
    %v506 = vadd.f32 %v295, %v505
    %v507 = vpop.f32.mrf.mxu0
    %508 = vmatprep.mubr.f32.mxu0 0.0
    %509 = vmatmul.mubr.f32.gmra.mxu0 %v329
    %v510 = vpop.f32.mrf.mxu0
    %v511 = vadd.f32 %v295, %v510
    %v512 = vpop.f32.mrf.mxu0
    %513 = vmatprep.mubr.f32.mxu0 0.0
    %514 = vmatmul.mubr.f32.gmra.mxu0 %v332
    %v515 = vpop.f32.mrf.mxu0
    %v516 = vadd.f32 %v295, %v515
    %v517 = vpop.f32.mrf.mxu0
    %518 = vmatprep.mubr.f32.mxu0 0.0
    %519 = vmatmul.mubr.f32.gmra.mxu0 %v335
    %v520 = vpop.f32.mrf.mxu0
    %v521 = vadd.f32 %v295, %v520
    %v522 = vpop.f32.mrf.mxu0
    %523 = vmatprep.mubr.f32.mxu0 0.0
    %524 = vmatmul.mubr.f32.gmra.mxu0 %v338
    %v525 = vpop.f32.mrf.mxu0
    %v526 = vadd.f32 %v295, %v525
    %v527 = vpop.f32.mrf.mxu0
    %528 = vmatprep.mubr.f32.mxu0 0.0
    %529 = vmatmul.mubr.f32.gmra.mxu0 %v341
    %v530 = vpop.f32.mrf.mxu0
    %v531 = vadd.f32 %v295, %v530
    %v532 = vpop.f32.mrf.mxu0
    %533 = vmatprep.mubr.f32.mxu0 0.0
    %534 = vmatmul.mubr.f32.gmra.mxu0 %v344
    %v535 = vpop.f32.mrf.mxu0
    %v536 = vadd.f32 %v295, %v535
    %v537 = vpop.f32.mrf.mxu0
    %538 = vmatprep.mubr.f32.mxu0 0.0
    %539 = vmatmul.mubr.f32.gmra.mxu0 %v347
    %v540 = vpop.f32.mrf.mxu0
    %v541 = vadd.f32 %v295, %v540
    %v542 = vpop.f32.mrf.mxu0
    %543 = vmatprep.mubr.f32.mxu0 0.0
    %544 = vmatmul.mubr.f32.gmra.mxu0 %v350
    %v545 = vpop.f32.mrf.mxu0
    %v546 = vadd.f32 %v295, %v545
    %v547 = vpop.f32.mrf.mxu0
    %548 = vmatprep.mubr.f32.mxu0 0.0
    %549 = vmatmul.mubr.f32.gmra.mxu0 %v353
    %v550 = vpop.f32.mrf.mxu0
    %v551 = vadd.f32 %v295, %v550
    %v552 = vpop.f32.mrf.mxu0
    %553 = vmatprep.mubr.f32.mxu0 0.0
    %554 = vmatmul.mubr.f32.gmra.mxu0 %v356
    %v555 = vpop.f32.mrf.mxu0
    %v556 = vadd.f32 %v295, %v555
    %v557 = vpop.f32.mrf.mxu0
    %558 = vmatprep.mubr.f32.mxu0 0.0
    %559 = vmatmul.mubr.f32.gmra.mxu0 %v359
    %v560 = vpop.f32.mrf.mxu0
    %v561 = vadd.f32 %v295, %v560
    %v562 = vpop.f32.mrf.mxu0
    %563 = vmatprep.mubr.f32.mxu0 0.0
    %564 = vmatmul.mubr.f32.gmra.mxu0 %v362
    %v565 = vpop.f32.mrf.mxu0
    %v566 = vadd.f32 %v295, %v565
    %v567 = vpop.f32.mrf.mxu0
    %568 = vmatprep.mubr.f32.mxu0 0.0
    %569 = vmatmul.mubr.f32.gmra.mxu0 %v365
    %v570 = vpop.f32.mrf.mxu0
    %v571 = vadd.f32 %v295, %v570
    %v572 = vpop.f32.mrf.mxu0
    %573 = vmatprep.mubr.f32.mxu0 0.0
    %574 = vmatmul.mubr.f32.gmra.mxu0 %v368
    %v575 = vpop.f32.mrf.mxu0
    %v576 = vadd.f32 %v295, %v575
    %v577 = vpop.f32.mrf.mxu0
    %578 = vmatprep.mubr.f32.mxu0 0.0
    %579 = vmatmul.mubr.f32.gmra.mxu0 %v371
    %v580 = vpop.f32.mrf.mxu0
    %v581 = vadd.f32 %v295, %v580
    %v582 = vpop.f32.mrf.mxu0
    %583 = vmatprep.mubr.f32.mxu0 0.0
    %584 = vmatmul.mubr.f32.gmra.mxu0 %v374
    %v585 = vpop.f32.mrf.mxu0
    %v586 = vadd.f32 %v295, %v585
    %v587 = vpop.f32.mrf.mxu0
    %588 = vmatprep.mubr.f32.mxu0 0.0
    %589 = vmatmul.mubr.f32.gmra.mxu0 %v377
    %v590 = vpop.f32.mrf.mxu0
    %v591 = vadd.f32 %v295, %v590
    %v592 = vpop.f32.mrf.mxu0
    %593 = vmatprep.mubr.f32.mxu0 0.0
    %594 = vmatmul.mubr.f32.gmra.mxu0 %v380
    %v595 = vpop.f32.mrf.mxu0
    %v596 = vadd.f32 %v295, %v595
    %v597 = vpop.f32.mrf.mxu0
    %598 = vmatprep.mubr.f32.mxu0 0.0
    %599 = vmatmul.mubr.f32.gmra.mxu0 %v383
    %v600 = vpop.f32.mrf.mxu0
    %v601 = vadd.f32 %v295, %v600
    %v602 = vpop.f32.mrf.mxu0
    %603 = vmatprep.mubr.f32.mxu0 0.0
    %604 = vmatmul.mubr.f32.gmra.mxu0 %v386
    %v605 = vpop.f32.mrf.mxu0
    %v606 = vadd.f32 %v295, %v605
    %v607 = vpop.f32.mrf.mxu0
    %608 = vmatprep.mubr.f32.mxu0 0.0
    %609 = vmatmul.mubr.f32.gmra.mxu0 %v389
    %v610 = vpop.f32.mrf.mxu0
    %v611 = vadd.f32 %v295, %v610
    %v612 = vpop.f32.mrf.mxu0
    %613 = vmatprep.mubr.f32.mxu0 0.0
    %614 = vmatmul.mubr.f32.gmra.mxu0 %v392
    %v615 = vpop.f32.mrf.mxu0
    %v616 = vadd.f32 %v295, %v615
    %v617 = vpop.f32.mrf.mxu0
    %618 = vdwg.mxu0
    %v619 = vpack.c.bf16 %v257, %v256
    %v620 = vpack.c.bf16 %v259, %v258
    %v621 = vpack.c.bf16 %v261, %v260
    %v622 = vpack.c.bf16 %v263, %v262
    %v623 = vpack.c.bf16 %v265, %v264
    %v624 = vpack.c.bf16 %v267, %v266
    %v625 = vpack.c.bf16 %v269, %v268
    %v626 = vpack.c.bf16 %v271, %v270
    %v627 = vpack.c.bf16 %v273, %v272
    %v628 = vpack.c.bf16 %v275, %v274
    %v629 = vpack.c.bf16 %v277, %v276
    %v630 = vpack.c.bf16 %v279, %v278
    %v631 = vpack.c.bf16 %v281, %v280
    %v632 = vpack.c.bf16 %v283, %v282
    %v633 = vpack.c.bf16 %v285, %v284
    %v634 = vpack.c.bf16 %v287, %v286
    %v667 = vunpack.c.l.b16 %v224
    %v668 = vunpack.c.h.b16 %v224
    %v669 = vunpack.c.l.b16 %v225
    %v670 = vunpack.c.h.b16 %v225
    %v671 = vunpack.c.l.b16 %v226
    %v672 = vunpack.c.h.b16 %v226
    %v673 = vunpack.c.l.b16 %v227
    %v674 = vunpack.c.h.b16 %v227
    %v675 = vunpack.c.l.b16 %v228
    %v676 = vunpack.c.h.b16 %v228
    %v677 = vunpack.c.l.b16 %v229
    %v678 = vunpack.c.h.b16 %v229
    %v679 = vunpack.c.l.b16 %v230
    %v680 = vunpack.c.h.b16 %v230
    %v681 = vunpack.c.l.b16 %v231
    %v682 = vunpack.c.h.b16 %v231
    %v683 = vunpack.c.l.b16 %v232
    %v684 = vunpack.c.h.b16 %v232
    %v685 = vunpack.c.l.b16 %v233
    %v686 = vunpack.c.h.b16 %v233
    %v687 = vunpack.c.l.b16 %v234
    %v688 = vunpack.c.h.b16 %v234
    %v689 = vunpack.c.l.b16 %v235
    %v690 = vunpack.c.h.b16 %v235
    %v691 = vunpack.c.l.b16 %v236
    %v692 = vunpack.c.h.b16 %v236
    %v693 = vunpack.c.l.b16 %v237
    %v694 = vunpack.c.h.b16 %v237
    %v695 = vunpack.c.l.b16 %v238
    %v696 = vunpack.c.h.b16 %v238
    %v697 = vunpack.c.l.b16 %v239
    %v698 = vunpack.c.h.b16 %v239
    %v699 = vunpack.c.l.b16 %v240
    %v700 = vunpack.c.h.b16 %v240
    %v701 = vunpack.c.l.b16 %v241
    %v702 = vunpack.c.h.b16 %v241
    %v703 = vunpack.c.l.b16 %v242
    %v704 = vunpack.c.h.b16 %v242
    %v705 = vunpack.c.l.b16 %v243
    %v706 = vunpack.c.h.b16 %v243
    %v707 = vunpack.c.l.b16 %v244
    %v708 = vunpack.c.h.b16 %v244
    %v709 = vunpack.c.l.b16 %v245
    %v710 = vunpack.c.h.b16 %v245
    %v711 = vunpack.c.l.b16 %v246
    %v712 = vunpack.c.h.b16 %v246
    %v713 = vunpack.c.l.b16 %v247
    %v714 = vunpack.c.h.b16 %v247
    %v715 = vunpack.c.l.b16 %v248
    %v716 = vunpack.c.h.b16 %v248
    %v717 = vunpack.c.l.b16 %v249
    %v718 = vunpack.c.h.b16 %v249
    %v719 = vunpack.c.l.b16 %v250
    %v720 = vunpack.c.h.b16 %v250
    %v721 = vunpack.c.l.b16 %v251
    %v722 = vunpack.c.h.b16 %v251
    %v723 = vunpack.c.l.b16 %v252
    %v724 = vunpack.c.h.b16 %v252
    %v725 = vunpack.c.l.b16 %v253
    %v726 = vunpack.c.h.b16 %v253
    %v727 = vunpack.c.l.b16 %v254
    %v728 = vunpack.c.h.b16 %v254
    %v729 = vunpack.c.l.b16 %v255
    %v730 = vunpack.c.h.b16 %v255
    %v731 = vpack.c.b16 %v669, %v667
    %v732 = vpack.c.b16 %v670, %v668
    %v733 = vpack.c.b16 %v673, %v671
    %v734 = vpack.c.b16 %v674, %v672
    %v735 = vpack.c.b16 %v677, %v675
    %v736 = vpack.c.b16 %v678, %v676
    %v737 = vpack.c.b16 %v681, %v679
    %v738 = vpack.c.b16 %v682, %v680
    %v739 = vpack.c.b16 %v685, %v683
    %v740 = vpack.c.b16 %v686, %v684
    %v741 = vpack.c.b16 %v689, %v687
    %v742 = vpack.c.b16 %v690, %v688
    %v743 = vpack.c.b16 %v693, %v691
    %v744 = vpack.c.b16 %v694, %v692
    %v745 = vpack.c.b16 %v697, %v695
    %v746 = vpack.c.b16 %v698, %v696
    %v747 = vpack.c.b16 %v701, %v699
    %v748 = vpack.c.b16 %v702, %v700
    %v749 = vpack.c.b16 %v705, %v703
    %v750 = vpack.c.b16 %v706, %v704
    %v751 = vpack.c.b16 %v709, %v707
    %v752 = vpack.c.b16 %v710, %v708
    %v753 = vpack.c.b16 %v713, %v711
    %v754 = vpack.c.b16 %v714, %v712
    %v755 = vpack.c.b16 %v717, %v715
    %v756 = vpack.c.b16 %v718, %v716
    %v757 = vpack.c.b16 %v721, %v719
    %v758 = vpack.c.b16 %v722, %v720
    %v759 = vpack.c.b16 %v725, %v723
    %v760 = vpack.c.b16 %v726, %v724
    %v761 = vpack.c.b16 %v729, %v727
    %v762 = vpack.c.b16 %v730, %v728
    %795 = vmatprep.subr.bf16.mxu0 0
    %796 = vmatpush1.bf16.msra.mxu0 %v626
    %797 = vmatprep.subr.bf16.mxu0 0
    %798 = vmatpush1.bf16.msra.mxu0 %v625
    %799 = vmatprep.subr.bf16.mxu0 0
    %800 = vmatpush1.bf16.msra.mxu0 %v624
    %801 = vmatprep.subr.bf16.mxu0 0
    %802 = vmatpush1.bf16.msra.mxu0 %v623
    %803 = vmatprep.subr.bf16.mxu0 0
    %804 = vmatpush1.bf16.msra.mxu0 %v622
    %805 = vmatprep.subr.bf16.mxu0 0
    %806 = vmatpush1.bf16.msra.mxu0 %v621
    %807 = vmatprep.subr.bf16.mxu0 0
    %808 = vmatpush1.bf16.msra.mxu0 %v620
    %809 = vmatprep.subr.bf16.mxu0 0
    %810 = vmatpush1.bf16.msra.mxu0 %v619
    %811 = vmatprep.subr.bf16.mxu0 0
    %812 = vmatpush2.bf16.msra.mxu0 %v634
    %813 = vmatprep.subr.bf16.mxu0 0
    %814 = vmatpush2.bf16.msra.mxu0 %v633
    %815 = vmatprep.subr.bf16.mxu0 0
    %816 = vmatpush2.bf16.msra.mxu0 %v632
    %817 = vmatprep.subr.bf16.mxu0 0
    %818 = vmatpush2.bf16.msra.mxu0 %v631
    %819 = vmatprep.subr.bf16.mxu0 0
    %820 = vmatpush2.bf16.msra.mxu0 %v630
    %821 = vmatprep.subr.bf16.mxu0 0
    %822 = vmatpush2.bf16.msra.mxu0 %v629
    %823 = vmatprep.subr.bf16.mxu0 0
    %824 = vmatpush2.bf16.msra.mxu0 %v628
    %825 = vmatprep.subr.bf16.mxu0 0
    %826 = vmatpush2.bf16.msra.mxu0 %v627
    %827 = vmatprep.mubr.bf16.mxu0 %v732
    %828 = vmatmul.mubr.bf16.gmra.mxu0 %v731
    %v829 = vpop.f32.mrf.mxu0
    %v830 = vadd.f32 0.0, %v829
    %v831 = vpop.f32.mrf.mxu0
    %v832 = vpop.f32.mrf.mxu0
    %v833 = vadd.f32 0.0, %v832
    %v834 = vpop.f32.mrf.mxu0
    %835 = vmatprep.mubr.bf16.mxu0 %v734
    %836 = vmatmul.mubr.bf16.gmra.mxu0 %v733
    %v837 = vpop.f32.mrf.mxu0
    %v838 = vadd.f32 0.0, %v837
    %v839 = vpop.f32.mrf.mxu0
    %v840 = vpop.f32.mrf.mxu0
    %v841 = vadd.f32 0.0, %v840
    %v842 = vpop.f32.mrf.mxu0
    %843 = vmatprep.mubr.bf16.mxu0 %v736
    %844 = vmatmul.mubr.bf16.gmra.mxu0 %v735
    %v845 = vpop.f32.mrf.mxu0
    %v846 = vadd.f32 0.0, %v845
    %v847 = vpop.f32.mrf.mxu0
    %v848 = vpop.f32.mrf.mxu0
    %v849 = vadd.f32 0.0, %v848
    %v850 = vpop.f32.mrf.mxu0
    %851 = vmatprep.mubr.bf16.mxu0 %v738
    %852 = vmatmul.mubr.bf16.gmra.mxu0 %v737
    %v853 = vpop.f32.mrf.mxu0
    %v854 = vadd.f32 0.0, %v853
    %v855 = vpop.f32.mrf.mxu0
    %v856 = vpop.f32.mrf.mxu0
    %v857 = vadd.f32 0.0, %v856
    %v858 = vpop.f32.mrf.mxu0
    %859 = vmatprep.mubr.bf16.mxu0 %v740
    %860 = vmatmul.mubr.bf16.gmra.mxu0 %v739
    %v861 = vpop.f32.mrf.mxu0
    %v862 = vadd.f32 0.0, %v861
    %v863 = vpop.f32.mrf.mxu0
    %v864 = vpop.f32.mrf.mxu0
    %v865 = vadd.f32 0.0, %v864
    %v866 = vpop.f32.mrf.mxu0
    %867 = vmatprep.mubr.bf16.mxu0 %v742
    %868 = vmatmul.mubr.bf16.gmra.mxu0 %v741
    %v869 = vpop.f32.mrf.mxu0
    %v870 = vadd.f32 0.0, %v869
    %v871 = vpop.f32.mrf.mxu0
    %v872 = vpop.f32.mrf.mxu0
    %v873 = vadd.f32 0.0, %v872
    %v874 = vpop.f32.mrf.mxu0
    %875 = vmatprep.mubr.bf16.mxu0 %v744
    %876 = vmatmul.mubr.bf16.gmra.mxu0 %v743
    %v877 = vpop.f32.mrf.mxu0
    %v878 = vadd.f32 0.0, %v877
    %v879 = vpop.f32.mrf.mxu0
    %v880 = vpop.f32.mrf.mxu0
    %v881 = vadd.f32 0.0, %v880
    %v882 = vpop.f32.mrf.mxu0
    %883 = vmatprep.mubr.bf16.mxu0 %v746
    %884 = vmatmul.mubr.bf16.gmra.mxu0 %v745
    %v885 = vpop.f32.mrf.mxu0
    %v886 = vadd.f32 0.0, %v885
    %v887 = vpop.f32.mrf.mxu0
    %v888 = vpop.f32.mrf.mxu0
    %v889 = vadd.f32 0.0, %v888
    %v890 = vpop.f32.mrf.mxu0
    %891 = vmatprep.mubr.bf16.mxu0 %v748
    %892 = vmatmul.mubr.bf16.gmra.mxu0 %v747
    %v893 = vpop.f32.mrf.mxu0
    %v894 = vadd.f32 0.0, %v893
    %v895 = vpop.f32.mrf.mxu0
    %v896 = vpop.f32.mrf.mxu0
    %v897 = vadd.f32 0.0, %v896
    %v898 = vpop.f32.mrf.mxu0
    %899 = vmatprep.mubr.bf16.mxu0 %v750
    %900 = vmatmul.mubr.bf16.gmra.mxu0 %v749
    %v901 = vpop.f32.mrf.mxu0
    %v902 = vadd.f32 0.0, %v901
    %v903 = vpop.f32.mrf.mxu0
    %v904 = vpop.f32.mrf.mxu0
    %v905 = vadd.f32 0.0, %v904
    %v906 = vpop.f32.mrf.mxu0
    %907 = vmatprep.mubr.bf16.mxu0 %v752
    %908 = vmatmul.mubr.bf16.gmra.mxu0 %v751
    %v909 = vpop.f32.mrf.mxu0
    %v910 = vadd.f32 0.0, %v909
    %v911 = vpop.f32.mrf.mxu0
    %v912 = vpop.f32.mrf.mxu0
    %v913 = vadd.f32 0.0, %v912
    %v914 = vpop.f32.mrf.mxu0
    %915 = vmatprep.mubr.bf16.mxu0 %v754
    %916 = vmatmul.mubr.bf16.gmra.mxu0 %v753
    %v917 = vpop.f32.mrf.mxu0
    %v918 = vadd.f32 0.0, %v917
    %v919 = vpop.f32.mrf.mxu0
    %v920 = vpop.f32.mrf.mxu0
    %v921 = vadd.f32 0.0, %v920
    %v922 = vpop.f32.mrf.mxu0
    %923 = vmatprep.mubr.bf16.mxu0 %v756
    %924 = vmatmul.mubr.bf16.gmra.mxu0 %v755
    %v925 = vpop.f32.mrf.mxu0
    %v926 = vadd.f32 0.0, %v925
    %v927 = vpop.f32.mrf.mxu0
    %v928 = vpop.f32.mrf.mxu0
    %v929 = vadd.f32 0.0, %v928
    %v930 = vpop.f32.mrf.mxu0
    %931 = vmatprep.mubr.bf16.mxu0 %v758
    %932 = vmatmul.mubr.bf16.gmra.mxu0 %v757
    %v933 = vpop.f32.mrf.mxu0
    %v934 = vadd.f32 0.0, %v933
    %v935 = vpop.f32.mrf.mxu0
    %v936 = vpop.f32.mrf.mxu0
    %v937 = vadd.f32 0.0, %v936
    %v938 = vpop.f32.mrf.mxu0
    %939 = vmatprep.mubr.bf16.mxu0 %v760
    %940 = vmatmul.mubr.bf16.gmra.mxu0 %v759
    %v941 = vpop.f32.mrf.mxu0
    %v942 = vadd.f32 0.0, %v941
    %v943 = vpop.f32.mrf.mxu0
    %v944 = vpop.f32.mrf.mxu0
    %v945 = vadd.f32 0.0, %v944
    %v946 = vpop.f32.mrf.mxu0
    %947 = vmatprep.mubr.bf16.mxu0 %v762
    %948 = vmatmul.mubr.bf16.gmra.mxu0 %v761
    %v949 = vpop.f32.mrf.mxu0
    %v950 = vadd.f32 0.0, %v949
    %v951 = vpop.f32.mrf.mxu0
    %v952 = vpop.f32.mrf.mxu0
    %v953 = vadd.f32 0.0, %v952
    %v954 = vpop.f32.mrf.mxu0
    %955 = vdwg.mxu0
    %v956 = vld [vmem:[#allocation2] sm:$0xff]
    %v957 = vld [vmem:[#allocation2 + $0x8] sm:$0xff]
    %v958 = vld [vmem:[#allocation4] sm:$0x1]
    %v960 = vlaneseq
    %v961 = vshrl.u32 %v960, 7
    %v962 = vsub.s32 0, %v961
    %v963 = vrot.slane %v958, %v962
    %v966 = vsel %vm297, %v830, 0
    %v969 = vsel %vm297, %v833, 0
    %v972 = vsel %vm297, %v838, 0
    %v975 = vsel %vm297, %v841, 0
    %v978 = vsel %vm297, %v846, 0
    %v981 = vsel %vm297, %v849, 0
    %v984 = vsel %vm297, %v854, 0
    %v987 = vsel %vm297, %v857, 0
    %v990 = vsel %vm297, %v862, 0
    %v993 = vsel %vm297, %v865, 0
    %v996 = vsel %vm297, %v870, 0
    %v999 = vsel %vm297, %v873, 0
    %v1002 = vsel %vm297, %v878, 0
    %v1005 = vsel %vm297, %v881, 0
    %v1008 = vsel %vm297, %v886, 0
    %v1011 = vsel %vm297, %v889, 0
    %v1014 = vsel %vm297, %v894, 0
    %v1017 = vsel %vm297, %v897, 0
    %v1020 = vsel %vm297, %v902, 0
    %v1023 = vsel %vm297, %v905, 0
    %v1026 = vsel %vm297, %v910, 0
    %v1029 = vsel %vm297, %v913, 0
    %v1032 = vsel %vm297, %v918, 0
    %v1035 = vsel %vm297, %v921, 0
    %v1038 = vsel %vm297, %v926, 0
    %v1041 = vsel %vm297, %v929, 0
    %v1044 = vsel %vm297, %v934, 0
    %v1047 = vsel %vm297, %v937, 0
    %v1050 = vsel %vm297, %v942, 0
    %v1053 = vsel %vm297, %v945, 0
    %v1056 = vsel %vm297, %v950, 0
    %v1059 = vsel %vm297, %v953, 0
    %1061 = vmatprep.subr.mxu0 0.0
    %1062 = vmatpush1.msra.mxu0 0.0
    %1063 = vmatprep.subr.mxu0 0.0
    %1064 = vmatpush1.msra.mxu0 0.0
    %1065 = vmatprep.subr.mxu0 0.0
    %1066 = vmatpush1.msra.mxu0 0.0
    %1067 = vmatprep.subr.mxu0 0.0
    %1068 = vmatpush1.msra.mxu0 0.0
    %1069 = vmatprep.subr.mxu0 0.0
    %1070 = vmatpush1.msra.mxu0 0.0
    %1071 = vmatprep.subr.mxu0 0.0
    %1072 = vmatpush1.msra.mxu0 0.0
    %1073 = vmatprep.subr.mxu0 0.0
    %1074 = vmatpush1.msra.mxu0 0.0
    %1075 = vmatprep.subr.mxu0 0.0
    %1076 = vmatpush1.msra.mxu0 0.0
    %1077 = vmatprep.subr.mxu0 0.0
    %1078 = vmatpush1.msra.mxu0 0.0
    %1079 = vmatprep.subr.mxu0 0.0
    %1080 = vmatpush1.msra.mxu0 0.0
    %1081 = vmatprep.subr.mxu0 0.0
    %1082 = vmatpush1.msra.mxu0 0.0
    %1083 = vmatprep.subr.mxu0 0.0
    %1084 = vmatpush1.msra.mxu0 0.0
    %1085 = vmatprep.subr.mxu0 0.0
    %1086 = vmatpush1.msra.mxu0 0.0
    %1087 = vmatprep.subr.mxu0 0.0
    %1088 = vmatpush1.msra.mxu0 0.0
    %1089 = vmatprep.subr.mxu0 0.0
    %1090 = vmatpush1.msra.mxu0 %v957
    %1091 = vmatprep.subr.mxu0 0.0
    %1092 = vmatpush1.msra.mxu0 %v956
    %1093 = vmatprep.subr.mxu0 0.0
    %1094 = vmatpush2.msra.mxu0 0.0
    %1095 = vmatprep.subr.mxu0 0.0
    %1096 = vmatpush2.msra.mxu0 0.0
    %1097 = vmatprep.subr.mxu0 0.0
    %1098 = vmatpush2.msra.mxu0 0.0
    %1099 = vmatprep.subr.mxu0 0.0
    %1100 = vmatpush2.msra.mxu0 0.0
    %1101 = vmatprep.subr.mxu0 0.0
    %1102 = vmatpush2.msra.mxu0 0.0
    %1103 = vmatprep.subr.mxu0 0.0
    %1104 = vmatpush2.msra.mxu0 0.0
    %1105 = vmatprep.subr.mxu0 0.0
    %1106 = vmatpush2.msra.mxu0 0.0
    %1107 = vmatprep.subr.mxu0 0.0
    %1108 = vmatpush2.msra.mxu0 0.0
    %1109 = vmatprep.subr.mxu0 0.0
    %1110 = vmatpush2.msra.mxu0 0.0
    %1111 = vmatprep.subr.mxu0 0.0
    %1112 = vmatpush2.msra.mxu0 0.0
    %1113 = vmatprep.subr.mxu0 0.0
    %1114 = vmatpush2.msra.mxu0 0.0
    %1115 = vmatprep.subr.mxu0 0.0
    %1116 = vmatpush2.msra.mxu0 0.0
    %1117 = vmatprep.subr.mxu0 0.0
    %1118 = vmatpush2.msra.mxu0 0.0
    %1119 = vmatprep.subr.mxu0 0.0
    %1120 = vmatpush2.msra.mxu0 0.0
    %1121 = vmatprep.subr.mxu0 0.0
    %1122 = vmatpush2.msra.mxu0 0.0
    %1123 = vmatprep.subr.mxu0 0.0
    %1124 = vmatpush2.msra.mxu0 0.0
    %1125 = vmatprep.mubr.f32.mxu0 0.0
    %1126 = vmatmul.mubr.f32.gmra.mxu0 %v966
    %v1127 = vpop.f32.mrf.mxu0
    %v1128 = vadd.f32 %v963, %v1127
    %v1129 = vpop.f32.mrf.mxu0
    %1130 = vmatprep.mubr.f32.mxu0 0.0
    %1131 = vmatmul.mubr.f32.gmra.mxu0 %v969
    %v1132 = vpop.f32.mrf.mxu0
    %v1133 = vadd.f32 %v963, %v1132
    %v1134 = vpop.f32.mrf.mxu0
    %1135 = vmatprep.mubr.f32.mxu0 0.0
    %1136 = vmatmul.mubr.f32.gmra.mxu0 %v972
    %v1137 = vpop.f32.mrf.mxu0
    %v1138 = vadd.f32 %v963, %v1137
    %v1139 = vpop.f32.mrf.mxu0
    %1140 = vmatprep.mubr.f32.mxu0 0.0
    %1141 = vmatmul.mubr.f32.gmra.mxu0 %v975
    %v1142 = vpop.f32.mrf.mxu0
    %v1143 = vadd.f32 %v963, %v1142
    %v1144 = vpop.f32.mrf.mxu0
    %1145 = vmatprep.mubr.f32.mxu0 0.0
    %1146 = vmatmul.mubr.f32.gmra.mxu0 %v978
    %v1147 = vpop.f32.mrf.mxu0
    %v1148 = vadd.f32 %v963, %v1147
    %v1149 = vpop.f32.mrf.mxu0
    %1150 = vmatprep.mubr.f32.mxu0 0.0
    %1151 = vmatmul.mubr.f32.gmra.mxu0 %v981
    %v1152 = vpop.f32.mrf.mxu0
    %v1153 = vadd.f32 %v963, %v1152
    %v1154 = vpop.f32.mrf.mxu0
    %1155 = vmatprep.mubr.f32.mxu0 0.0
    %1156 = vmatmul.mubr.f32.gmra.mxu0 %v984
    %v1157 = vpop.f32.mrf.mxu0
    %v1158 = vadd.f32 %v963, %v1157
    %v1159 = vpop.f32.mrf.mxu0
    %1160 = vmatprep.mubr.f32.mxu0 0.0
    %1161 = vmatmul.mubr.f32.gmra.mxu0 %v987
    %v1162 = vpop.f32.mrf.mxu0
    %v1163 = vadd.f32 %v963, %v1162
    %v1164 = vpop.f32.mrf.mxu0
    %1165 = vmatprep.mubr.f32.mxu0 0.0
    %1166 = vmatmul.mubr.f32.gmra.mxu0 %v990
    %v1167 = vpop.f32.mrf.mxu0
    %v1168 = vadd.f32 %v963, %v1167
    %v1169 = vpop.f32.mrf.mxu0
    %1170 = vmatprep.mubr.f32.mxu0 0.0
    %1171 = vmatmul.mubr.f32.gmra.mxu0 %v993
    %v1172 = vpop.f32.mrf.mxu0
    %v1173 = vadd.f32 %v963, %v1172
    %v1174 = vpop.f32.mrf.mxu0
    %1175 = vmatprep.mubr.f32.mxu0 0.0
    %1176 = vmatmul.mubr.f32.gmra.mxu0 %v996
    %v1177 = vpop.f32.mrf.mxu0
    %v1178 = vadd.f32 %v963, %v1177
    %v1179 = vpop.f32.mrf.mxu0
    %1180 = vmatprep.mubr.f32.mxu0 0.0
    %1181 = vmatmul.mubr.f32.gmra.mxu0 %v999
    %v1182 = vpop.f32.mrf.mxu0
    %v1183 = vadd.f32 %v963, %v1182
    %v1184 = vpop.f32.mrf.mxu0
    %1185 = vmatprep.mubr.f32.mxu0 0.0
    %1186 = vmatmul.mubr.f32.gmra.mxu0 %v1002
    %v1187 = vpop.f32.mrf.mxu0
    %v1188 = vadd.f32 %v963, %v1187
    %v1189 = vpop.f32.mrf.mxu0
    %1190 = vmatprep.mubr.f32.mxu0 0.0
    %1191 = vmatmul.mubr.f32.gmra.mxu0 %v1005
    %v1192 = vpop.f32.mrf.mxu0
    %v1193 = vadd.f32 %v963, %v1192
    %v1194 = vpop.f32.mrf.mxu0
    %1195 = vmatprep.mubr.f32.mxu0 0.0
    %1196 = vmatmul.mubr.f32.gmra.mxu0 %v1008
    %v1197 = vpop.f32.mrf.mxu0
    %v1198 = vadd.f32 %v963, %v1197
    %v1199 = vpop.f32.mrf.mxu0
    %1200 = vmatprep.mubr.f32.mxu0 0.0
    %1201 = vmatmul.mubr.f32.gmra.mxu0 %v1011
    %v1202 = vpop.f32.mrf.mxu0
    %v1203 = vadd.f32 %v963, %v1202
    %v1204 = vpop.f32.mrf.mxu0
    %1205 = vmatprep.mubr.f32.mxu0 0.0
    %1206 = vmatmul.mubr.f32.gmra.mxu0 %v1014
    %v1207 = vpop.f32.mrf.mxu0
    %v1208 = vadd.f32 %v963, %v1207
    %v1209 = vpop.f32.mrf.mxu0
    %1210 = vmatprep.mubr.f32.mxu0 0.0
    %1211 = vmatmul.mubr.f32.gmra.mxu0 %v1017
    %v1212 = vpop.f32.mrf.mxu0
    %v1213 = vadd.f32 %v963, %v1212
    %v1214 = vpop.f32.mrf.mxu0
    %1215 = vmatprep.mubr.f32.mxu0 0.0
    %1216 = vmatmul.mubr.f32.gmra.mxu0 %v1020
    %v1217 = vpop.f32.mrf.mxu0
    %v1218 = vadd.f32 %v963, %v1217
    %v1219 = vpop.f32.mrf.mxu0
    %1220 = vmatprep.mubr.f32.mxu0 0.0
    %1221 = vmatmul.mubr.f32.gmra.mxu0 %v1023
    %v1222 = vpop.f32.mrf.mxu0
    %v1223 = vadd.f32 %v963, %v1222
    %v1224 = vpop.f32.mrf.mxu0
    %1225 = vmatprep.mubr.f32.mxu0 0.0
    %1226 = vmatmul.mubr.f32.gmra.mxu0 %v1026
    %v1227 = vpop.f32.mrf.mxu0
    %v1228 = vadd.f32 %v963, %v1227
    %v1229 = vpop.f32.mrf.mxu0
    %1230 = vmatprep.mubr.f32.mxu0 0.0
    %1231 = vmatmul.mubr.f32.gmra.mxu0 %v1029
    %v1232 = vpop.f32.mrf.mxu0
    %v1233 = vadd.f32 %v963, %v1232
    %v1234 = vpop.f32.mrf.mxu0
    %1235 = vmatprep.mubr.f32.mxu0 0.0
    %1236 = vmatmul.mubr.f32.gmra.mxu0 %v1032
    %v1237 = vpop.f32.mrf.mxu0
    %v1238 = vadd.f32 %v963, %v1237
    %v1239 = vpop.f32.mrf.mxu0
    %1240 = vmatprep.mubr.f32.mxu0 0.0
    %1241 = vmatmul.mubr.f32.gmra.mxu0 %v1035
    %v1242 = vpop.f32.mrf.mxu0
    %v1243 = vadd.f32 %v963, %v1242
    %v1244 = vpop.f32.mrf.mxu0
    %1245 = vmatprep.mubr.f32.mxu0 0.0
    %1246 = vmatmul.mubr.f32.gmra.mxu0 %v1038
    %v1247 = vpop.f32.mrf.mxu0
    %v1248 = vadd.f32 %v963, %v1247
    %v1249 = vpop.f32.mrf.mxu0
    %1250 = vmatprep.mubr.f32.mxu0 0.0
    %1251 = vmatmul.mubr.f32.gmra.mxu0 %v1041
    %v1252 = vpop.f32.mrf.mxu0
    %v1253 = vadd.f32 %v963, %v1252
    %v1254 = vpop.f32.mrf.mxu0
    %1255 = vmatprep.mubr.f32.mxu0 0.0
    %1256 = vmatmul.mubr.f32.gmra.mxu0 %v1044
    %v1257 = vpop.f32.mrf.mxu0
    %v1258 = vadd.f32 %v963, %v1257
    %v1259 = vpop.f32.mrf.mxu0
    %1260 = vmatprep.mubr.f32.mxu0 0.0
    %1261 = vmatmul.mubr.f32.gmra.mxu0 %v1047
    %v1262 = vpop.f32.mrf.mxu0
    %v1263 = vadd.f32 %v963, %v1262
    %v1264 = vpop.f32.mrf.mxu0
    %1265 = vmatprep.mubr.f32.mxu0 0.0
    %1266 = vmatmul.mubr.f32.gmra.mxu0 %v1050
    %v1267 = vpop.f32.mrf.mxu0
    %v1268 = vadd.f32 %v963, %v1267
    %v1269 = vpop.f32.mrf.mxu0
    %1270 = vmatprep.mubr.f32.mxu0 0.0
    %1271 = vmatmul.mubr.f32.gmra.mxu0 %v1053
    %v1272 = vpop.f32.mrf.mxu0
    %v1273 = vadd.f32 %v963, %v1272
    %v1274 = vpop.f32.mrf.mxu0
    %1275 = vmatprep.mubr.f32.mxu0 0.0
    %1276 = vmatmul.mubr.f32.gmra.mxu0 %v1056
    %v1277 = vpop.f32.mrf.mxu0
    %v1278 = vadd.f32 %v963, %v1277
    %v1279 = vpop.f32.mrf.mxu0
    %1280 = vmatprep.mubr.f32.mxu0 0.0
    %1281 = vmatmul.mubr.f32.gmra.mxu0 %v1059
    %v1282 = vpop.f32.mrf.mxu0
    %v1283 = vadd.f32 %v963, %v1282
    %v1284 = vpop.f32.mrf.mxu0
    %1285 = vdwg.mxu0
    %v1286 = vmax.f32 %v1128, 0.0
    %v1287 = vmax.f32 %v1133, 0.0
    %v1288 = vmax.f32 %v1138, 0.0
    %v1289 = vmax.f32 %v1143, 0.0
    %v1290 = vmax.f32 %v1148, 0.0
    %v1291 = vmax.f32 %v1153, 0.0
    %v1292 = vmax.f32 %v1158, 0.0
    %v1293 = vmax.f32 %v1163, 0.0
    %v1294 = vmax.f32 %v1168, 0.0
    %v1295 = vmax.f32 %v1173, 0.0
    %v1296 = vmax.f32 %v1178, 0.0
    %v1297 = vmax.f32 %v1183, 0.0
    %v1298 = vmax.f32 %v1188, 0.0
    %v1299 = vmax.f32 %v1193, 0.0
    %v1300 = vmax.f32 %v1198, 0.0
    %v1301 = vmax.f32 %v1203, 0.0
    %v1302 = vmax.f32 %v1208, 0.0
    %v1303 = vmax.f32 %v1213, 0.0
    %v1304 = vmax.f32 %v1218, 0.0
    %v1305 = vmax.f32 %v1223, 0.0
    %v1306 = vmax.f32 %v1228, 0.0
    %v1307 = vmax.f32 %v1233, 0.0
    %v1308 = vmax.f32 %v1238, 0.0
    %v1309 = vmax.f32 %v1243, 0.0
    %v1310 = vmax.f32 %v1248, 0.0
    %v1311 = vmax.f32 %v1253, 0.0
    %v1312 = vmax.f32 %v1258, 0.0
    %v1313 = vmax.f32 %v1263, 0.0
    %v1314 = vmax.f32 %v1268, 0.0
    %v1315 = vmax.f32 %v1273, 0.0
    %v1316 = vmax.f32 %v1278, 0.0
    %v1317 = vmax.f32 %v1283, 0.0
    %v1318 = vadd.f32 %v1286, %v461
    %v1319 = vadd.f32 %v1287, %v466
    %v1320 = vadd.f32 %v1288, %v471
    %v1321 = vadd.f32 %v1289, %v476
    %v1322 = vadd.f32 %v1290, %v481
    %v1323 = vadd.f32 %v1291, %v486
    %v1324 = vadd.f32 %v1292, %v491
    %v1325 = vadd.f32 %v1293, %v496
    %v1326 = vadd.f32 %v1294, %v501
    %v1327 = vadd.f32 %v1295, %v506
    %v1328 = vadd.f32 %v1296, %v511
    %v1329 = vadd.f32 %v1297, %v516
    %v1330 = vadd.f32 %v1298, %v521
    %v1331 = vadd.f32 %v1299, %v526
    %v1332 = vadd.f32 %v1300, %v531
    %v1333 = vadd.f32 %v1301, %v536
    %v1334 = vadd.f32 %v1302, %v541
    %v1335 = vadd.f32 %v1303, %v546
    %v1336 = vadd.f32 %v1304, %v551
    %v1337 = vadd.f32 %v1305, %v556
    %v1338 = vadd.f32 %v1306, %v561
    %v1339 = vadd.f32 %v1307, %v566
    %v1340 = vadd.f32 %v1308, %v571
    %v1341 = vadd.f32 %v1309, %v576
    %v1342 = vadd.f32 %v1310, %v581
    %v1343 = vadd.f32 %v1311, %v586
    %v1344 = vadd.f32 %v1312, %v591
    %v1345 = vadd.f32 %v1313, %v596
    %v1346 = vadd.f32 %v1314, %v601
    %v1347 = vadd.f32 %v1315, %v606
    %v1348 = vadd.f32 %v1316, %v611
    %v1349 = vadd.f32 %v1317, %v616
    %v1350 = vld [vmem:[%s8] sm:$0xff]
    %v1351 = vld [vmem:[%s8 + $0x8] sm:$0xff]
    %v1352 = vld [vmem:[%s8 + $0x10] sm:$0xff]
    %v1353 = vld [vmem:[%s8 + $0x18] sm:$0xff]
    %v1354 = vld [vmem:[#allocation10] sm:$0x1]
    %v1356 = vlaneseq
    %v1357 = vshrl.u32 %v1356, 7
    %v1358 = vsub.s32 0, %v1357
    %v1359 = vrot.slane %v1354, %v1358
    %vm1361 = vcmask 261120
    %v1363 = vsel %vm1361, %v1318, 0
    %v1366 = vsel %vm1361, %v1319, 0
    %v1369 = vsel %vm1361, %v1320, 0
    %v1372 = vsel %vm1361, %v1321, 0
    %v1375 = vsel %vm1361, %v1322, 0
    %v1378 = vsel %vm1361, %v1323, 0
    %v1381 = vsel %vm1361, %v1324, 0
    %v1384 = vsel %vm1361, %v1325, 0
    %v1387 = vsel %vm1361, %v1326, 0
    %v1390 = vsel %vm1361, %v1327, 0
    %v1393 = vsel %vm1361, %v1328, 0
    %v1396 = vsel %vm1361, %v1329, 0
    %v1399 = vsel %vm1361, %v1330, 0
    %v1402 = vsel %vm1361, %v1331, 0
    %v1405 = vsel %vm1361, %v1332, 0
    %v1408 = vsel %vm1361, %v1333, 0
    %v1411 = vsel %vm1361, %v1334, 0
    %v1414 = vsel %vm1361, %v1335, 0
    %v1417 = vsel %vm1361, %v1336, 0
    %v1420 = vsel %vm1361, %v1337, 0
    %v1423 = vsel %vm1361, %v1338, 0
    %v1426 = vsel %vm1361, %v1339, 0
    %v1429 = vsel %vm1361, %v1340, 0
    %v1432 = vsel %vm1361, %v1341, 0
    %v1435 = vsel %vm1361, %v1342, 0
    %v1438 = vsel %vm1361, %v1343, 0
    %v1441 = vsel %vm1361, %v1344, 0
    %v1444 = vsel %vm1361, %v1345, 0
    %v1447 = vsel %vm1361, %v1346, 0
    %v1450 = vsel %vm1361, %v1347, 0
    %v1453 = vsel %vm1361, %v1348, 0
    %v1456 = vsel %vm1361, %v1349, 0
    %1458 = vmatprep.subr.mxu0 0.0
    %1459 = vmatpush1.msra.mxu0 0.0
    %1460 = vmatprep.subr.mxu0 0.0
    %1461 = vmatpush1.msra.mxu0 0.0
    %1462 = vmatprep.subr.mxu0 0.0
    %1463 = vmatpush1.msra.mxu0 0.0
    %1464 = vmatprep.subr.mxu0 0.0
    %1465 = vmatpush1.msra.mxu0 0.0
    %1466 = vmatprep.subr.mxu0 0.0
    %1467 = vmatpush1.msra.mxu0 0.0
    %1468 = vmatprep.subr.mxu0 0.0
    %1469 = vmatpush1.msra.mxu0 0.0
    %1470 = vmatprep.subr.mxu0 0.0
    %1471 = vmatpush1.msra.mxu0 0.0
    %1472 = vmatprep.subr.mxu0 0.0
    %1473 = vmatpush1.msra.mxu0 0.0
    %1474 = vmatprep.subr.mxu0 0.0
    %1475 = vmatpush1.msra.mxu0 0.0
    %1476 = vmatprep.subr.mxu0 0.0
    %1477 = vmatpush1.msra.mxu0 0.0
    %1478 = vmatprep.subr.mxu0 0.0
    %1479 = vmatpush1.msra.mxu0 0.0
    %1480 = vmatprep.subr.mxu0 0.0
    %1481 = vmatpush1.msra.mxu0 0.0
    %1482 = vmatprep.subr.mxu0 0.0
    %1483 = vmatpush1.msra.mxu0 %v1353
    %1484 = vmatprep.subr.mxu0 0.0
    %1485 = vmatpush1.msra.mxu0 %v1352
    %1486 = vmatprep.subr.mxu0 0.0
    %1487 = vmatpush1.msra.mxu0 %v1351
    %1488 = vmatprep.subr.mxu0 0.0
    %1489 = vmatpush1.msra.mxu0 %v1350
    %1490 = vmatprep.subr.mxu0 0.0
    %1491 = vmatpush2.msra.mxu0 0.0
    %1492 = vmatprep.subr.mxu0 0.0
    %1493 = vmatpush2.msra.mxu0 0.0
    %1494 = vmatprep.subr.mxu0 0.0
    %1495 = vmatpush2.msra.mxu0 0.0
    %1496 = vmatprep.subr.mxu0 0.0
    %1497 = vmatpush2.msra.mxu0 0.0
    %1498 = vmatprep.subr.mxu0 0.0
    %1499 = vmatpush2.msra.mxu0 0.0
    %1500 = vmatprep.subr.mxu0 0.0
    %1501 = vmatpush2.msra.mxu0 0.0
    %1502 = vmatprep.subr.mxu0 0.0
    %1503 = vmatpush2.msra.mxu0 0.0
    %1504 = vmatprep.subr.mxu0 0.0
    %1505 = vmatpush2.msra.mxu0 0.0
    %1506 = vmatprep.subr.mxu0 0.0
    %1507 = vmatpush2.msra.mxu0 0.0
    %1508 = vmatprep.subr.mxu0 0.0
    %1509 = vmatpush2.msra.mxu0 0.0
    %1510 = vmatprep.subr.mxu0 0.0
    %1511 = vmatpush2.msra.mxu0 0.0
    %1512 = vmatprep.subr.mxu0 0.0
    %1513 = vmatpush2.msra.mxu0 0.0
    %1514 = vmatprep.subr.mxu0 0.0
    %1515 = vmatpush2.msra.mxu0 0.0
    %1516 = vmatprep.subr.mxu0 0.0
    %1517 = vmatpush2.msra.mxu0 0.0
    %1518 = vmatprep.subr.mxu0 0.0
    %1519 = vmatpush2.msra.mxu0 0.0
    %1520 = vmatprep.subr.mxu0 0.0
    %1521 = vmatpush2.msra.mxu0 0.0
    %1522 = vmatprep.mubr.f32.mxu0 0.0
    %1523 = vmatmul.mubr.f32.gmra.mxu0 %v1363
    %v1524 = vpop.f32.mrf.mxu0
    %v1525 = vadd.f32 %v1359, %v1524
    %v1526 = vpop.f32.mrf.mxu0
    %1527 = vmatprep.mubr.f32.mxu0 0.0
    %1528 = vmatmul.mubr.f32.gmra.mxu0 %v1366
    %v1529 = vpop.f32.mrf.mxu0
    %v1530 = vadd.f32 %v1359, %v1529
    %v1531 = vpop.f32.mrf.mxu0
    %1532 = vmatprep.mubr.f32.mxu0 0.0
    %1533 = vmatmul.mubr.f32.gmra.mxu0 %v1369
    %v1534 = vpop.f32.mrf.mxu0
    %v1535 = vadd.f32 %v1359, %v1534
    %v1536 = vpop.f32.mrf.mxu0
    %1537 = vmatprep.mubr.f32.mxu0 0.0
    %1538 = vmatmul.mubr.f32.gmra.mxu0 %v1372
    %v1539 = vpop.f32.mrf.mxu0
    %v1540 = vadd.f32 %v1359, %v1539
    %v1541 = vpop.f32.mrf.mxu0
    %1542 = vmatprep.mubr.f32.mxu0 0.0
    %1543 = vmatmul.mubr.f32.gmra.mxu0 %v1375
    %v1544 = vpop.f32.mrf.mxu0
    %v1545 = vadd.f32 %v1359, %v1544
    %v1546 = vpop.f32.mrf.mxu0
    %1547 = vmatprep.mubr.f32.mxu0 0.0
    %1548 = vmatmul.mubr.f32.gmra.mxu0 %v1378
    %v1549 = vpop.f32.mrf.mxu0
    %v1550 = vadd.f32 %v1359, %v1549
    %v1551 = vpop.f32.mrf.mxu0
    %1552 = vmatprep.mubr.f32.mxu0 0.0
    %1553 = vmatmul.mubr.f32.gmra.mxu0 %v1381
    %v1554 = vpop.f32.mrf.mxu0
    %v1555 = vadd.f32 %v1359, %v1554
    %v1556 = vpop.f32.mrf.mxu0
    %1557 = vmatprep.mubr.f32.mxu0 0.0
    %1558 = vmatmul.mubr.f32.gmra.mxu0 %v1384
    %v1559 = vpop.f32.mrf.mxu0
    %v1560 = vadd.f32 %v1359, %v1559
    %v1561 = vpop.f32.mrf.mxu0
    %1562 = vmatprep.mubr.f32.mxu0 0.0
    %1563 = vmatmul.mubr.f32.gmra.mxu0 %v1387
    %v1564 = vpop.f32.mrf.mxu0
    %v1565 = vadd.f32 %v1359, %v1564
    %v1566 = vpop.f32.mrf.mxu0
    %1567 = vmatprep.mubr.f32.mxu0 0.0
    %1568 = vmatmul.mubr.f32.gmra.mxu0 %v1390
    %v1569 = vpop.f32.mrf.mxu0
    %v1570 = vadd.f32 %v1359, %v1569
    %v1571 = vpop.f32.mrf.mxu0
    %1572 = vmatprep.mubr.f32.mxu0 0.0
    %1573 = vmatmul.mubr.f32.gmra.mxu0 %v1393
    %v1574 = vpop.f32.mrf.mxu0
    %v1575 = vadd.f32 %v1359, %v1574
    %v1576 = vpop.f32.mrf.mxu0
    %1577 = vmatprep.mubr.f32.mxu0 0.0
    %1578 = vmatmul.mubr.f32.gmra.mxu0 %v1396
    %v1579 = vpop.f32.mrf.mxu0
    %v1580 = vadd.f32 %v1359, %v1579
    %v1581 = vpop.f32.mrf.mxu0
    %1582 = vmatprep.mubr.f32.mxu0 0.0
    %1583 = vmatmul.mubr.f32.gmra.mxu0 %v1399
    %v1584 = vpop.f32.mrf.mxu0
    %v1585 = vadd.f32 %v1359, %v1584
    %v1586 = vpop.f32.mrf.mxu0
    %1587 = vmatprep.mubr.f32.mxu0 0.0
    %1588 = vmatmul.mubr.f32.gmra.mxu0 %v1402
    %v1589 = vpop.f32.mrf.mxu0
    %v1590 = vadd.f32 %v1359, %v1589
    %v1591 = vpop.f32.mrf.mxu0
    %1592 = vmatprep.mubr.f32.mxu0 0.0
    %1593 = vmatmul.mubr.f32.gmra.mxu0 %v1405
    %v1594 = vpop.f32.mrf.mxu0
    %v1595 = vadd.f32 %v1359, %v1594
    %v1596 = vpop.f32.mrf.mxu0
    %1597 = vmatprep.mubr.f32.mxu0 0.0
    %1598 = vmatmul.mubr.f32.gmra.mxu0 %v1408
    %v1599 = vpop.f32.mrf.mxu0
    %v1600 = vadd.f32 %v1359, %v1599
    %v1601 = vpop.f32.mrf.mxu0
    %1602 = vmatprep.mubr.f32.mxu0 0.0
    %1603 = vmatmul.mubr.f32.gmra.mxu0 %v1411
    %v1604 = vpop.f32.mrf.mxu0
    %v1605 = vadd.f32 %v1359, %v1604
    %v1606 = vpop.f32.mrf.mxu0
    %1607 = vmatprep.mubr.f32.mxu0 0.0
    %1608 = vmatmul.mubr.f32.gmra.mxu0 %v1414
    %v1609 = vpop.f32.mrf.mxu0
    %v1610 = vadd.f32 %v1359, %v1609
    %v1611 = vpop.f32.mrf.mxu0
    %1612 = vmatprep.mubr.f32.mxu0 0.0
    %1613 = vmatmul.mubr.f32.gmra.mxu0 %v1417
    %v1614 = vpop.f32.mrf.mxu0
    %v1615 = vadd.f32 %v1359, %v1614
    %v1616 = vpop.f32.mrf.mxu0
    %1617 = vmatprep.mubr.f32.mxu0 0.0
    %1618 = vmatmul.mubr.f32.gmra.mxu0 %v1420
    %v1619 = vpop.f32.mrf.mxu0
    %v1620 = vadd.f32 %v1359, %v1619
    %v1621 = vpop.f32.mrf.mxu0
    %1622 = vmatprep.mubr.f32.mxu0 0.0
    %1623 = vmatmul.mubr.f32.gmra.mxu0 %v1423
    %v1624 = vpop.f32.mrf.mxu0
    %v1625 = vadd.f32 %v1359, %v1624
    %v1626 = vpop.f32.mrf.mxu0
    %1627 = vmatprep.mubr.f32.mxu0 0.0
    %1628 = vmatmul.mubr.f32.gmra.mxu0 %v1426
    %v1629 = vpop.f32.mrf.mxu0
    %v1630 = vadd.f32 %v1359, %v1629
    %v1631 = vpop.f32.mrf.mxu0
    %1632 = vmatprep.mubr.f32.mxu0 0.0
    %1633 = vmatmul.mubr.f32.gmra.mxu0 %v1429
    %v1634 = vpop.f32.mrf.mxu0
    %v1635 = vadd.f32 %v1359, %v1634
    %v1636 = vpop.f32.mrf.mxu0
    %1637 = vmatprep.mubr.f32.mxu0 0.0
    %1638 = vmatmul.mubr.f32.gmra.mxu0 %v1432
    %v1639 = vpop.f32.mrf.mxu0
    %v1640 = vadd.f32 %v1359, %v1639
    %v1641 = vpop.f32.mrf.mxu0
    %1642 = vmatprep.mubr.f32.mxu0 0.0
    %1643 = vmatmul.mubr.f32.gmra.mxu0 %v1435
    %v1644 = vpop.f32.mrf.mxu0
    %v1645 = vadd.f32 %v1359, %v1644
    %v1646 = vpop.f32.mrf.mxu0
    %1647 = vmatprep.mubr.f32.mxu0 0.0
    %1648 = vmatmul.mubr.f32.gmra.mxu0 %v1438
    %v1649 = vpop.f32.mrf.mxu0
    %v1650 = vadd.f32 %v1359, %v1649
    %v1651 = vpop.f32.mrf.mxu0
    %1652 = vmatprep.mubr.f32.mxu0 0.0
    %1653 = vmatmul.mubr.f32.gmra.mxu0 %v1441
    %v1654 = vpop.f32.mrf.mxu0
    %v1655 = vadd.f32 %v1359, %v1654
    %v1656 = vpop.f32.mrf.mxu0
    %1657 = vmatprep.mubr.f32.mxu0 0.0
    %1658 = vmatmul.mubr.f32.gmra.mxu0 %v1444
    %v1659 = vpop.f32.mrf.mxu0
    %v1660 = vadd.f32 %v1359, %v1659
    %v1661 = vpop.f32.mrf.mxu0
    %1662 = vmatprep.mubr.f32.mxu0 0.0
    %1663 = vmatmul.mubr.f32.gmra.mxu0 %v1447
    %v1664 = vpop.f32.mrf.mxu0
    %v1665 = vadd.f32 %v1359, %v1664
    %v1666 = vpop.f32.mrf.mxu0
    %1667 = vmatprep.mubr.f32.mxu0 0.0
    %1668 = vmatmul.mubr.f32.gmra.mxu0 %v1450
    %v1669 = vpop.f32.mrf.mxu0
    %v1670 = vadd.f32 %v1359, %v1669
    %v1671 = vpop.f32.mrf.mxu0
    %1672 = vmatprep.mubr.f32.mxu0 0.0
    %1673 = vmatmul.mubr.f32.gmra.mxu0 %v1453
    %v1674 = vpop.f32.mrf.mxu0
    %v1675 = vadd.f32 %v1359, %v1674
    %v1676 = vpop.f32.mrf.mxu0
    %1677 = vmatprep.mubr.f32.mxu0 0.0
    %1678 = vmatmul.mubr.f32.gmra.mxu0 %v1456
    %v1679 = vpop.f32.mrf.mxu0
    %v1680 = vadd.f32 %v1359, %v1679
    %v1681 = vpop.f32.mrf.mxu0
    %1682 = vdwg.mxu0
    %v1683 = vpack.c.bf16 %v1319, %v1318
    %v1684 = vpack.c.bf16 %v1321, %v1320
    %v1685 = vpack.c.bf16 %v1323, %v1322
    %v1686 = vpack.c.bf16 %v1325, %v1324
    %v1687 = vpack.c.bf16 %v1327, %v1326
    %v1688 = vpack.c.bf16 %v1329, %v1328
    %v1689 = vpack.c.bf16 %v1331, %v1330
    %v1690 = vpack.c.bf16 %v1333, %v1332
    %v1691 = vpack.c.bf16 %v1335, %v1334
    %v1692 = vpack.c.bf16 %v1337, %v1336
    %v1693 = vpack.c.bf16 %v1339, %v1338
    %v1694 = vpack.c.bf16 %v1341, %v1340
    %v1695 = vpack.c.bf16 %v1343, %v1342
    %v1696 = vpack.c.bf16 %v1345, %v1344
    %v1697 = vpack.c.bf16 %v1347, %v1346
    %v1698 = vpack.c.bf16 %v1349, %v1348
    %1699 = vmatprep.subr.bf16.mxu0 0
    %1700 = vmatpush1.bf16.msra.mxu0 %v1690
    %1701 = vmatprep.subr.bf16.mxu0 0
    %1702 = vmatpush1.bf16.msra.mxu0 %v1689
    %1703 = vmatprep.subr.bf16.mxu0 0
    %1704 = vmatpush1.bf16.msra.mxu0 %v1688
    %1705 = vmatprep.subr.bf16.mxu0 0
    %1706 = vmatpush1.bf16.msra.mxu0 %v1687
    %1707 = vmatprep.subr.bf16.mxu0 0
    %1708 = vmatpush1.bf16.msra.mxu0 %v1686
    %1709 = vmatprep.subr.bf16.mxu0 0
    %1710 = vmatpush1.bf16.msra.mxu0 %v1685
    %1711 = vmatprep.subr.bf16.mxu0 0
    %1712 = vmatpush1.bf16.msra.mxu0 %v1684
    %1713 = vmatprep.subr.bf16.mxu0 0
    %1714 = vmatpush1.bf16.msra.mxu0 %v1683
    %1715 = vmatprep.subr.bf16.mxu0 0
    %1716 = vmatpush2.bf16.msra.mxu0 %v1698
    %1717 = vmatprep.subr.bf16.mxu0 0
    %1718 = vmatpush2.bf16.msra.mxu0 %v1697
    %1719 = vmatprep.subr.bf16.mxu0 0
    %1720 = vmatpush2.bf16.msra.mxu0 %v1696
    %1721 = vmatprep.subr.bf16.mxu0 0
    %1722 = vmatpush2.bf16.msra.mxu0 %v1695
    %1723 = vmatprep.subr.bf16.mxu0 0
    %1724 = vmatpush2.bf16.msra.mxu0 %v1694
    %1725 = vmatprep.subr.bf16.mxu0 0
    %1726 = vmatpush2.bf16.msra.mxu0 %v1693
    %1727 = vmatprep.subr.bf16.mxu0 0
    %1728 = vmatpush2.bf16.msra.mxu0 %v1692
    %1729 = vmatprep.subr.bf16.mxu0 0
    %1730 = vmatpush2.bf16.msra.mxu0 %v1691
    %1731 = vmatprep.mubr.bf16.mxu0 %v732
    %1732 = vmatmul.mubr.bf16.gmra.mxu0 %v731
    %v1733 = vpop.f32.mrf.mxu0
    %v1734 = vadd.f32 0.0, %v1733
    %v1735 = vpop.f32.mrf.mxu0
    %v1736 = vpop.f32.mrf.mxu0
    %v1737 = vadd.f32 0.0, %v1736
    %v1738 = vpop.f32.mrf.mxu0
    %1739 = vmatprep.mubr.bf16.mxu0 %v734
    %1740 = vmatmul.mubr.bf16.gmra.mxu0 %v733
    %v1741 = vpop.f32.mrf.mxu0
    %v1742 = vadd.f32 0.0, %v1741
    %v1743 = vpop.f32.mrf.mxu0
    %v1744 = vpop.f32.mrf.mxu0
    %v1745 = vadd.f32 0.0, %v1744
    %v1746 = vpop.f32.mrf.mxu0
    %1747 = vmatprep.mubr.bf16.mxu0 %v736
    %1748 = vmatmul.mubr.bf16.gmra.mxu0 %v735
    %v1749 = vpop.f32.mrf.mxu0
    %v1750 = vadd.f32 0.0, %v1749
    %v1751 = vpop.f32.mrf.mxu0
    %v1752 = vpop.f32.mrf.mxu0
    %v1753 = vadd.f32 0.0, %v1752
    %v1754 = vpop.f32.mrf.mxu0
    %1755 = vmatprep.mubr.bf16.mxu0 %v738
    %1756 = vmatmul.mubr.bf16.gmra.mxu0 %v737
    %v1757 = vpop.f32.mrf.mxu0
    %v1758 = vadd.f32 0.0, %v1757
    %v1759 = vpop.f32.mrf.mxu0
    %v1760 = vpop.f32.mrf.mxu0
    %v1761 = vadd.f32 0.0, %v1760
    %v1762 = vpop.f32.mrf.mxu0
    %1763 = vmatprep.mubr.bf16.mxu0 %v740
    %1764 = vmatmul.mubr.bf16.gmra.mxu0 %v739
    %v1765 = vpop.f32.mrf.mxu0
    %v1766 = vadd.f32 0.0, %v1765
    %v1767 = vpop.f32.mrf.mxu0
    %v1768 = vpop.f32.mrf.mxu0
    %v1769 = vadd.f32 0.0, %v1768
    %v1770 = vpop.f32.mrf.mxu0
    %1771 = vmatprep.mubr.bf16.mxu0 %v742
    %1772 = vmatmul.mubr.bf16.gmra.mxu0 %v741
    %v1773 = vpop.f32.mrf.mxu0
    %v1774 = vadd.f32 0.0, %v1773
    %v1775 = vpop.f32.mrf.mxu0
    %v1776 = vpop.f32.mrf.mxu0
    %v1777 = vadd.f32 0.0, %v1776
    %v1778 = vpop.f32.mrf.mxu0
    %1779 = vmatprep.mubr.bf16.mxu0 %v744
    %1780 = vmatmul.mubr.bf16.gmra.mxu0 %v743
    %v1781 = vpop.f32.mrf.mxu0
    %v1782 = vadd.f32 0.0, %v1781
    %v1783 = vpop.f32.mrf.mxu0
    %v1784 = vpop.f32.mrf.mxu0
    %v1785 = vadd.f32 0.0, %v1784
    %v1786 = vpop.f32.mrf.mxu0
    %1787 = vmatprep.mubr.bf16.mxu0 %v746
    %1788 = vmatmul.mubr.bf16.gmra.mxu0 %v745
    %v1789 = vpop.f32.mrf.mxu0
    %v1790 = vadd.f32 0.0, %v1789
    %v1791 = vpop.f32.mrf.mxu0
    %v1792 = vpop.f32.mrf.mxu0
    %v1793 = vadd.f32 0.0, %v1792
    %v1794 = vpop.f32.mrf.mxu0
    %1795 = vmatprep.mubr.bf16.mxu0 %v748
    %1796 = vmatmul.mubr.bf16.gmra.mxu0 %v747
    %v1797 = vpop.f32.mrf.mxu0
    %v1798 = vadd.f32 0.0, %v1797
    %v1799 = vpop.f32.mrf.mxu0
    %v1800 = vpop.f32.mrf.mxu0
    %v1801 = vadd.f32 0.0, %v1800
    %v1802 = vpop.f32.mrf.mxu0
    %1803 = vmatprep.mubr.bf16.mxu0 %v750
    %1804 = vmatmul.mubr.bf16.gmra.mxu0 %v749
    %v1805 = vpop.f32.mrf.mxu0
    %v1806 = vadd.f32 0.0, %v1805
    %v1807 = vpop.f32.mrf.mxu0
    %v1808 = vpop.f32.mrf.mxu0
    %v1809 = vadd.f32 0.0, %v1808
    %v1810 = vpop.f32.mrf.mxu0
    %1811 = vmatprep.mubr.bf16.mxu0 %v752
    %1812 = vmatmul.mubr.bf16.gmra.mxu0 %v751
    %v1813 = vpop.f32.mrf.mxu0
    %v1814 = vadd.f32 0.0, %v1813
    %v1815 = vpop.f32.mrf.mxu0
    %v1816 = vpop.f32.mrf.mxu0
    %v1817 = vadd.f32 0.0, %v1816
    %v1818 = vpop.f32.mrf.mxu0
    %1819 = vmatprep.mubr.bf16.mxu0 %v754
    %1820 = vmatmul.mubr.bf16.gmra.mxu0 %v753
    %v1821 = vpop.f32.mrf.mxu0
    %v1822 = vadd.f32 0.0, %v1821
    %v1823 = vpop.f32.mrf.mxu0
    %v1824 = vpop.f32.mrf.mxu0
    %v1825 = vadd.f32 0.0, %v1824
    %v1826 = vpop.f32.mrf.mxu0
    %1827 = vmatprep.mubr.bf16.mxu0 %v756
    %1828 = vmatmul.mubr.bf16.gmra.mxu0 %v755
    %v1829 = vpop.f32.mrf.mxu0
    %v1830 = vadd.f32 0.0, %v1829
    %v1831 = vpop.f32.mrf.mxu0
    %v1832 = vpop.f32.mrf.mxu0
    %v1833 = vadd.f32 0.0, %v1832
    %v1834 = vpop.f32.mrf.mxu0
    %1835 = vmatprep.mubr.bf16.mxu0 %v758
    %1836 = vmatmul.mubr.bf16.gmra.mxu0 %v757
    %v1837 = vpop.f32.mrf.mxu0
    %v1838 = vadd.f32 0.0, %v1837
    %v1839 = vpop.f32.mrf.mxu0
    %v1840 = vpop.f32.mrf.mxu0
    %v1841 = vadd.f32 0.0, %v1840
    %v1842 = vpop.f32.mrf.mxu0
    %1843 = vmatprep.mubr.bf16.mxu0 %v760
    %1844 = vmatmul.mubr.bf16.gmra.mxu0 %v759
    %v1845 = vpop.f32.mrf.mxu0
    %v1846 = vadd.f32 0.0, %v1845
    %v1847 = vpop.f32.mrf.mxu0
    %v1848 = vpop.f32.mrf.mxu0
    %v1849 = vadd.f32 0.0, %v1848
    %v1850 = vpop.f32.mrf.mxu0
    %1851 = vmatprep.mubr.bf16.mxu0 %v762
    %1852 = vmatmul.mubr.bf16.gmra.mxu0 %v761
    %v1853 = vpop.f32.mrf.mxu0
    %v1854 = vadd.f32 0.0, %v1853
    %v1855 = vpop.f32.mrf.mxu0
    %v1856 = vpop.f32.mrf.mxu0
    %v1857 = vadd.f32 0.0, %v1856
    %v1858 = vpop.f32.mrf.mxu0
    %1859 = vdwg.mxu0
    %v1860 = vld [vmem:[%s6] sm:$0xff]
    %v1861 = vld [vmem:[%s6 + $0x8] sm:$0xff]
    %v1862 = vld [vmem:[%s6 + $0x10] sm:$0xff]
    %v1863 = vld [vmem:[%s6 + $0x18] sm:$0xff]
    %v1864 = vld [vmem:[#allocation9] sm:$0x1]
    %v1866 = vlaneseq
    %v1867 = vshrl.u32 %v1866, 7
    %v1868 = vsub.s32 0, %v1867
    %v1869 = vrot.slane %v1864, %v1868
    %v1872 = vsel %vm1361, %v1734, 0
    %v1875 = vsel %vm1361, %v1737, 0
    %v1878 = vsel %vm1361, %v1742, 0
    %v1881 = vsel %vm1361, %v1745, 0
    %v1884 = vsel %vm1361, %v1750, 0
    %v1887 = vsel %vm1361, %v1753, 0
    %v1890 = vsel %vm1361, %v1758, 0
    %v1893 = vsel %vm1361, %v1761, 0
    %v1896 = vsel %vm1361, %v1766, 0
    %v1899 = vsel %vm1361, %v1769, 0
    %v1902 = vsel %vm1361, %v1774, 0
    %v1905 = vsel %vm1361, %v1777, 0
    %v1908 = vsel %vm1361, %v1782, 0
    %v1911 = vsel %vm1361, %v1785, 0
    %v1914 = vsel %vm1361, %v1790, 0
    %v1917 = vsel %vm1361, %v1793, 0
    %v1920 = vsel %vm1361, %v1798, 0
    %v1923 = vsel %vm1361, %v1801, 0
    %v1926 = vsel %vm1361, %v1806, 0
    %v1929 = vsel %vm1361, %v1809, 0
    %v1932 = vsel %vm1361, %v1814, 0
    %v1935 = vsel %vm1361, %v1817, 0
    %v1938 = vsel %vm1361, %v1822, 0
    %v1941 = vsel %vm1361, %v1825, 0
    %v1944 = vsel %vm1361, %v1830, 0
    %v1947 = vsel %vm1361, %v1833, 0
    %v1950 = vsel %vm1361, %v1838, 0
    %v1953 = vsel %vm1361, %v1841, 0
    %v1956 = vsel %vm1361, %v1846, 0
    %v1959 = vsel %vm1361, %v1849, 0
    %v1962 = vsel %vm1361, %v1854, 0
    %v1965 = vsel %vm1361, %v1857, 0
    %1967 = vmatprep.subr.mxu0 0.0
    %1968 = vmatpush1.msra.mxu0 0.0
    %1969 = vmatprep.subr.mxu0 0.0
    %1970 = vmatpush1.msra.mxu0 0.0
    %1971 = vmatprep.subr.mxu0 0.0
    %1972 = vmatpush1.msra.mxu0 0.0
    %1973 = vmatprep.subr.mxu0 0.0
    %1974 = vmatpush1.msra.mxu0 0.0
    %1975 = vmatprep.subr.mxu0 0.0
    %1976 = vmatpush1.msra.mxu0 0.0
    %1977 = vmatprep.subr.mxu0 0.0
    %1978 = vmatpush1.msra.mxu0 0.0
    %1979 = vmatprep.subr.mxu0 0.0
    %1980 = vmatpush1.msra.mxu0 0.0
    %1981 = vmatprep.subr.mxu0 0.0
    %1982 = vmatpush1.msra.mxu0 0.0
    %1983 = vmatprep.subr.mxu0 0.0
    %1984 = vmatpush1.msra.mxu0 0.0
    %1985 = vmatprep.subr.mxu0 0.0
    %1986 = vmatpush1.msra.mxu0 0.0
    %1987 = vmatprep.subr.mxu0 0.0
    %1988 = vmatpush1.msra.mxu0 0.0
    %1989 = vmatprep.subr.mxu0 0.0
    %1990 = vmatpush1.msra.mxu0 0.0
    %1991 = vmatprep.subr.mxu0 0.0
    %1992 = vmatpush1.msra.mxu0 %v1863
    %1993 = vmatprep.subr.mxu0 0.0
    %1994 = vmatpush1.msra.mxu0 %v1862
    %1995 = vmatprep.subr.mxu0 0.0
    %1996 = vmatpush1.msra.mxu0 %v1861
    %1997 = vmatprep.subr.mxu0 0.0
    %1998 = vmatpush1.msra.mxu0 %v1860
    %1999 = vmatprep.subr.mxu0 0.0
    %2000 = vmatpush2.msra.mxu0 0.0
    %2001 = vmatprep.subr.mxu0 0.0
    %2002 = vmatpush2.msra.mxu0 0.0
    %2003 = vmatprep.subr.mxu0 0.0
    %2004 = vmatpush2.msra.mxu0 0.0
    %2005 = vmatprep.subr.mxu0 0.0
    %2006 = vmatpush2.msra.mxu0 0.0
    %2007 = vmatprep.subr.mxu0 0.0
    %2008 = vmatpush2.msra.mxu0 0.0
    %2009 = vmatprep.subr.mxu0 0.0
    %2010 = vmatpush2.msra.mxu0 0.0
    %2011 = vmatprep.subr.mxu0 0.0
    %2012 = vmatpush2.msra.mxu0 0.0
    %2013 = vmatprep.subr.mxu0 0.0
    %2014 = vmatpush2.msra.mxu0 0.0
    %2015 = vmatprep.subr.mxu0 0.0
    %2016 = vmatpush2.msra.mxu0 0.0
    %2017 = vmatprep.subr.mxu0 0.0
    %2018 = vmatpush2.msra.mxu0 0.0
    %2019 = vmatprep.subr.mxu0 0.0
    %2020 = vmatpush2.msra.mxu0 0.0
    %2021 = vmatprep.subr.mxu0 0.0
    %2022 = vmatpush2.msra.mxu0 0.0
    %2023 = vmatprep.subr.mxu0 0.0
    %2024 = vmatpush2.msra.mxu0 0.0
    %2025 = vmatprep.subr.mxu0 0.0
    %2026 = vmatpush2.msra.mxu0 0.0
    %2027 = vmatprep.subr.mxu0 0.0
    %2028 = vmatpush2.msra.mxu0 0.0
    %2029 = vmatprep.subr.mxu0 0.0
    %2030 = vmatpush2.msra.mxu0 0.0
    %2031 = vmatprep.mubr.f32.mxu0 0.0
    %2032 = vmatmul.mubr.f32.gmra.mxu0 %v1872
    %v2033 = vpop.f32.mrf.mxu0
    %v2034 = vadd.f32 %v1869, %v2033
    %v2035 = vpop.f32.mrf.mxu0
    %2036 = vmatprep.mubr.f32.mxu0 0.0
    %2037 = vmatmul.mubr.f32.gmra.mxu0 %v1875
    %v2038 = vpop.f32.mrf.mxu0
    %v2039 = vadd.f32 %v1869, %v2038
    %v2040 = vpop.f32.mrf.mxu0
    %2041 = vmatprep.mubr.f32.mxu0 0.0
    %2042 = vmatmul.mubr.f32.gmra.mxu0 %v1878
    %v2043 = vpop.f32.mrf.mxu0
    %v2044 = vadd.f32 %v1869, %v2043
    %v2045 = vpop.f32.mrf.mxu0
    %2046 = vmatprep.mubr.f32.mxu0 0.0
    %2047 = vmatmul.mubr.f32.gmra.mxu0 %v1881
    %v2048 = vpop.f32.mrf.mxu0
    %v2049 = vadd.f32 %v1869, %v2048
    %v2050 = vpop.f32.mrf.mxu0
    %2051 = vmatprep.mubr.f32.mxu0 0.0
    %2052 = vmatmul.mubr.f32.gmra.mxu0 %v1884
    %v2053 = vpop.f32.mrf.mxu0
    %v2054 = vadd.f32 %v1869, %v2053
    %v2055 = vpop.f32.mrf.mxu0
    %2056 = vmatprep.mubr.f32.mxu0 0.0
    %2057 = vmatmul.mubr.f32.gmra.mxu0 %v1887
    %v2058 = vpop.f32.mrf.mxu0
    %v2059 = vadd.f32 %v1869, %v2058
    %v2060 = vpop.f32.mrf.mxu0
    %2061 = vmatprep.mubr.f32.mxu0 0.0
    %2062 = vmatmul.mubr.f32.gmra.mxu0 %v1890
    %v2063 = vpop.f32.mrf.mxu0
    %v2064 = vadd.f32 %v1869, %v2063
    %v2065 = vpop.f32.mrf.mxu0
    %2066 = vmatprep.mubr.f32.mxu0 0.0
    %2067 = vmatmul.mubr.f32.gmra.mxu0 %v1893
    %v2068 = vpop.f32.mrf.mxu0
    %v2069 = vadd.f32 %v1869, %v2068
    %v2070 = vpop.f32.mrf.mxu0
    %2071 = vmatprep.mubr.f32.mxu0 0.0
    %2072 = vmatmul.mubr.f32.gmra.mxu0 %v1896
    %v2073 = vpop.f32.mrf.mxu0
    %v2074 = vadd.f32 %v1869, %v2073
    %v2075 = vpop.f32.mrf.mxu0
    %2076 = vmatprep.mubr.f32.mxu0 0.0
    %2077 = vmatmul.mubr.f32.gmra.mxu0 %v1899
    %v2078 = vpop.f32.mrf.mxu0
    %v2079 = vadd.f32 %v1869, %v2078
    %v2080 = vpop.f32.mrf.mxu0
    %2081 = vmatprep.mubr.f32.mxu0 0.0
    %2082 = vmatmul.mubr.f32.gmra.mxu0 %v1902
    %v2083 = vpop.f32.mrf.mxu0
    %v2084 = vadd.f32 %v1869, %v2083
    %v2085 = vpop.f32.mrf.mxu0
    %2086 = vmatprep.mubr.f32.mxu0 0.0
    %2087 = vmatmul.mubr.f32.gmra.mxu0 %v1905
    %v2088 = vpop.f32.mrf.mxu0
    %v2089 = vadd.f32 %v1869, %v2088
    %v2090 = vpop.f32.mrf.mxu0
    %2091 = vmatprep.mubr.f32.mxu0 0.0
    %2092 = vmatmul.mubr.f32.gmra.mxu0 %v1908
    %v2093 = vpop.f32.mrf.mxu0
    %v2094 = vadd.f32 %v1869, %v2093
    %v2095 = vpop.f32.mrf.mxu0
    %2096 = vmatprep.mubr.f32.mxu0 0.0
    %2097 = vmatmul.mubr.f32.gmra.mxu0 %v1911
    %v2098 = vpop.f32.mrf.mxu0
    %v2099 = vadd.f32 %v1869, %v2098
    %v2100 = vpop.f32.mrf.mxu0
    %2101 = vmatprep.mubr.f32.mxu0 0.0
    %2102 = vmatmul.mubr.f32.gmra.mxu0 %v1914
    %v2103 = vpop.f32.mrf.mxu0
    %v2104 = vadd.f32 %v1869, %v2103
    %v2105 = vpop.f32.mrf.mxu0
    %2106 = vmatprep.mubr.f32.mxu0 0.0
    %2107 = vmatmul.mubr.f32.gmra.mxu0 %v1917
    %v2108 = vpop.f32.mrf.mxu0
    %v2109 = vadd.f32 %v1869, %v2108
    %v2110 = vpop.f32.mrf.mxu0
    %2111 = vmatprep.mubr.f32.mxu0 0.0
    %2112 = vmatmul.mubr.f32.gmra.mxu0 %v1920
    %v2113 = vpop.f32.mrf.mxu0
    %v2114 = vadd.f32 %v1869, %v2113
    %v2115 = vpop.f32.mrf.mxu0
    %2116 = vmatprep.mubr.f32.mxu0 0.0
    %2117 = vmatmul.mubr.f32.gmra.mxu0 %v1923
    %v2118 = vpop.f32.mrf.mxu0
    %v2119 = vadd.f32 %v1869, %v2118
    %v2120 = vpop.f32.mrf.mxu0
    %2121 = vmatprep.mubr.f32.mxu0 0.0
    %2122 = vmatmul.mubr.f32.gmra.mxu0 %v1926
    %v2123 = vpop.f32.mrf.mxu0
    %v2124 = vadd.f32 %v1869, %v2123
    %v2125 = vpop.f32.mrf.mxu0
    %2126 = vmatprep.mubr.f32.mxu0 0.0
    %2127 = vmatmul.mubr.f32.gmra.mxu0 %v1929
    %v2128 = vpop.f32.mrf.mxu0
    %v2129 = vadd.f32 %v1869, %v2128
    %v2130 = vpop.f32.mrf.mxu0
    %2131 = vmatprep.mubr.f32.mxu0 0.0
    %2132 = vmatmul.mubr.f32.gmra.mxu0 %v1932
    %v2133 = vpop.f32.mrf.mxu0
    %v2134 = vadd.f32 %v1869, %v2133
    %v2135 = vpop.f32.mrf.mxu0
    %2136 = vmatprep.mubr.f32.mxu0 0.0
    %2137 = vmatmul.mubr.f32.gmra.mxu0 %v1935
    %v2138 = vpop.f32.mrf.mxu0
    %v2139 = vadd.f32 %v1869, %v2138
    %v2140 = vpop.f32.mrf.mxu0
    %2141 = vmatprep.mubr.f32.mxu0 0.0
    %2142 = vmatmul.mubr.f32.gmra.mxu0 %v1938
    %v2143 = vpop.f32.mrf.mxu0
    %v2144 = vadd.f32 %v1869, %v2143
    %v2145 = vpop.f32.mrf.mxu0
    %2146 = vmatprep.mubr.f32.mxu0 0.0
    %2147 = vmatmul.mubr.f32.gmra.mxu0 %v1941
    %v2148 = vpop.f32.mrf.mxu0
    %v2149 = vadd.f32 %v1869, %v2148
    %v2150 = vpop.f32.mrf.mxu0
    %2151 = vmatprep.mubr.f32.mxu0 0.0
    %2152 = vmatmul.mubr.f32.gmra.mxu0 %v1944
    %v2153 = vpop.f32.mrf.mxu0
    %v2154 = vadd.f32 %v1869, %v2153
    %v2155 = vpop.f32.mrf.mxu0
    %2156 = vmatprep.mubr.f32.mxu0 0.0
    %2157 = vmatmul.mubr.f32.gmra.mxu0 %v1947
    %v2158 = vpop.f32.mrf.mxu0
    %v2159 = vadd.f32 %v1869, %v2158
    %v2160 = vpop.f32.mrf.mxu0
    %2161 = vmatprep.mubr.f32.mxu0 0.0
    %2162 = vmatmul.mubr.f32.gmra.mxu0 %v1950
    %v2163 = vpop.f32.mrf.mxu0
    %v2164 = vadd.f32 %v1869, %v2163
    %v2165 = vpop.f32.mrf.mxu0
    %2166 = vmatprep.mubr.f32.mxu0 0.0
    %2167 = vmatmul.mubr.f32.gmra.mxu0 %v1953
    %v2168 = vpop.f32.mrf.mxu0
    %v2169 = vadd.f32 %v1869, %v2168
    %v2170 = vpop.f32.mrf.mxu0
    %2171 = vmatprep.mubr.f32.mxu0 0.0
    %2172 = vmatmul.mubr.f32.gmra.mxu0 %v1956
    %v2173 = vpop.f32.mrf.mxu0
    %v2174 = vadd.f32 %v1869, %v2173
    %v2175 = vpop.f32.mrf.mxu0
    %2176 = vmatprep.mubr.f32.mxu0 0.0
    %2177 = vmatmul.mubr.f32.gmra.mxu0 %v1959
    %v2178 = vpop.f32.mrf.mxu0
    %v2179 = vadd.f32 %v1869, %v2178
    %v2180 = vpop.f32.mrf.mxu0
    %2181 = vmatprep.mubr.f32.mxu0 0.0
    %2182 = vmatmul.mubr.f32.gmra.mxu0 %v1962
    %v2183 = vpop.f32.mrf.mxu0
    %v2184 = vadd.f32 %v1869, %v2183
    %v2185 = vpop.f32.mrf.mxu0
    %2186 = vmatprep.mubr.f32.mxu0 0.0
    %2187 = vmatmul.mubr.f32.gmra.mxu0 %v1965
    %v2188 = vpop.f32.mrf.mxu0
    %v2189 = vadd.f32 %v1869, %v2188
    %v2190 = vpop.f32.mrf.mxu0
    %2191 = vdwg.mxu0
    %v2192 = vmax.f32 %v2034, 0.0
    %v2193 = vmax.f32 %v2039, 0.0
    %v2194 = vmax.f32 %v2044, 0.0
    %v2195 = vmax.f32 %v2049, 0.0
    %v2196 = vmax.f32 %v2054, 0.0
    %v2197 = vmax.f32 %v2059, 0.0
    %v2198 = vmax.f32 %v2064, 0.0
    %v2199 = vmax.f32 %v2069, 0.0
    %v2200 = vmax.f32 %v2074, 0.0
    %v2201 = vmax.f32 %v2079, 0.0
    %v2202 = vmax.f32 %v2084, 0.0
    %v2203 = vmax.f32 %v2089, 0.0
    %v2204 = vmax.f32 %v2094, 0.0
    %v2205 = vmax.f32 %v2099, 0.0
    %v2206 = vmax.f32 %v2104, 0.0
    %v2207 = vmax.f32 %v2109, 0.0
    %v2208 = vmax.f32 %v2114, 0.0
    %v2209 = vmax.f32 %v2119, 0.0
    %v2210 = vmax.f32 %v2124, 0.0
    %v2211 = vmax.f32 %v2129, 0.0
    %v2212 = vmax.f32 %v2134, 0.0
    %v2213 = vmax.f32 %v2139, 0.0
    %v2214 = vmax.f32 %v2144, 0.0
    %v2215 = vmax.f32 %v2149, 0.0
    %v2216 = vmax.f32 %v2154, 0.0
    %v2217 = vmax.f32 %v2159, 0.0
    %v2218 = vmax.f32 %v2164, 0.0
    %v2219 = vmax.f32 %v2169, 0.0
    %v2220 = vmax.f32 %v2174, 0.0
    %v2221 = vmax.f32 %v2179, 0.0
    %v2222 = vmax.f32 %v2184, 0.0
    %v2223 = vmax.f32 %v2189, 0.0
    %v2224 = vadd.f32 %v2192, %v1525
    %v2225 = vadd.f32 %v2193, %v1530
    %v2226 = vadd.f32 %v2194, %v1535
    %v2227 = vadd.f32 %v2195, %v1540
    %v2228 = vadd.f32 %v2196, %v1545
    %v2229 = vadd.f32 %v2197, %v1550
    %v2230 = vadd.f32 %v2198, %v1555
    %v2231 = vadd.f32 %v2199, %v1560
    %v2232 = vadd.f32 %v2200, %v1565
    %v2233 = vadd.f32 %v2201, %v1570
    %v2234 = vadd.f32 %v2202, %v1575
    %v2235 = vadd.f32 %v2203, %v1580
    %v2236 = vadd.f32 %v2204, %v1585
    %v2237 = vadd.f32 %v2205, %v1590
    %v2238 = vadd.f32 %v2206, %v1595
    %v2239 = vadd.f32 %v2207, %v1600
    %v2240 = vadd.f32 %v2208, %v1605
    %v2241 = vadd.f32 %v2209, %v1610
    %v2242 = vadd.f32 %v2210, %v1615
    %v2243 = vadd.f32 %v2211, %v1620
    %v2244 = vadd.f32 %v2212, %v1625
    %v2245 = vadd.f32 %v2213, %v1630
    %v2246 = vadd.f32 %v2214, %v1635
    %v2247 = vadd.f32 %v2215, %v1640
    %v2248 = vadd.f32 %v2216, %v1645
    %v2249 = vadd.f32 %v2217, %v1650
    %v2250 = vadd.f32 %v2218, %v1655
    %v2251 = vadd.f32 %v2219, %v1660
    %v2252 = vadd.f32 %v2220, %v1665
    %v2253 = vadd.f32 %v2221, %v1670
    %v2254 = vadd.f32 %v2222, %v1675
    %v2255 = vadd.f32 %v2223, %v1680
    %v2256 = vpack.c.bf16 %v2225, %v2224
    %v2257 = vpack.c.bf16 %v2227, %v2226
    %v2258 = vpack.c.bf16 %v2229, %v2228
    %v2259 = vpack.c.bf16 %v2231, %v2230
    %v2260 = vpack.c.bf16 %v2233, %v2232
    %v2261 = vpack.c.bf16 %v2235, %v2234
    %v2262 = vpack.c.bf16 %v2237, %v2236
    %v2263 = vpack.c.bf16 %v2239, %v2238
    %v2264 = vpack.c.bf16 %v2241, %v2240
    %v2265 = vpack.c.bf16 %v2243, %v2242
    %v2266 = vpack.c.bf16 %v2245, %v2244
    %v2267 = vpack.c.bf16 %v2247, %v2246
    %v2268 = vpack.c.bf16 %v2249, %v2248
    %v2269 = vpack.c.bf16 %v2251, %v2250
    %v2270 = vpack.c.bf16 %v2253, %v2252
    %v2271 = vpack.c.bf16 %v2255, %v2254
    %2272 = vmatprep.subr.bf16.mxu0 0
    %2273 = vmatpush1.bf16.msra.mxu0 %v2263
    %2274 = vmatprep.subr.bf16.mxu0 0
    %2275 = vmatpush1.bf16.msra.mxu0 %v2262
    %2276 = vmatprep.subr.bf16.mxu0 0
    %2277 = vmatpush1.bf16.msra.mxu0 %v2261
    %2278 = vmatprep.subr.bf16.mxu0 0
    %2279 = vmatpush1.bf16.msra.mxu0 %v2260
    %2280 = vmatprep.subr.bf16.mxu0 0
    %2281 = vmatpush1.bf16.msra.mxu0 %v2259
    %2282 = vmatprep.subr.bf16.mxu0 0
    %2283 = vmatpush1.bf16.msra.mxu0 %v2258
    %2284 = vmatprep.subr.bf16.mxu0 0
    %2285 = vmatpush1.bf16.msra.mxu0 %v2257
    %2286 = vmatprep.subr.bf16.mxu0 0
    %2287 = vmatpush1.bf16.msra.mxu0 %v2256
    %2288 = vmatprep.subr.bf16.mxu0 0
    %2289 = vmatpush2.bf16.msra.mxu0 %v2271
    %2290 = vmatprep.subr.bf16.mxu0 0
    %2291 = vmatpush2.bf16.msra.mxu0 %v2270
    %2292 = vmatprep.subr.bf16.mxu0 0
    %2293 = vmatpush2.bf16.msra.mxu0 %v2269
    %2294 = vmatprep.subr.bf16.mxu0 0
    %2295 = vmatpush2.bf16.msra.mxu0 %v2268
    %2296 = vmatprep.subr.bf16.mxu0 0
    %2297 = vmatpush2.bf16.msra.mxu0 %v2267
    %2298 = vmatprep.subr.bf16.mxu0 0
    %2299 = vmatpush2.bf16.msra.mxu0 %v2266
    %2300 = vmatprep.subr.bf16.mxu0 0
    %2301 = vmatpush2.bf16.msra.mxu0 %v2265
    %2302 = vmatprep.subr.bf16.mxu0 0
    %2303 = vmatpush2.bf16.msra.mxu0 %v2264
    %2304 = vmatprep.mubr.bf16.mxu0 %v732
    %2305 = vmatmul.mubr.bf16.gmra.mxu0 %v731
    %v2306 = vpop.f32.mrf.mxu0
    %v2307 = vadd.f32 0.0, %v2306
    %v2308 = vpop.f32.mrf.mxu0
    %v2309 = vpop.f32.mrf.mxu0
    %v2310 = vadd.f32 0.0, %v2309
    %v2311 = vpop.f32.mrf.mxu0
    %2312 = vmatprep.mubr.bf16.mxu0 %v734
    %2313 = vmatmul.mubr.bf16.gmra.mxu0 %v733
    %v2314 = vpop.f32.mrf.mxu0
    %v2315 = vadd.f32 0.0, %v2314
    %v2316 = vpop.f32.mrf.mxu0
    %v2317 = vpop.f32.mrf.mxu0
    %v2318 = vadd.f32 0.0, %v2317
    %v2319 = vpop.f32.mrf.mxu0
    %2320 = vmatprep.mubr.bf16.mxu0 %v736
    %2321 = vmatmul.mubr.bf16.gmra.mxu0 %v735
    %v2322 = vpop.f32.mrf.mxu0
    %v2323 = vadd.f32 0.0, %v2322
    %v2324 = vpop.f32.mrf.mxu0
    %v2325 = vpop.f32.mrf.mxu0
    %v2326 = vadd.f32 0.0, %v2325
    %v2327 = vpop.f32.mrf.mxu0
    %2328 = vmatprep.mubr.bf16.mxu0 %v738
    %2329 = vmatmul.mubr.bf16.gmra.mxu0 %v737
    %v2330 = vpop.f32.mrf.mxu0
    %v2331 = vadd.f32 0.0, %v2330
    %v2332 = vpop.f32.mrf.mxu0
    %v2333 = vpop.f32.mrf.mxu0
    %v2334 = vadd.f32 0.0, %v2333
    %v2335 = vpop.f32.mrf.mxu0
    %2336 = vmatprep.mubr.bf16.mxu0 %v740
    %2337 = vmatmul.mubr.bf16.gmra.mxu0 %v739
    %v2338 = vpop.f32.mrf.mxu0
    %v2339 = vadd.f32 0.0, %v2338
    %v2340 = vpop.f32.mrf.mxu0
    %v2341 = vpop.f32.mrf.mxu0
    %v2342 = vadd.f32 0.0, %v2341
    %v2343 = vpop.f32.mrf.mxu0
    %2344 = vmatprep.mubr.bf16.mxu0 %v742
    %2345 = vmatmul.mubr.bf16.gmra.mxu0 %v741
    %v2346 = vpop.f32.mrf.mxu0
    %v2347 = vadd.f32 0.0, %v2346
    %v2348 = vpop.f32.mrf.mxu0
    %v2349 = vpop.f32.mrf.mxu0
    %v2350 = vadd.f32 0.0, %v2349
    %v2351 = vpop.f32.mrf.mxu0
    %2352 = vmatprep.mubr.bf16.mxu0 %v744
    %2353 = vmatmul.mubr.bf16.gmra.mxu0 %v743
    %v2354 = vpop.f32.mrf.mxu0
    %v2355 = vadd.f32 0.0, %v2354
    %v2356 = vpop.f32.mrf.mxu0
    %v2357 = vpop.f32.mrf.mxu0
    %v2358 = vadd.f32 0.0, %v2357
    %v2359 = vpop.f32.mrf.mxu0
    %2360 = vmatprep.mubr.bf16.mxu0 %v746
    %2361 = vmatmul.mubr.bf16.gmra.mxu0 %v745
    %v2362 = vpop.f32.mrf.mxu0
    %v2363 = vadd.f32 0.0, %v2362
    %v2364 = vpop.f32.mrf.mxu0
    %v2365 = vpop.f32.mrf.mxu0
    %v2366 = vadd.f32 0.0, %v2365
    %v2367 = vpop.f32.mrf.mxu0
    %2368 = vmatprep.mubr.bf16.mxu0 %v748
    %2369 = vmatmul.mubr.bf16.gmra.mxu0 %v747
    %v2370 = vpop.f32.mrf.mxu0
    %v2371 = vadd.f32 0.0, %v2370
    %v2372 = vpop.f32.mrf.mxu0
    %v2373 = vpop.f32.mrf.mxu0
    %v2374 = vadd.f32 0.0, %v2373
    %v2375 = vpop.f32.mrf.mxu0
    %2376 = vmatprep.mubr.bf16.mxu0 %v750
    %2377 = vmatmul.mubr.bf16.gmra.mxu0 %v749
    %v2378 = vpop.f32.mrf.mxu0
    %v2379 = vadd.f32 0.0, %v2378
    %v2380 = vpop.f32.mrf.mxu0
    %v2381 = vpop.f32.mrf.mxu0
    %v2382 = vadd.f32 0.0, %v2381
    %v2383 = vpop.f32.mrf.mxu0
    %2384 = vmatprep.mubr.bf16.mxu0 %v752
    %2385 = vmatmul.mubr.bf16.gmra.mxu0 %v751
    %v2386 = vpop.f32.mrf.mxu0
    %v2387 = vadd.f32 0.0, %v2386
    %v2388 = vpop.f32.mrf.mxu0
    %v2389 = vpop.f32.mrf.mxu0
    %v2390 = vadd.f32 0.0, %v2389
    %v2391 = vpop.f32.mrf.mxu0
    %2392 = vmatprep.mubr.bf16.mxu0 %v754
    %2393 = vmatmul.mubr.bf16.gmra.mxu0 %v753
    %v2394 = vpop.f32.mrf.mxu0
    %v2395 = vadd.f32 0.0, %v2394
    %v2396 = vpop.f32.mrf.mxu0
    %v2397 = vpop.f32.mrf.mxu0
    %v2398 = vadd.f32 0.0, %v2397
    %v2399 = vpop.f32.mrf.mxu0
    %2400 = vmatprep.mubr.bf16.mxu0 %v756
    %2401 = vmatmul.mubr.bf16.gmra.mxu0 %v755
    %v2402 = vpop.f32.mrf.mxu0
    %v2403 = vadd.f32 0.0, %v2402
    %v2404 = vpop.f32.mrf.mxu0
    %v2405 = vpop.f32.mrf.mxu0
    %v2406 = vadd.f32 0.0, %v2405
    %v2407 = vpop.f32.mrf.mxu0
    %2408 = vmatprep.mubr.bf16.mxu0 %v758
    %2409 = vmatmul.mubr.bf16.gmra.mxu0 %v757
    %v2410 = vpop.f32.mrf.mxu0
    %v2411 = vadd.f32 0.0, %v2410
    %v2412 = vpop.f32.mrf.mxu0
    %v2413 = vpop.f32.mrf.mxu0
    %v2414 = vadd.f32 0.0, %v2413
    %v2415 = vpop.f32.mrf.mxu0
    %2416 = vmatprep.mubr.bf16.mxu0 %v760
    %2417 = vmatmul.mubr.bf16.gmra.mxu0 %v759
    %v2418 = vpop.f32.mrf.mxu0
    %v2419 = vadd.f32 0.0, %v2418
    %v2420 = vpop.f32.mrf.mxu0
    %v2421 = vpop.f32.mrf.mxu0
    %v2422 = vadd.f32 0.0, %v2421
    %v2423 = vpop.f32.mrf.mxu0
    %2424 = vmatprep.mubr.bf16.mxu0 %v762
    %2425 = vmatmul.mubr.bf16.gmra.mxu0 %v761
    %v2426 = vpop.f32.mrf.mxu0
    %v2427 = vadd.f32 0.0, %v2426
    %v2428 = vpop.f32.mrf.mxu0
    %v2429 = vpop.f32.mrf.mxu0
    %v2430 = vadd.f32 0.0, %v2429
    %v2431 = vpop.f32.mrf.mxu0
    %2432 = vdwg.mxu0
    %v2433 = vld [vmem:[%s10] sm:$0xff]
    %v2434 = vld [vmem:[%s10 + $0x8] sm:$0xff]
    %v2435 = vld [vmem:[%s10 + $0x10] sm:$0xff]
    %v2436 = vld [vmem:[%s10 + $0x18] sm:$0xff]
    %v2437 = vld [vmem:[#allocation12] sm:$0x1]
    %v2439 = vlaneseq
    %v2440 = vshrl.u32 %v2439, 7
    %v2441 = vsub.s32 0, %v2440
    %v2442 = vrot.slane %v2437, %v2441
    %v2445 = vsel %vm1361, %v2307, 0
    %v2448 = vsel %vm1361, %v2310, 0
    %v2451 = vsel %vm1361, %v2315, 0
    %v2454 = vsel %vm1361, %v2318, 0
    %v2457 = vsel %vm1361, %v2323, 0
    %v2460 = vsel %vm1361, %v2326, 0
    %v2463 = vsel %vm1361, %v2331, 0
    %v2466 = vsel %vm1361, %v2334, 0
    %v2469 = vsel %vm1361, %v2339, 0
    %v2472 = vsel %vm1361, %v2342, 0
    %v2475 = vsel %vm1361, %v2347, 0
    %v2478 = vsel %vm1361, %v2350, 0
    %v2481 = vsel %vm1361, %v2355, 0
    %v2484 = vsel %vm1361, %v2358, 0
    %v2487 = vsel %vm1361, %v2363, 0
    %v2490 = vsel %vm1361, %v2366, 0
    %v2493 = vsel %vm1361, %v2371, 0
    %v2496 = vsel %vm1361, %v2374, 0
    %v2499 = vsel %vm1361, %v2379, 0
    %v2502 = vsel %vm1361, %v2382, 0
    %v2505 = vsel %vm1361, %v2387, 0
    %v2508 = vsel %vm1361, %v2390, 0
    %v2511 = vsel %vm1361, %v2395, 0
    %v2514 = vsel %vm1361, %v2398, 0
    %v2517 = vsel %vm1361, %v2403, 0
    %v2520 = vsel %vm1361, %v2406, 0
    %v2523 = vsel %vm1361, %v2411, 0
    %v2526 = vsel %vm1361, %v2414, 0
    %v2529 = vsel %vm1361, %v2419, 0
    %v2532 = vsel %vm1361, %v2422, 0
    %v2535 = vsel %vm1361, %v2427, 0
    %v2538 = vsel %vm1361, %v2430, 0
    %2540 = vmatprep.subr.mxu0 0.0
    %2541 = vmatpush1.msra.mxu0 0.0
    %2542 = vmatprep.subr.mxu0 0.0
    %2543 = vmatpush1.msra.mxu0 0.0
    %2544 = vmatprep.subr.mxu0 0.0
    %2545 = vmatpush1.msra.mxu0 0.0
    %2546 = vmatprep.subr.mxu0 0.0
    %2547 = vmatpush1.msra.mxu0 0.0
    %2548 = vmatprep.subr.mxu0 0.0
    %2549 = vmatpush1.msra.mxu0 0.0
    %2550 = vmatprep.subr.mxu0 0.0
    %2551 = vmatpush1.msra.mxu0 0.0
    %2552 = vmatprep.subr.mxu0 0.0
    %2553 = vmatpush1.msra.mxu0 0.0
    %2554 = vmatprep.subr.mxu0 0.0
    %2555 = vmatpush1.msra.mxu0 0.0
    %2556 = vmatprep.subr.mxu0 0.0
    %2557 = vmatpush1.msra.mxu0 0.0
    %2558 = vmatprep.subr.mxu0 0.0
    %2559 = vmatpush1.msra.mxu0 0.0
    %2560 = vmatprep.subr.mxu0 0.0
    %2561 = vmatpush1.msra.mxu0 0.0
    %2562 = vmatprep.subr.mxu0 0.0
    %2563 = vmatpush1.msra.mxu0 0.0
    %2564 = vmatprep.subr.mxu0 0.0
    %2565 = vmatpush1.msra.mxu0 %v2436
    %2566 = vmatprep.subr.mxu0 0.0
    %2567 = vmatpush1.msra.mxu0 %v2435
    %2568 = vmatprep.subr.mxu0 0.0
    %2569 = vmatpush1.msra.mxu0 %v2434
    %2570 = vmatprep.subr.mxu0 0.0
    %2571 = vmatpush1.msra.mxu0 %v2433
    %2572 = vmatprep.subr.mxu0 0.0
    %2573 = vmatpush2.msra.mxu0 0.0
    %2574 = vmatprep.subr.mxu0 0.0
    %2575 = vmatpush2.msra.mxu0 0.0
    %2576 = vmatprep.subr.mxu0 0.0
    %2577 = vmatpush2.msra.mxu0 0.0
    %2578 = vmatprep.subr.mxu0 0.0
    %2579 = vmatpush2.msra.mxu0 0.0
    %2580 = vmatprep.subr.mxu0 0.0
    %2581 = vmatpush2.msra.mxu0 0.0
    %2582 = vmatprep.subr.mxu0 0.0
    %2583 = vmatpush2.msra.mxu0 0.0
    %2584 = vmatprep.subr.mxu0 0.0
    %2585 = vmatpush2.msra.mxu0 0.0
    %2586 = vmatprep.subr.mxu0 0.0
    %2587 = vmatpush2.msra.mxu0 0.0
    %2588 = vmatprep.subr.mxu0 0.0
    %2589 = vmatpush2.msra.mxu0 0.0
    %2590 = vmatprep.subr.mxu0 0.0
    %2591 = vmatpush2.msra.mxu0 0.0
    %2592 = vmatprep.subr.mxu0 0.0
    %2593 = vmatpush2.msra.mxu0 0.0
    %2594 = vmatprep.subr.mxu0 0.0
    %2595 = vmatpush2.msra.mxu0 0.0
    %2596 = vmatprep.subr.mxu0 0.0
    %2597 = vmatpush2.msra.mxu0 0.0
    %2598 = vmatprep.subr.mxu0 0.0
    %2599 = vmatpush2.msra.mxu0 0.0
    %2600 = vmatprep.subr.mxu0 0.0
    %2601 = vmatpush2.msra.mxu0 0.0
    %2602 = vmatprep.subr.mxu0 0.0
    %2603 = vmatpush2.msra.mxu0 0.0
    %2604 = vmatprep.mubr.f32.mxu0 0.0
    %2605 = vmatmul.mubr.f32.gmra.mxu0 %v2445
    %v2606 = vpop.f32.mrf.mxu0
    %v2607 = vadd.f32 %v2442, %v2606
    %v2608 = vpop.f32.mrf.mxu0
    %2609 = vmatprep.mubr.f32.mxu0 0.0
    %2610 = vmatmul.mubr.f32.gmra.mxu0 %v2448
    %v2611 = vpop.f32.mrf.mxu0
    %v2612 = vadd.f32 %v2442, %v2611
    %v2613 = vpop.f32.mrf.mxu0
    %2614 = vmatprep.mubr.f32.mxu0 0.0
    %2615 = vmatmul.mubr.f32.gmra.mxu0 %v2451
    %v2616 = vpop.f32.mrf.mxu0
    %v2617 = vadd.f32 %v2442, %v2616
    %v2618 = vpop.f32.mrf.mxu0
    %2619 = vmatprep.mubr.f32.mxu0 0.0
    %2620 = vmatmul.mubr.f32.gmra.mxu0 %v2454
    %v2621 = vpop.f32.mrf.mxu0
    %v2622 = vadd.f32 %v2442, %v2621
    %v2623 = vpop.f32.mrf.mxu0
    %2624 = vmatprep.mubr.f32.mxu0 0.0
    %2625 = vmatmul.mubr.f32.gmra.mxu0 %v2457
    %v2626 = vpop.f32.mrf.mxu0
    %v2627 = vadd.f32 %v2442, %v2626
    %v2628 = vpop.f32.mrf.mxu0
    %2629 = vmatprep.mubr.f32.mxu0 0.0
    %2630 = vmatmul.mubr.f32.gmra.mxu0 %v2460
    %v2631 = vpop.f32.mrf.mxu0
    %v2632 = vadd.f32 %v2442, %v2631
    %v2633 = vpop.f32.mrf.mxu0
    %2634 = vmatprep.mubr.f32.mxu0 0.0
    %2635 = vmatmul.mubr.f32.gmra.mxu0 %v2463
    %v2636 = vpop.f32.mrf.mxu0
    %v2637 = vadd.f32 %v2442, %v2636
    %v2638 = vpop.f32.mrf.mxu0
    %2639 = vmatprep.mubr.f32.mxu0 0.0
    %2640 = vmatmul.mubr.f32.gmra.mxu0 %v2466
    %v2641 = vpop.f32.mrf.mxu0
    %v2642 = vadd.f32 %v2442, %v2641
    %v2643 = vpop.f32.mrf.mxu0
    %2644 = vmatprep.mubr.f32.mxu0 0.0
    %2645 = vmatmul.mubr.f32.gmra.mxu0 %v2469
    %v2646 = vpop.f32.mrf.mxu0
    %v2647 = vadd.f32 %v2442, %v2646
    %v2648 = vpop.f32.mrf.mxu0
    %2649 = vmatprep.mubr.f32.mxu0 0.0
    %2650 = vmatmul.mubr.f32.gmra.mxu0 %v2472
    %v2651 = vpop.f32.mrf.mxu0
    %v2652 = vadd.f32 %v2442, %v2651
    %v2653 = vpop.f32.mrf.mxu0
    %2654 = vmatprep.mubr.f32.mxu0 0.0
    %2655 = vmatmul.mubr.f32.gmra.mxu0 %v2475
    %v2656 = vpop.f32.mrf.mxu0
    %v2657 = vadd.f32 %v2442, %v2656
    %v2658 = vpop.f32.mrf.mxu0
    %2659 = vmatprep.mubr.f32.mxu0 0.0
    %2660 = vmatmul.mubr.f32.gmra.mxu0 %v2478
    %v2661 = vpop.f32.mrf.mxu0
    %v2662 = vadd.f32 %v2442, %v2661
    %v2663 = vpop.f32.mrf.mxu0
    %2664 = vmatprep.mubr.f32.mxu0 0.0
    %2665 = vmatmul.mubr.f32.gmra.mxu0 %v2481
    %v2666 = vpop.f32.mrf.mxu0
    %v2667 = vadd.f32 %v2442, %v2666
    %v2668 = vpop.f32.mrf.mxu0
    %2669 = vmatprep.mubr.f32.mxu0 0.0
    %2670 = vmatmul.mubr.f32.gmra.mxu0 %v2484
    %v2671 = vpop.f32.mrf.mxu0
    %v2672 = vadd.f32 %v2442, %v2671
    %v2673 = vpop.f32.mrf.mxu0
    %2674 = vmatprep.mubr.f32.mxu0 0.0
    %2675 = vmatmul.mubr.f32.gmra.mxu0 %v2487
    %v2676 = vpop.f32.mrf.mxu0
    %v2677 = vadd.f32 %v2442, %v2676
    %v2678 = vpop.f32.mrf.mxu0
    %2679 = vmatprep.mubr.f32.mxu0 0.0
    %2680 = vmatmul.mubr.f32.gmra.mxu0 %v2490
    %v2681 = vpop.f32.mrf.mxu0
    %v2682 = vadd.f32 %v2442, %v2681
    %v2683 = vpop.f32.mrf.mxu0
    %2684 = vmatprep.mubr.f32.mxu0 0.0
    %2685 = vmatmul.mubr.f32.gmra.mxu0 %v2493
    %v2686 = vpop.f32.mrf.mxu0
    %v2687 = vadd.f32 %v2442, %v2686
    %v2688 = vpop.f32.mrf.mxu0
    %2689 = vmatprep.mubr.f32.mxu0 0.0
    %2690 = vmatmul.mubr.f32.gmra.mxu0 %v2496
    %v2691 = vpop.f32.mrf.mxu0
    %v2692 = vadd.f32 %v2442, %v2691
    %v2693 = vpop.f32.mrf.mxu0
    %2694 = vmatprep.mubr.f32.mxu0 0.0
    %2695 = vmatmul.mubr.f32.gmra.mxu0 %v2499
    %v2696 = vpop.f32.mrf.mxu0
    %v2697 = vadd.f32 %v2442, %v2696
    %v2698 = vpop.f32.mrf.mxu0
    %2699 = vmatprep.mubr.f32.mxu0 0.0
    %2700 = vmatmul.mubr.f32.gmra.mxu0 %v2502
    %v2701 = vpop.f32.mrf.mxu0
    %v2702 = vadd.f32 %v2442, %v2701
    %v2703 = vpop.f32.mrf.mxu0
    %2704 = vmatprep.mubr.f32.mxu0 0.0
    %2705 = vmatmul.mubr.f32.gmra.mxu0 %v2505
    %v2706 = vpop.f32.mrf.mxu0
    %v2707 = vadd.f32 %v2442, %v2706
    %v2708 = vpop.f32.mrf.mxu0
    %2709 = vmatprep.mubr.f32.mxu0 0.0
    %2710 = vmatmul.mubr.f32.gmra.mxu0 %v2508
    %v2711 = vpop.f32.mrf.mxu0
    %v2712 = vadd.f32 %v2442, %v2711
    %v2713 = vpop.f32.mrf.mxu0
    %2714 = vmatprep.mubr.f32.mxu0 0.0
    %2715 = vmatmul.mubr.f32.gmra.mxu0 %v2511
    %v2716 = vpop.f32.mrf.mxu0
    %v2717 = vadd.f32 %v2442, %v2716
    %v2718 = vpop.f32.mrf.mxu0
    %2719 = vmatprep.mubr.f32.mxu0 0.0
    %2720 = vmatmul.mubr.f32.gmra.mxu0 %v2514
    %v2721 = vpop.f32.mrf.mxu0
    %v2722 = vadd.f32 %v2442, %v2721
    %v2723 = vpop.f32.mrf.mxu0
    %2724 = vmatprep.mubr.f32.mxu0 0.0
    %2725 = vmatmul.mubr.f32.gmra.mxu0 %v2517
    %v2726 = vpop.f32.mrf.mxu0
    %v2727 = vadd.f32 %v2442, %v2726
    %v2728 = vpop.f32.mrf.mxu0
    %2729 = vmatprep.mubr.f32.mxu0 0.0
    %2730 = vmatmul.mubr.f32.gmra.mxu0 %v2520
    %v2731 = vpop.f32.mrf.mxu0
    %v2732 = vadd.f32 %v2442, %v2731
    %v2733 = vpop.f32.mrf.mxu0
    %2734 = vmatprep.mubr.f32.mxu0 0.0
    %2735 = vmatmul.mubr.f32.gmra.mxu0 %v2523
    %v2736 = vpop.f32.mrf.mxu0
    %v2737 = vadd.f32 %v2442, %v2736
    %v2738 = vpop.f32.mrf.mxu0
    %2739 = vmatprep.mubr.f32.mxu0 0.0
    %2740 = vmatmul.mubr.f32.gmra.mxu0 %v2526
    %v2741 = vpop.f32.mrf.mxu0
    %v2742 = vadd.f32 %v2442, %v2741
    %v2743 = vpop.f32.mrf.mxu0
    %2744 = vmatprep.mubr.f32.mxu0 0.0
    %2745 = vmatmul.mubr.f32.gmra.mxu0 %v2529
    %v2746 = vpop.f32.mrf.mxu0
    %v2747 = vadd.f32 %v2442, %v2746
    %v2748 = vpop.f32.mrf.mxu0
    %2749 = vmatprep.mubr.f32.mxu0 0.0
    %2750 = vmatmul.mubr.f32.gmra.mxu0 %v2532
    %v2751 = vpop.f32.mrf.mxu0
    %v2752 = vadd.f32 %v2442, %v2751
    %v2753 = vpop.f32.mrf.mxu0
    %2754 = vmatprep.mubr.f32.mxu0 0.0
    %2755 = vmatmul.mubr.f32.gmra.mxu0 %v2535
    %v2756 = vpop.f32.mrf.mxu0
    %v2757 = vadd.f32 %v2442, %v2756
    %v2758 = vpop.f32.mrf.mxu0
    %2759 = vmatprep.mubr.f32.mxu0 0.0
    %2760 = vmatmul.mubr.f32.gmra.mxu0 %v2538
    %v2761 = vpop.f32.mrf.mxu0
    %v2762 = vadd.f32 %v2442, %v2761
    %v2763 = vpop.f32.mrf.mxu0
    %2764 = vdwg.mxu0
    %v2765 = vadd.f32 %v1318, %v2607
    %v2766 = vadd.f32 %v1319, %v2612
    %v2767 = vadd.f32 %v1320, %v2617
    %v2768 = vadd.f32 %v1321, %v2622
    %v2769 = vadd.f32 %v1322, %v2627
    %v2770 = vadd.f32 %v1323, %v2632
    %v2771 = vadd.f32 %v1324, %v2637
    %v2772 = vadd.f32 %v1325, %v2642
    %v2773 = vadd.f32 %v1326, %v2647
    %v2774 = vadd.f32 %v1327, %v2652
    %v2775 = vadd.f32 %v1328, %v2657
    %v2776 = vadd.f32 %v1329, %v2662
    %v2777 = vadd.f32 %v1330, %v2667
    %v2778 = vadd.f32 %v1331, %v2672
    %v2779 = vadd.f32 %v1332, %v2677
    %v2780 = vadd.f32 %v1333, %v2682
    %v2781 = vadd.f32 %v1334, %v2687
    %v2782 = vadd.f32 %v1335, %v2692
    %v2783 = vadd.f32 %v1336, %v2697
    %v2784 = vadd.f32 %v1337, %v2702
    %v2785 = vadd.f32 %v1338, %v2707
    %v2786 = vadd.f32 %v1339, %v2712
    %v2787 = vadd.f32 %v1340, %v2717
    %v2788 = vadd.f32 %v1341, %v2722
    %v2789 = vadd.f32 %v1342, %v2727
    %v2790 = vadd.f32 %v1343, %v2732
    %v2791 = vadd.f32 %v1344, %v2737
    %v2792 = vadd.f32 %v1345, %v2742
    %v2793 = vadd.f32 %v1346, %v2747
    %v2794 = vadd.f32 %v1347, %v2752
    %v2795 = vadd.f32 %v1348, %v2757
    %v2796 = vadd.f32 %v1349, %v2762
    %v2797 = vld [vmem:[#allocation16] sm:$0xff]
    %v2798 = vld [vmem:[#allocation16 + $0x8] sm:$0xff]
    %v2799 = vld [vmem:[#allocation16 + $0x10] sm:$0xff]
    %v2800 = vld [vmem:[#allocation16 + $0x18] sm:$0xff]
    %v2801 = vld [vmem:[#allocation18] sm:$0x1]
    %v2803 = vlaneseq
    %v2804 = vshrl.u32 %v2803, 7
    %v2805 = vsub.s32 0, %v2804
    %v2806 = vrot.slane %v2801, %v2805
    %v2809 = vsel %vm1361, %v2765, 0
    %v2812 = vsel %vm1361, %v2766, 0
    %v2815 = vsel %vm1361, %v2767, 0
    %v2818 = vsel %vm1361, %v2768, 0
    %v2821 = vsel %vm1361, %v2769, 0
    %v2824 = vsel %vm1361, %v2770, 0
    %v2827 = vsel %vm1361, %v2771, 0
    %v2830 = vsel %vm1361, %v2772, 0
    %v2833 = vsel %vm1361, %v2773, 0
    %v2836 = vsel %vm1361, %v2774, 0
    %v2839 = vsel %vm1361, %v2775, 0
    %v2842 = vsel %vm1361, %v2776, 0
    %v2845 = vsel %vm1361, %v2777, 0
    %v2848 = vsel %vm1361, %v2778, 0
    %v2851 = vsel %vm1361, %v2779, 0
    %v2854 = vsel %vm1361, %v2780, 0
    %v2857 = vsel %vm1361, %v2781, 0
    %v2860 = vsel %vm1361, %v2782, 0
    %v2863 = vsel %vm1361, %v2783, 0
    %v2866 = vsel %vm1361, %v2784, 0
    %v2869 = vsel %vm1361, %v2785, 0
    %v2872 = vsel %vm1361, %v2786, 0
    %v2875 = vsel %vm1361, %v2787, 0
    %v2878 = vsel %vm1361, %v2788, 0
    %v2881 = vsel %vm1361, %v2789, 0
    %v2884 = vsel %vm1361, %v2790, 0
    %v2887 = vsel %vm1361, %v2791, 0
    %v2890 = vsel %vm1361, %v2792, 0
    %v2893 = vsel %vm1361, %v2793, 0
    %v2896 = vsel %vm1361, %v2794, 0
    %v2899 = vsel %vm1361, %v2795, 0
    %v2902 = vsel %vm1361, %v2796, 0
    %2904 = vmatprep.subr.mxu0 0.0
    %2905 = vmatpush1.msra.mxu0 0.0
    %2906 = vmatprep.subr.mxu0 0.0
    %2907 = vmatpush1.msra.mxu0 0.0
    %2908 = vmatprep.subr.mxu0 0.0
    %2909 = vmatpush1.msra.mxu0 0.0
    %2910 = vmatprep.subr.mxu0 0.0
    %2911 = vmatpush1.msra.mxu0 0.0
    %2912 = vmatprep.subr.mxu0 0.0
    %2913 = vmatpush1.msra.mxu0 0.0
    %2914 = vmatprep.subr.mxu0 0.0
    %2915 = vmatpush1.msra.mxu0 0.0
    %2916 = vmatprep.subr.mxu0 0.0
    %2917 = vmatpush1.msra.mxu0 0.0
    %2918 = vmatprep.subr.mxu0 0.0
    %2919 = vmatpush1.msra.mxu0 0.0
    %2920 = vmatprep.subr.mxu0 0.0
    %2921 = vmatpush1.msra.mxu0 0.0
    %2922 = vmatprep.subr.mxu0 0.0
    %2923 = vmatpush1.msra.mxu0 0.0
    %2924 = vmatprep.subr.mxu0 0.0
    %2925 = vmatpush1.msra.mxu0 0.0
    %2926 = vmatprep.subr.mxu0 0.0
    %2927 = vmatpush1.msra.mxu0 0.0
    %2928 = vmatprep.subr.mxu0 0.0
    %2929 = vmatpush1.msra.mxu0 %v2800
    %2930 = vmatprep.subr.mxu0 0.0
    %2931 = vmatpush1.msra.mxu0 %v2799
    %2932 = vmatprep.subr.mxu0 0.0
    %2933 = vmatpush1.msra.mxu0 %v2798
    %2934 = vmatprep.subr.mxu0 0.0
    %2935 = vmatpush1.msra.mxu0 %v2797
    %2936 = vmatprep.subr.mxu0 0.0
    %2937 = vmatpush2.msra.mxu0 0.0
    %2938 = vmatprep.subr.mxu0 0.0
    %2939 = vmatpush2.msra.mxu0 0.0
    %2940 = vmatprep.subr.mxu0 0.0
    %2941 = vmatpush2.msra.mxu0 0.0
    %2942 = vmatprep.subr.mxu0 0.0
    %2943 = vmatpush2.msra.mxu0 0.0
    %2944 = vmatprep.subr.mxu0 0.0
    %2945 = vmatpush2.msra.mxu0 0.0
    %2946 = vmatprep.subr.mxu0 0.0
    %2947 = vmatpush2.msra.mxu0 0.0
    %2948 = vmatprep.subr.mxu0 0.0
    %2949 = vmatpush2.msra.mxu0 0.0
    %2950 = vmatprep.subr.mxu0 0.0
    %2951 = vmatpush2.msra.mxu0 0.0
    %2952 = vmatprep.subr.mxu0 0.0
    %2953 = vmatpush2.msra.mxu0 0.0
    %2954 = vmatprep.subr.mxu0 0.0
    %2955 = vmatpush2.msra.mxu0 0.0
    %2956 = vmatprep.subr.mxu0 0.0
    %2957 = vmatpush2.msra.mxu0 0.0
    %2958 = vmatprep.subr.mxu0 0.0
    %2959 = vmatpush2.msra.mxu0 0.0
    %2960 = vmatprep.subr.mxu0 0.0
    %2961 = vmatpush2.msra.mxu0 0.0
    %2962 = vmatprep.subr.mxu0 0.0
    %2963 = vmatpush2.msra.mxu0 0.0
    %2964 = vmatprep.subr.mxu0 0.0
    %2965 = vmatpush2.msra.mxu0 0.0
    %2966 = vmatprep.subr.mxu0 0.0
    %2967 = vmatpush2.msra.mxu0 0.0
    %2968 = vmatprep.mubr.f32.mxu0 0.0
    %2969 = vmatmul.mubr.f32.gmra.mxu0 %v2809
    %v2970 = vpop.f32.mrf.mxu0
    %v2971 = vadd.f32 %v2806, %v2970
    %v2972 = vpop.f32.mrf.mxu0
    %2973 = vmatprep.mubr.f32.mxu0 0.0
    %2974 = vmatmul.mubr.f32.gmra.mxu0 %v2812
    %v2975 = vpop.f32.mrf.mxu0
    %v2976 = vadd.f32 %v2806, %v2975
    %v2977 = vpop.f32.mrf.mxu0
    %2978 = vmatprep.mubr.f32.mxu0 0.0
    %2979 = vmatmul.mubr.f32.gmra.mxu0 %v2815
    %v2980 = vpop.f32.mrf.mxu0
    %v2981 = vadd.f32 %v2806, %v2980
    %v2982 = vpop.f32.mrf.mxu0
    %2983 = vmatprep.mubr.f32.mxu0 0.0
    %2984 = vmatmul.mubr.f32.gmra.mxu0 %v2818
    %v2985 = vpop.f32.mrf.mxu0
    %v2986 = vadd.f32 %v2806, %v2985
    %v2987 = vpop.f32.mrf.mxu0
    %2988 = vmatprep.mubr.f32.mxu0 0.0
    %2989 = vmatmul.mubr.f32.gmra.mxu0 %v2821
    %v2990 = vpop.f32.mrf.mxu0
    %v2991 = vadd.f32 %v2806, %v2990
    %v2992 = vpop.f32.mrf.mxu0
    %2993 = vmatprep.mubr.f32.mxu0 0.0
    %2994 = vmatmul.mubr.f32.gmra.mxu0 %v2824
    %v2995 = vpop.f32.mrf.mxu0
    %v2996 = vadd.f32 %v2806, %v2995
    %v2997 = vpop.f32.mrf.mxu0
    %2998 = vmatprep.mubr.f32.mxu0 0.0
    %2999 = vmatmul.mubr.f32.gmra.mxu0 %v2827
    %v3000 = vpop.f32.mrf.mxu0
    %v3001 = vadd.f32 %v2806, %v3000
    %v3002 = vpop.f32.mrf.mxu0
    %3003 = vmatprep.mubr.f32.mxu0 0.0
    %3004 = vmatmul.mubr.f32.gmra.mxu0 %v2830
    %v3005 = vpop.f32.mrf.mxu0
    %v3006 = vadd.f32 %v2806, %v3005
    %v3007 = vpop.f32.mrf.mxu0
    %3008 = vmatprep.mubr.f32.mxu0 0.0
    %3009 = vmatmul.mubr.f32.gmra.mxu0 %v2833
    %v3010 = vpop.f32.mrf.mxu0
    %v3011 = vadd.f32 %v2806, %v3010
    %v3012 = vpop.f32.mrf.mxu0
    %3013 = vmatprep.mubr.f32.mxu0 0.0
    %3014 = vmatmul.mubr.f32.gmra.mxu0 %v2836
    %v3015 = vpop.f32.mrf.mxu0
    %v3016 = vadd.f32 %v2806, %v3015
    %v3017 = vpop.f32.mrf.mxu0
    %3018 = vmatprep.mubr.f32.mxu0 0.0
    %3019 = vmatmul.mubr.f32.gmra.mxu0 %v2839
    %v3020 = vpop.f32.mrf.mxu0
    %v3021 = vadd.f32 %v2806, %v3020
    %v3022 = vpop.f32.mrf.mxu0
    %3023 = vmatprep.mubr.f32.mxu0 0.0
    %3024 = vmatmul.mubr.f32.gmra.mxu0 %v2842
    %v3025 = vpop.f32.mrf.mxu0
    %v3026 = vadd.f32 %v2806, %v3025
    %v3027 = vpop.f32.mrf.mxu0
    %3028 = vmatprep.mubr.f32.mxu0 0.0
    %3029 = vmatmul.mubr.f32.gmra.mxu0 %v2845
    %v3030 = vpop.f32.mrf.mxu0
    %v3031 = vadd.f32 %v2806, %v3030
    %v3032 = vpop.f32.mrf.mxu0
    %3033 = vmatprep.mubr.f32.mxu0 0.0
    %3034 = vmatmul.mubr.f32.gmra.mxu0 %v2848
    %v3035 = vpop.f32.mrf.mxu0
    %v3036 = vadd.f32 %v2806, %v3035
    %v3037 = vpop.f32.mrf.mxu0
    %3038 = vmatprep.mubr.f32.mxu0 0.0
    %3039 = vmatmul.mubr.f32.gmra.mxu0 %v2851
    %v3040 = vpop.f32.mrf.mxu0
    %v3041 = vadd.f32 %v2806, %v3040
    %v3042 = vpop.f32.mrf.mxu0
    %3043 = vmatprep.mubr.f32.mxu0 0.0
    %3044 = vmatmul.mubr.f32.gmra.mxu0 %v2854
    %v3045 = vpop.f32.mrf.mxu0
    %v3046 = vadd.f32 %v2806, %v3045
    %v3047 = vpop.f32.mrf.mxu0
    %3048 = vmatprep.mubr.f32.mxu0 0.0
    %3049 = vmatmul.mubr.f32.gmra.mxu0 %v2857
    %v3050 = vpop.f32.mrf.mxu0
    %v3051 = vadd.f32 %v2806, %v3050
    %v3052 = vpop.f32.mrf.mxu0
    %3053 = vmatprep.mubr.f32.mxu0 0.0
    %3054 = vmatmul.mubr.f32.gmra.mxu0 %v2860
    %v3055 = vpop.f32.mrf.mxu0
    %v3056 = vadd.f32 %v2806, %v3055
    %v3057 = vpop.f32.mrf.mxu0
    %3058 = vmatprep.mubr.f32.mxu0 0.0
    %3059 = vmatmul.mubr.f32.gmra.mxu0 %v2863
    %v3060 = vpop.f32.mrf.mxu0
    %v3061 = vadd.f32 %v2806, %v3060
    %v3062 = vpop.f32.mrf.mxu0
    %3063 = vmatprep.mubr.f32.mxu0 0.0
    %3064 = vmatmul.mubr.f32.gmra.mxu0 %v2866
    %v3065 = vpop.f32.mrf.mxu0
    %v3066 = vadd.f32 %v2806, %v3065
    %v3067 = vpop.f32.mrf.mxu0
    %3068 = vmatprep.mubr.f32.mxu0 0.0
    %3069 = vmatmul.mubr.f32.gmra.mxu0 %v2869
    %v3070 = vpop.f32.mrf.mxu0
    %v3071 = vadd.f32 %v2806, %v3070
    %v3072 = vpop.f32.mrf.mxu0
    %3073 = vmatprep.mubr.f32.mxu0 0.0
    %3074 = vmatmul.mubr.f32.gmra.mxu0 %v2872
    %v3075 = vpop.f32.mrf.mxu0
    %v3076 = vadd.f32 %v2806, %v3075
    %v3077 = vpop.f32.mrf.mxu0
    %3078 = vmatprep.mubr.f32.mxu0 0.0
    %3079 = vmatmul.mubr.f32.gmra.mxu0 %v2875
    %v3080 = vpop.f32.mrf.mxu0
    %v3081 = vadd.f32 %v2806, %v3080
    %v3082 = vpop.f32.mrf.mxu0
    %3083 = vmatprep.mubr.f32.mxu0 0.0
    %3084 = vmatmul.mubr.f32.gmra.mxu0 %v2878
    %v3085 = vpop.f32.mrf.mxu0
    %v3086 = vadd.f32 %v2806, %v3085
    %v3087 = vpop.f32.mrf.mxu0
    %3088 = vmatprep.mubr.f32.mxu0 0.0
    %3089 = vmatmul.mubr.f32.gmra.mxu0 %v2881
    %v3090 = vpop.f32.mrf.mxu0
    %v3091 = vadd.f32 %v2806, %v3090
    %v3092 = vpop.f32.mrf.mxu0
    %3093 = vmatprep.mubr.f32.mxu0 0.0
    %3094 = vmatmul.mubr.f32.gmra.mxu0 %v2884
    %v3095 = vpop.f32.mrf.mxu0
    %v3096 = vadd.f32 %v2806, %v3095
    %v3097 = vpop.f32.mrf.mxu0
    %3098 = vmatprep.mubr.f32.mxu0 0.0
    %3099 = vmatmul.mubr.f32.gmra.mxu0 %v2887
    %v3100 = vpop.f32.mrf.mxu0
    %v3101 = vadd.f32 %v2806, %v3100
    %v3102 = vpop.f32.mrf.mxu0
    %3103 = vmatprep.mubr.f32.mxu0 0.0
    %3104 = vmatmul.mubr.f32.gmra.mxu0 %v2890
    %v3105 = vpop.f32.mrf.mxu0
    %v3106 = vadd.f32 %v2806, %v3105
    %v3107 = vpop.f32.mrf.mxu0
    %3108 = vmatprep.mubr.f32.mxu0 0.0
    %3109 = vmatmul.mubr.f32.gmra.mxu0 %v2893
    %v3110 = vpop.f32.mrf.mxu0
    %v3111 = vadd.f32 %v2806, %v3110
    %v3112 = vpop.f32.mrf.mxu0
    %3113 = vmatprep.mubr.f32.mxu0 0.0
    %3114 = vmatmul.mubr.f32.gmra.mxu0 %v2896
    %v3115 = vpop.f32.mrf.mxu0
    %v3116 = vadd.f32 %v2806, %v3115
    %v3117 = vpop.f32.mrf.mxu0
    %3118 = vmatprep.mubr.f32.mxu0 0.0
    %3119 = vmatmul.mubr.f32.gmra.mxu0 %v2899
    %v3120 = vpop.f32.mrf.mxu0
    %v3121 = vadd.f32 %v2806, %v3120
    %v3122 = vpop.f32.mrf.mxu0
    %3123 = vmatprep.mubr.f32.mxu0 0.0
    %3124 = vmatmul.mubr.f32.gmra.mxu0 %v2902
    %v3125 = vpop.f32.mrf.mxu0
    %v3126 = vadd.f32 %v2806, %v3125
    %v3127 = vpop.f32.mrf.mxu0
    %3128 = vdwg.mxu0
    %v3129 = vpack.c.bf16 %v2766, %v2765
    %v3130 = vpack.c.bf16 %v2768, %v2767
    %v3131 = vpack.c.bf16 %v2770, %v2769
    %v3132 = vpack.c.bf16 %v2772, %v2771
    %v3133 = vpack.c.bf16 %v2774, %v2773
    %v3134 = vpack.c.bf16 %v2776, %v2775
    %v3135 = vpack.c.bf16 %v2778, %v2777
    %v3136 = vpack.c.bf16 %v2780, %v2779
    %v3137 = vpack.c.bf16 %v2782, %v2781
    %v3138 = vpack.c.bf16 %v2784, %v2783
    %v3139 = vpack.c.bf16 %v2786, %v2785
    %v3140 = vpack.c.bf16 %v2788, %v2787
    %v3141 = vpack.c.bf16 %v2790, %v2789
    %v3142 = vpack.c.bf16 %v2792, %v2791
    %v3143 = vpack.c.bf16 %v2794, %v2793
    %v3144 = vpack.c.bf16 %v2796, %v2795
    %3145 = vmatprep.subr.bf16.mxu0 0
    %3146 = vmatpush1.bf16.msra.mxu0 %v3136
    %3147 = vmatprep.subr.bf16.mxu0 0
    %3148 = vmatpush1.bf16.msra.mxu0 %v3135
    %3149 = vmatprep.subr.bf16.mxu0 0
    %3150 = vmatpush1.bf16.msra.mxu0 %v3134
    %3151 = vmatprep.subr.bf16.mxu0 0
    %3152 = vmatpush1.bf16.msra.mxu0 %v3133
    %3153 = vmatprep.subr.bf16.mxu0 0
    %3154 = vmatpush1.bf16.msra.mxu0 %v3132
    %3155 = vmatprep.subr.bf16.mxu0 0
    %3156 = vmatpush1.bf16.msra.mxu0 %v3131
    %3157 = vmatprep.subr.bf16.mxu0 0
    %3158 = vmatpush1.bf16.msra.mxu0 %v3130
    %3159 = vmatprep.subr.bf16.mxu0 0
    %3160 = vmatpush1.bf16.msra.mxu0 %v3129
    %3161 = vmatprep.subr.bf16.mxu0 0
    %3162 = vmatpush2.bf16.msra.mxu0 %v3144
    %3163 = vmatprep.subr.bf16.mxu0 0
    %3164 = vmatpush2.bf16.msra.mxu0 %v3143
    %3165 = vmatprep.subr.bf16.mxu0 0
    %3166 = vmatpush2.bf16.msra.mxu0 %v3142
    %3167 = vmatprep.subr.bf16.mxu0 0
    %3168 = vmatpush2.bf16.msra.mxu0 %v3141
    %3169 = vmatprep.subr.bf16.mxu0 0
    %3170 = vmatpush2.bf16.msra.mxu0 %v3140
    %3171 = vmatprep.subr.bf16.mxu0 0
    %3172 = vmatpush2.bf16.msra.mxu0 %v3139
    %3173 = vmatprep.subr.bf16.mxu0 0
    %3174 = vmatpush2.bf16.msra.mxu0 %v3138
    %3175 = vmatprep.subr.bf16.mxu0 0
    %3176 = vmatpush2.bf16.msra.mxu0 %v3137
    %3177 = vmatprep.mubr.bf16.mxu0 %v732
    %3178 = vmatmul.mubr.bf16.gmra.mxu0 %v731
    %v3179 = vpop.f32.mrf.mxu0
    %v3180 = vadd.f32 0.0, %v3179
    %v3181 = vpop.f32.mrf.mxu0
    %v3182 = vpop.f32.mrf.mxu0
    %v3183 = vadd.f32 0.0, %v3182
    %v3184 = vpop.f32.mrf.mxu0
    %3185 = vmatprep.mubr.bf16.mxu0 %v734
    %3186 = vmatmul.mubr.bf16.gmra.mxu0 %v733
    %v3187 = vpop.f32.mrf.mxu0
    %v3188 = vadd.f32 0.0, %v3187
    %v3189 = vpop.f32.mrf.mxu0
    %v3190 = vpop.f32.mrf.mxu0
    %v3191 = vadd.f32 0.0, %v3190
    %v3192 = vpop.f32.mrf.mxu0
    %3193 = vmatprep.mubr.bf16.mxu0 %v736
    %3194 = vmatmul.mubr.bf16.gmra.mxu0 %v735
    %v3195 = vpop.f32.mrf.mxu0
    %v3196 = vadd.f32 0.0, %v3195
    %v3197 = vpop.f32.mrf.mxu0
    %v3198 = vpop.f32.mrf.mxu0
    %v3199 = vadd.f32 0.0, %v3198
    %v3200 = vpop.f32.mrf.mxu0
    %3201 = vmatprep.mubr.bf16.mxu0 %v738
    %3202 = vmatmul.mubr.bf16.gmra.mxu0 %v737
    %v3203 = vpop.f32.mrf.mxu0
    %v3204 = vadd.f32 0.0, %v3203
    %v3205 = vpop.f32.mrf.mxu0
    %v3206 = vpop.f32.mrf.mxu0
    %v3207 = vadd.f32 0.0, %v3206
    %v3208 = vpop.f32.mrf.mxu0
    %3209 = vmatprep.mubr.bf16.mxu0 %v740
    %3210 = vmatmul.mubr.bf16.gmra.mxu0 %v739
    %v3211 = vpop.f32.mrf.mxu0
    %v3212 = vadd.f32 0.0, %v3211
    %v3213 = vpop.f32.mrf.mxu0
    %v3214 = vpop.f32.mrf.mxu0
    %v3215 = vadd.f32 0.0, %v3214
    %v3216 = vpop.f32.mrf.mxu0
    %3217 = vmatprep.mubr.bf16.mxu0 %v742
    %3218 = vmatmul.mubr.bf16.gmra.mxu0 %v741
    %v3219 = vpop.f32.mrf.mxu0
    %v3220 = vadd.f32 0.0, %v3219
    %v3221 = vpop.f32.mrf.mxu0
    %v3222 = vpop.f32.mrf.mxu0
    %v3223 = vadd.f32 0.0, %v3222
    %v3224 = vpop.f32.mrf.mxu0
    %3225 = vmatprep.mubr.bf16.mxu0 %v744
    %3226 = vmatmul.mubr.bf16.gmra.mxu0 %v743
    %v3227 = vpop.f32.mrf.mxu0
    %v3228 = vadd.f32 0.0, %v3227
    %v3229 = vpop.f32.mrf.mxu0
    %v3230 = vpop.f32.mrf.mxu0
    %v3231 = vadd.f32 0.0, %v3230
    %v3232 = vpop.f32.mrf.mxu0
    %3233 = vmatprep.mubr.bf16.mxu0 %v746
    %3234 = vmatmul.mubr.bf16.gmra.mxu0 %v745
    %v3235 = vpop.f32.mrf.mxu0
    %v3236 = vadd.f32 0.0, %v3235
    %v3237 = vpop.f32.mrf.mxu0
    %v3238 = vpop.f32.mrf.mxu0
    %v3239 = vadd.f32 0.0, %v3238
    %v3240 = vpop.f32.mrf.mxu0
    %3241 = vmatprep.mubr.bf16.mxu0 %v748
    %3242 = vmatmul.mubr.bf16.gmra.mxu0 %v747
    %v3243 = vpop.f32.mrf.mxu0
    %v3244 = vadd.f32 0.0, %v3243
    %v3245 = vpop.f32.mrf.mxu0
    %v3246 = vpop.f32.mrf.mxu0
    %v3247 = vadd.f32 0.0, %v3246
    %v3248 = vpop.f32.mrf.mxu0
    %3249 = vmatprep.mubr.bf16.mxu0 %v750
    %3250 = vmatmul.mubr.bf16.gmra.mxu0 %v749
    %v3251 = vpop.f32.mrf.mxu0
    %v3252 = vadd.f32 0.0, %v3251
    %v3253 = vpop.f32.mrf.mxu0
    %v3254 = vpop.f32.mrf.mxu0
    %v3255 = vadd.f32 0.0, %v3254
    %v3256 = vpop.f32.mrf.mxu0
    %3257 = vmatprep.mubr.bf16.mxu0 %v752
    %3258 = vmatmul.mubr.bf16.gmra.mxu0 %v751
    %v3259 = vpop.f32.mrf.mxu0
    %v3260 = vadd.f32 0.0, %v3259
    %v3261 = vpop.f32.mrf.mxu0
    %v3262 = vpop.f32.mrf.mxu0
    %v3263 = vadd.f32 0.0, %v3262
    %v3264 = vpop.f32.mrf.mxu0
    %3265 = vmatprep.mubr.bf16.mxu0 %v754
    %3266 = vmatmul.mubr.bf16.gmra.mxu0 %v753
    %v3267 = vpop.f32.mrf.mxu0
    %v3268 = vadd.f32 0.0, %v3267
    %v3269 = vpop.f32.mrf.mxu0
    %v3270 = vpop.f32.mrf.mxu0
    %v3271 = vadd.f32 0.0, %v3270
    %v3272 = vpop.f32.mrf.mxu0
    %3273 = vmatprep.mubr.bf16.mxu0 %v756
    %3274 = vmatmul.mubr.bf16.gmra.mxu0 %v755
    %v3275 = vpop.f32.mrf.mxu0
    %v3276 = vadd.f32 0.0, %v3275
    %v3277 = vpop.f32.mrf.mxu0
    %v3278 = vpop.f32.mrf.mxu0
    %v3279 = vadd.f32 0.0, %v3278
    %v3280 = vpop.f32.mrf.mxu0
    %3281 = vmatprep.mubr.bf16.mxu0 %v758
    %3282 = vmatmul.mubr.bf16.gmra.mxu0 %v757
    %v3283 = vpop.f32.mrf.mxu0
    %v3284 = vadd.f32 0.0, %v3283
    %v3285 = vpop.f32.mrf.mxu0
    %v3286 = vpop.f32.mrf.mxu0
    %v3287 = vadd.f32 0.0, %v3286
    %v3288 = vpop.f32.mrf.mxu0
    %3289 = vmatprep.mubr.bf16.mxu0 %v760
    %3290 = vmatmul.mubr.bf16.gmra.mxu0 %v759
    %v3291 = vpop.f32.mrf.mxu0
    %v3292 = vadd.f32 0.0, %v3291
    %v3293 = vpop.f32.mrf.mxu0
    %v3294 = vpop.f32.mrf.mxu0
    %v3295 = vadd.f32 0.0, %v3294
    %v3296 = vpop.f32.mrf.mxu0
    %3297 = vmatprep.mubr.bf16.mxu0 %v762
    %3298 = vmatmul.mubr.bf16.gmra.mxu0 %v761
    %v3299 = vpop.f32.mrf.mxu0
    %v3300 = vadd.f32 0.0, %v3299
    %v3301 = vpop.f32.mrf.mxu0
    %v3302 = vpop.f32.mrf.mxu0
    %v3303 = vadd.f32 0.0, %v3302
    %v3304 = vpop.f32.mrf.mxu0
    %3305 = vdwg.mxu0
    %v3306 = vld [vmem:[#allocation13] sm:$0xff]
    %v3307 = vld [vmem:[#allocation13 + $0x8] sm:$0xff]
    %v3308 = vld [vmem:[#allocation13 + $0x10] sm:$0xff]
    %v3309 = vld [vmem:[#allocation13 + $0x18] sm:$0xff]
    %v3310 = vld [vmem:[#allocation15] sm:$0x1]
    %v3312 = vlaneseq
    %v3313 = vshrl.u32 %v3312, 7
    %v3314 = vsub.s32 0, %v3313
    %v3315 = vrot.slane %v3310, %v3314
    %v3318 = vsel %vm1361, %v3180, 0
    %v3321 = vsel %vm1361, %v3183, 0
    %v3324 = vsel %vm1361, %v3188, 0
    %v3327 = vsel %vm1361, %v3191, 0
    %v3330 = vsel %vm1361, %v3196, 0
    %v3333 = vsel %vm1361, %v3199, 0
    %v3336 = vsel %vm1361, %v3204, 0
    %v3339 = vsel %vm1361, %v3207, 0
    %v3342 = vsel %vm1361, %v3212, 0
    %v3345 = vsel %vm1361, %v3215, 0
    %v3348 = vsel %vm1361, %v3220, 0
    %v3351 = vsel %vm1361, %v3223, 0
    %v3354 = vsel %vm1361, %v3228, 0
    %v3357 = vsel %vm1361, %v3231, 0
    %v3360 = vsel %vm1361, %v3236, 0
    %v3363 = vsel %vm1361, %v3239, 0
    %v3366 = vsel %vm1361, %v3244, 0
    %v3369 = vsel %vm1361, %v3247, 0
    %v3372 = vsel %vm1361, %v3252, 0
    %v3375 = vsel %vm1361, %v3255, 0
    %v3378 = vsel %vm1361, %v3260, 0
    %v3381 = vsel %vm1361, %v3263, 0
    %v3384 = vsel %vm1361, %v3268, 0
    %v3387 = vsel %vm1361, %v3271, 0
    %v3390 = vsel %vm1361, %v3276, 0
    %v3393 = vsel %vm1361, %v3279, 0
    %v3396 = vsel %vm1361, %v3284, 0
    %v3399 = vsel %vm1361, %v3287, 0
    %v3402 = vsel %vm1361, %v3292, 0
    %v3405 = vsel %vm1361, %v3295, 0
    %v3408 = vsel %vm1361, %v3300, 0
    %v3411 = vsel %vm1361, %v3303, 0
    %3413 = vmatprep.subr.mxu0 0.0
    %3414 = vmatpush1.msra.mxu0 0.0
    %3415 = vmatprep.subr.mxu0 0.0
    %3416 = vmatpush1.msra.mxu0 0.0
    %3417 = vmatprep.subr.mxu0 0.0
    %3418 = vmatpush1.msra.mxu0 0.0
    %3419 = vmatprep.subr.mxu0 0.0
    %3420 = vmatpush1.msra.mxu0 0.0
    %3421 = vmatprep.subr.mxu0 0.0
    %3422 = vmatpush1.msra.mxu0 0.0
    %3423 = vmatprep.subr.mxu0 0.0
    %3424 = vmatpush1.msra.mxu0 0.0
    %3425 = vmatprep.subr.mxu0 0.0
    %3426 = vmatpush1.msra.mxu0 0.0
    %3427 = vmatprep.subr.mxu0 0.0
    %3428 = vmatpush1.msra.mxu0 0.0
    %3429 = vmatprep.subr.mxu0 0.0
    %3430 = vmatpush1.msra.mxu0 0.0
    %3431 = vmatprep.subr.mxu0 0.0
    %3432 = vmatpush1.msra.mxu0 0.0
    %3433 = vmatprep.subr.mxu0 0.0
    %3434 = vmatpush1.msra.mxu0 0.0
    %3435 = vmatprep.subr.mxu0 0.0
    %3436 = vmatpush1.msra.mxu0 0.0
    %3437 = vmatprep.subr.mxu0 0.0
    %3438 = vmatpush1.msra.mxu0 %v3309
    %3439 = vmatprep.subr.mxu0 0.0
    %3440 = vmatpush1.msra.mxu0 %v3308
    %3441 = vmatprep.subr.mxu0 0.0
    %3442 = vmatpush1.msra.mxu0 %v3307
    %3443 = vmatprep.subr.mxu0 0.0
    %3444 = vmatpush1.msra.mxu0 %v3306
    %3445 = vmatprep.subr.mxu0 0.0
    %3446 = vmatpush2.msra.mxu0 0.0
    %3447 = vmatprep.subr.mxu0 0.0
    %3448 = vmatpush2.msra.mxu0 0.0
    %3449 = vmatprep.subr.mxu0 0.0
    %3450 = vmatpush2.msra.mxu0 0.0
    %3451 = vmatprep.subr.mxu0 0.0
    %3452 = vmatpush2.msra.mxu0 0.0
    %3453 = vmatprep.subr.mxu0 0.0
    %3454 = vmatpush2.msra.mxu0 0.0
    %3455 = vmatprep.subr.mxu0 0.0
    %3456 = vmatpush2.msra.mxu0 0.0
    %3457 = vmatprep.subr.mxu0 0.0
    %3458 = vmatpush2.msra.mxu0 0.0
    %3459 = vmatprep.subr.mxu0 0.0
    %3460 = vmatpush2.msra.mxu0 0.0
    %3461 = vmatprep.subr.mxu0 0.0
    %3462 = vmatpush2.msra.mxu0 0.0
    %3463 = vmatprep.subr.mxu0 0.0
    %3464 = vmatpush2.msra.mxu0 0.0
    %3465 = vmatprep.subr.mxu0 0.0
    %3466 = vmatpush2.msra.mxu0 0.0
    %3467 = vmatprep.subr.mxu0 0.0
    %3468 = vmatpush2.msra.mxu0 0.0
    %3469 = vmatprep.subr.mxu0 0.0
    %3470 = vmatpush2.msra.mxu0 0.0
    %3471 = vmatprep.subr.mxu0 0.0
    %3472 = vmatpush2.msra.mxu0 0.0
    %3473 = vmatprep.subr.mxu0 0.0
    %3474 = vmatpush2.msra.mxu0 0.0
    %3475 = vmatprep.subr.mxu0 0.0
    %3476 = vmatpush2.msra.mxu0 0.0
    %3477 = vmatprep.mubr.f32.mxu0 0.0
    %3478 = vmatmul.mubr.f32.gmra.mxu0 %v3318
    %v3479 = vpop.f32.mrf.mxu0
    %v3480 = vadd.f32 %v3315, %v3479
    %v3481 = vpop.f32.mrf.mxu0
    %3482 = vmatprep.mubr.f32.mxu0 0.0
    %3483 = vmatmul.mubr.f32.gmra.mxu0 %v3321
    %v3484 = vpop.f32.mrf.mxu0
    %v3485 = vadd.f32 %v3315, %v3484
    %v3486 = vpop.f32.mrf.mxu0
    %3487 = vmatprep.mubr.f32.mxu0 0.0
    %3488 = vmatmul.mubr.f32.gmra.mxu0 %v3324
    %v3489 = vpop.f32.mrf.mxu0
    %v3490 = vadd.f32 %v3315, %v3489
    %v3491 = vpop.f32.mrf.mxu0
    %3492 = vmatprep.mubr.f32.mxu0 0.0
    %3493 = vmatmul.mubr.f32.gmra.mxu0 %v3327
    %v3494 = vpop.f32.mrf.mxu0
    %v3495 = vadd.f32 %v3315, %v3494
    %v3496 = vpop.f32.mrf.mxu0
    %3497 = vmatprep.mubr.f32.mxu0 0.0
    %3498 = vmatmul.mubr.f32.gmra.mxu0 %v3330
    %v3499 = vpop.f32.mrf.mxu0
    %v3500 = vadd.f32 %v3315, %v3499
    %v3501 = vpop.f32.mrf.mxu0
    %3502 = vmatprep.mubr.f32.mxu0 0.0
    %3503 = vmatmul.mubr.f32.gmra.mxu0 %v3333
    %v3504 = vpop.f32.mrf.mxu0
    %v3505 = vadd.f32 %v3315, %v3504
    %v3506 = vpop.f32.mrf.mxu0
    %3507 = vmatprep.mubr.f32.mxu0 0.0
    %3508 = vmatmul.mubr.f32.gmra.mxu0 %v3336
    %v3509 = vpop.f32.mrf.mxu0
    %v3510 = vadd.f32 %v3315, %v3509
    %v3511 = vpop.f32.mrf.mxu0
    %3512 = vmatprep.mubr.f32.mxu0 0.0
    %3513 = vmatmul.mubr.f32.gmra.mxu0 %v3339
    %v3514 = vpop.f32.mrf.mxu0
    %v3515 = vadd.f32 %v3315, %v3514
    %v3516 = vpop.f32.mrf.mxu0
    %3517 = vmatprep.mubr.f32.mxu0 0.0
    %3518 = vmatmul.mubr.f32.gmra.mxu0 %v3342
    %v3519 = vpop.f32.mrf.mxu0
    %v3520 = vadd.f32 %v3315, %v3519
    %v3521 = vpop.f32.mrf.mxu0
    %3522 = vmatprep.mubr.f32.mxu0 0.0
    %3523 = vmatmul.mubr.f32.gmra.mxu0 %v3345
    %v3524 = vpop.f32.mrf.mxu0
    %v3525 = vadd.f32 %v3315, %v3524
    %v3526 = vpop.f32.mrf.mxu0
    %3527 = vmatprep.mubr.f32.mxu0 0.0
    %3528 = vmatmul.mubr.f32.gmra.mxu0 %v3348
    %v3529 = vpop.f32.mrf.mxu0
    %v3530 = vadd.f32 %v3315, %v3529
    %v3531 = vpop.f32.mrf.mxu0
    %3532 = vmatprep.mubr.f32.mxu0 0.0
    %3533 = vmatmul.mubr.f32.gmra.mxu0 %v3351
    %v3534 = vpop.f32.mrf.mxu0
    %v3535 = vadd.f32 %v3315, %v3534
    %v3536 = vpop.f32.mrf.mxu0
    %3537 = vmatprep.mubr.f32.mxu0 0.0
    %3538 = vmatmul.mubr.f32.gmra.mxu0 %v3354
    %v3539 = vpop.f32.mrf.mxu0
    %v3540 = vadd.f32 %v3315, %v3539
    %v3541 = vpop.f32.mrf.mxu0
    %3542 = vmatprep.mubr.f32.mxu0 0.0
    %3543 = vmatmul.mubr.f32.gmra.mxu0 %v3357
    %v3544 = vpop.f32.mrf.mxu0
    %v3545 = vadd.f32 %v3315, %v3544
    %v3546 = vpop.f32.mrf.mxu0
    %3547 = vmatprep.mubr.f32.mxu0 0.0
    %3548 = vmatmul.mubr.f32.gmra.mxu0 %v3360
    %v3549 = vpop.f32.mrf.mxu0
    %v3550 = vadd.f32 %v3315, %v3549
    %v3551 = vpop.f32.mrf.mxu0
    %3552 = vmatprep.mubr.f32.mxu0 0.0
    %3553 = vmatmul.mubr.f32.gmra.mxu0 %v3363
    %v3554 = vpop.f32.mrf.mxu0
    %v3555 = vadd.f32 %v3315, %v3554
    %v3556 = vpop.f32.mrf.mxu0
    %3557 = vmatprep.mubr.f32.mxu0 0.0
    %3558 = vmatmul.mubr.f32.gmra.mxu0 %v3366
    %v3559 = vpop.f32.mrf.mxu0
    %v3560 = vadd.f32 %v3315, %v3559
    %v3561 = vpop.f32.mrf.mxu0
    %3562 = vmatprep.mubr.f32.mxu0 0.0
    %3563 = vmatmul.mubr.f32.gmra.mxu0 %v3369
    %v3564 = vpop.f32.mrf.mxu0
    %v3565 = vadd.f32 %v3315, %v3564
    %v3566 = vpop.f32.mrf.mxu0
    %3567 = vmatprep.mubr.f32.mxu0 0.0
    %3568 = vmatmul.mubr.f32.gmra.mxu0 %v3372
    %v3569 = vpop.f32.mrf.mxu0
    %v3570 = vadd.f32 %v3315, %v3569
    %v3571 = vpop.f32.mrf.mxu0
    %3572 = vmatprep.mubr.f32.mxu0 0.0
    %3573 = vmatmul.mubr.f32.gmra.mxu0 %v3375
    %v3574 = vpop.f32.mrf.mxu0
    %v3575 = vadd.f32 %v3315, %v3574
    %v3576 = vpop.f32.mrf.mxu0
    %3577 = vmatprep.mubr.f32.mxu0 0.0
    %3578 = vmatmul.mubr.f32.gmra.mxu0 %v3378
    %v3579 = vpop.f32.mrf.mxu0
    %v3580 = vadd.f32 %v3315, %v3579
    %v3581 = vpop.f32.mrf.mxu0
    %3582 = vmatprep.mubr.f32.mxu0 0.0
    %3583 = vmatmul.mubr.f32.gmra.mxu0 %v3381
    %v3584 = vpop.f32.mrf.mxu0
    %v3585 = vadd.f32 %v3315, %v3584
    %v3586 = vpop.f32.mrf.mxu0
    %3587 = vmatprep.mubr.f32.mxu0 0.0
    %3588 = vmatmul.mubr.f32.gmra.mxu0 %v3384
    %v3589 = vpop.f32.mrf.mxu0
    %v3590 = vadd.f32 %v3315, %v3589
    %v3591 = vpop.f32.mrf.mxu0
    %3592 = vmatprep.mubr.f32.mxu0 0.0
    %3593 = vmatmul.mubr.f32.gmra.mxu0 %v3387
    %v3594 = vpop.f32.mrf.mxu0
    %v3595 = vadd.f32 %v3315, %v3594
    %v3596 = vpop.f32.mrf.mxu0
    %3597 = vmatprep.mubr.f32.mxu0 0.0
    %3598 = vmatmul.mubr.f32.gmra.mxu0 %v3390
    %v3599 = vpop.f32.mrf.mxu0
    %v3600 = vadd.f32 %v3315, %v3599
    %v3601 = vpop.f32.mrf.mxu0
    %3602 = vmatprep.mubr.f32.mxu0 0.0
    %3603 = vmatmul.mubr.f32.gmra.mxu0 %v3393
    %v3604 = vpop.f32.mrf.mxu0
    %v3605 = vadd.f32 %v3315, %v3604
    %v3606 = vpop.f32.mrf.mxu0
    %3607 = vmatprep.mubr.f32.mxu0 0.0
    %3608 = vmatmul.mubr.f32.gmra.mxu0 %v3396
    %v3609 = vpop.f32.mrf.mxu0
    %v3610 = vadd.f32 %v3315, %v3609
    %v3611 = vpop.f32.mrf.mxu0
    %3612 = vmatprep.mubr.f32.mxu0 0.0
    %3613 = vmatmul.mubr.f32.gmra.mxu0 %v3399
    %v3614 = vpop.f32.mrf.mxu0
    %v3615 = vadd.f32 %v3315, %v3614
    %v3616 = vpop.f32.mrf.mxu0
    %3617 = vmatprep.mubr.f32.mxu0 0.0
    %3618 = vmatmul.mubr.f32.gmra.mxu0 %v3402
    %v3619 = vpop.f32.mrf.mxu0
    %v3620 = vadd.f32 %v3315, %v3619
    %v3621 = vpop.f32.mrf.mxu0
    %3622 = vmatprep.mubr.f32.mxu0 0.0
    %3623 = vmatmul.mubr.f32.gmra.mxu0 %v3405
    %v3624 = vpop.f32.mrf.mxu0
    %v3625 = vadd.f32 %v3315, %v3624
    %v3626 = vpop.f32.mrf.mxu0
    %3627 = vmatprep.mubr.f32.mxu0 0.0
    %3628 = vmatmul.mubr.f32.gmra.mxu0 %v3408
    %v3629 = vpop.f32.mrf.mxu0
    %v3630 = vadd.f32 %v3315, %v3629
    %v3631 = vpop.f32.mrf.mxu0
    %3632 = vmatprep.mubr.f32.mxu0 0.0
    %3633 = vmatmul.mubr.f32.gmra.mxu0 %v3411
    %v3634 = vpop.f32.mrf.mxu0
    %v3635 = vadd.f32 %v3315, %v3634
    %v3636 = vpop.f32.mrf.mxu0
    %3637 = vdwg.mxu0
    %v3638 = vmax.f32 %v3480, 0.0
    %v3639 = vmax.f32 %v3485, 0.0
    %v3640 = vmax.f32 %v3490, 0.0
    %v3641 = vmax.f32 %v3495, 0.0
    %v3642 = vmax.f32 %v3500, 0.0
    %v3643 = vmax.f32 %v3505, 0.0
    %v3644 = vmax.f32 %v3510, 0.0
    %v3645 = vmax.f32 %v3515, 0.0
    %v3646 = vmax.f32 %v3520, 0.0
    %v3647 = vmax.f32 %v3525, 0.0
    %v3648 = vmax.f32 %v3530, 0.0
    %v3649 = vmax.f32 %v3535, 0.0
    %v3650 = vmax.f32 %v3540, 0.0
    %v3651 = vmax.f32 %v3545, 0.0
    %v3652 = vmax.f32 %v3550, 0.0
    %v3653 = vmax.f32 %v3555, 0.0
    %v3654 = vmax.f32 %v3560, 0.0
    %v3655 = vmax.f32 %v3565, 0.0
    %v3656 = vmax.f32 %v3570, 0.0
    %v3657 = vmax.f32 %v3575, 0.0
    %v3658 = vmax.f32 %v3580, 0.0
    %v3659 = vmax.f32 %v3585, 0.0
    %v3660 = vmax.f32 %v3590, 0.0
    %v3661 = vmax.f32 %v3595, 0.0
    %v3662 = vmax.f32 %v3600, 0.0
    %v3663 = vmax.f32 %v3605, 0.0
    %v3664 = vmax.f32 %v3610, 0.0
    %v3665 = vmax.f32 %v3615, 0.0
    %v3666 = vmax.f32 %v3620, 0.0
    %v3667 = vmax.f32 %v3625, 0.0
    %v3668 = vmax.f32 %v3630, 0.0
    %v3669 = vmax.f32 %v3635, 0.0
    %v3670 = vadd.f32 %v3638, %v2971
    %v3671 = vadd.f32 %v3639, %v2976
    %v3672 = vadd.f32 %v3640, %v2981
    %v3673 = vadd.f32 %v3641, %v2986
    %v3674 = vadd.f32 %v3642, %v2991
    %v3675 = vadd.f32 %v3643, %v2996
    %v3676 = vadd.f32 %v3644, %v3001
    %v3677 = vadd.f32 %v3645, %v3006
    %v3678 = vadd.f32 %v3646, %v3011
    %v3679 = vadd.f32 %v3647, %v3016
    %v3680 = vadd.f32 %v3648, %v3021
    %v3681 = vadd.f32 %v3649, %v3026
    %v3682 = vadd.f32 %v3650, %v3031
    %v3683 = vadd.f32 %v3651, %v3036
    %v3684 = vadd.f32 %v3652, %v3041
    %v3685 = vadd.f32 %v3653, %v3046
    %v3686 = vadd.f32 %v3654, %v3051
    %v3687 = vadd.f32 %v3655, %v3056
    %v3688 = vadd.f32 %v3656, %v3061
    %v3689 = vadd.f32 %v3657, %v3066
    %v3690 = vadd.f32 %v3658, %v3071
    %v3691 = vadd.f32 %v3659, %v3076
    %v3692 = vadd.f32 %v3660, %v3081
    %v3693 = vadd.f32 %v3661, %v3086
    %v3694 = vadd.f32 %v3662, %v3091
    %v3695 = vadd.f32 %v3663, %v3096
    %v3696 = vadd.f32 %v3664, %v3101
    %v3697 = vadd.f32 %v3665, %v3106
    %v3698 = vadd.f32 %v3666, %v3111
    %v3699 = vadd.f32 %v3667, %v3116
    %v3700 = vadd.f32 %v3668, %v3121
    %v3701 = vadd.f32 %v3669, %v3126
    %v3702 = vld [vmem:[%s18] sm:$0xff]
    %v3703 = vld [vmem:[%s18 + $0x8] sm:$0xff]
    %v3704 = vld [vmem:[%s18 + $0x10] sm:$0xff]
    %v3705 = vld [vmem:[%s18 + $0x18] sm:$0xff]
    %v3706 = vld [vmem:[#allocation21] sm:$0x1]
    %v3708 = vlaneseq
    %v3709 = vshrl.u32 %v3708, 7
    %v3710 = vsub.s32 0, %v3709
    %v3711 = vrot.slane %v3706, %v3710
    %v3714 = vsel %vm1361, %v3670, 0
    %v3717 = vsel %vm1361, %v3671, 0
    %v3720 = vsel %vm1361, %v3672, 0
    %v3723 = vsel %vm1361, %v3673, 0
    %v3726 = vsel %vm1361, %v3674, 0
    %v3729 = vsel %vm1361, %v3675, 0
    %v3732 = vsel %vm1361, %v3676, 0
    %v3735 = vsel %vm1361, %v3677, 0
    %v3738 = vsel %vm1361, %v3678, 0
    %v3741 = vsel %vm1361, %v3679, 0
    %v3744 = vsel %vm1361, %v3680, 0
    %v3747 = vsel %vm1361, %v3681, 0
    %v3750 = vsel %vm1361, %v3682, 0
    %v3753 = vsel %vm1361, %v3683, 0
    %v3756 = vsel %vm1361, %v3684, 0
    %v3759 = vsel %vm1361, %v3685, 0
    %v3762 = vsel %vm1361, %v3686, 0
    %v3765 = vsel %vm1361, %v3687, 0
    %v3768 = vsel %vm1361, %v3688, 0
    %v3771 = vsel %vm1361, %v3689, 0
    %v3774 = vsel %vm1361, %v3690, 0
    %v3777 = vsel %vm1361, %v3691, 0
    %v3780 = vsel %vm1361, %v3692, 0
    %v3783 = vsel %vm1361, %v3693, 0
    %v3786 = vsel %vm1361, %v3694, 0
    %v3789 = vsel %vm1361, %v3695, 0
    %v3792 = vsel %vm1361, %v3696, 0
    %v3795 = vsel %vm1361, %v3697, 0
    %v3798 = vsel %vm1361, %v3698, 0
    %v3801 = vsel %vm1361, %v3699, 0
    %v3804 = vsel %vm1361, %v3700, 0
    %v3807 = vsel %vm1361, %v3701, 0
    %3809 = vmatprep.subr.mxu0 0.0
    %3810 = vmatpush1.msra.mxu0 0.0
    %3811 = vmatprep.subr.mxu0 0.0
    %3812 = vmatpush1.msra.mxu0 0.0
    %3813 = vmatprep.subr.mxu0 0.0
    %3814 = vmatpush1.msra.mxu0 0.0
    %3815 = vmatprep.subr.mxu0 0.0
    %3816 = vmatpush1.msra.mxu0 0.0
    %3817 = vmatprep.subr.mxu0 0.0
    %3818 = vmatpush1.msra.mxu0 0.0
    %3819 = vmatprep.subr.mxu0 0.0
    %3820 = vmatpush1.msra.mxu0 0.0
    %3821 = vmatprep.subr.mxu0 0.0
    %3822 = vmatpush1.msra.mxu0 0.0
    %3823 = vmatprep.subr.mxu0 0.0
    %3824 = vmatpush1.msra.mxu0 0.0
    %3825 = vmatprep.subr.mxu0 0.0
    %3826 = vmatpush1.msra.mxu0 0.0
    %3827 = vmatprep.subr.mxu0 0.0
    %3828 = vmatpush1.msra.mxu0 0.0
    %3829 = vmatprep.subr.mxu0 0.0
    %3830 = vmatpush1.msra.mxu0 0.0
    %3831 = vmatprep.subr.mxu0 0.0
    %3832 = vmatpush1.msra.mxu0 0.0
    %3833 = vmatprep.subr.mxu0 0.0
    %3834 = vmatpush1.msra.mxu0 %v3705
    %3835 = vmatprep.subr.mxu0 0.0
    %3836 = vmatpush1.msra.mxu0 %v3704
    %3837 = vmatprep.subr.mxu0 0.0
    %3838 = vmatpush1.msra.mxu0 %v3703
    %3839 = vmatprep.subr.mxu0 0.0
    %3840 = vmatpush1.msra.mxu0 %v3702
    %3841 = vmatprep.subr.mxu0 0.0
    %3842 = vmatpush2.msra.mxu0 0.0
    %3843 = vmatprep.subr.mxu0 0.0
    %3844 = vmatpush2.msra.mxu0 0.0
    %3845 = vmatprep.subr.mxu0 0.0
    %3846 = vmatpush2.msra.mxu0 0.0
    %3847 = vmatprep.subr.mxu0 0.0
    %3848 = vmatpush2.msra.mxu0 0.0
    %3849 = vmatprep.subr.mxu0 0.0
    %3850 = vmatpush2.msra.mxu0 0.0
    %3851 = vmatprep.subr.mxu0 0.0
    %3852 = vmatpush2.msra.mxu0 0.0
    %3853 = vmatprep.subr.mxu0 0.0
    %3854 = vmatpush2.msra.mxu0 0.0
    %3855 = vmatprep.subr.mxu0 0.0
    %3856 = vmatpush2.msra.mxu0 0.0
    %3857 = vmatprep.subr.mxu0 0.0
    %3858 = vmatpush2.msra.mxu0 0.0
    %3859 = vmatprep.subr.mxu0 0.0
    %3860 = vmatpush2.msra.mxu0 0.0
    %3861 = vmatprep.subr.mxu0 0.0
    %3862 = vmatpush2.msra.mxu0 0.0
    %3863 = vmatprep.subr.mxu0 0.0
    %3864 = vmatpush2.msra.mxu0 0.0
    %3865 = vmatprep.subr.mxu0 0.0
    %3866 = vmatpush2.msra.mxu0 0.0
    %3867 = vmatprep.subr.mxu0 0.0
    %3868 = vmatpush2.msra.mxu0 0.0
    %3869 = vmatprep.subr.mxu0 0.0
    %3870 = vmatpush2.msra.mxu0 0.0
    %3871 = vmatprep.subr.mxu0 0.0
    %3872 = vmatpush2.msra.mxu0 0.0
    %3873 = vmatprep.mubr.f32.mxu0 0.0
    %3874 = vmatmul.mubr.f32.gmra.mxu0 %v3714
    %v3875 = vpop.f32.mrf.mxu0
    %v3876 = vadd.f32 %v3711, %v3875
    %v3877 = vpop.f32.mrf.mxu0
    %3878 = vmatprep.mubr.f32.mxu0 0.0
    %3879 = vmatmul.mubr.f32.gmra.mxu0 %v3717
    %v3880 = vpop.f32.mrf.mxu0
    %v3881 = vadd.f32 %v3711, %v3880
    %v3882 = vpop.f32.mrf.mxu0
    %3883 = vmatprep.mubr.f32.mxu0 0.0
    %3884 = vmatmul.mubr.f32.gmra.mxu0 %v3720
    %v3885 = vpop.f32.mrf.mxu0
    %v3886 = vadd.f32 %v3711, %v3885
    %v3887 = vpop.f32.mrf.mxu0
    %3888 = vmatprep.mubr.f32.mxu0 0.0
    %3889 = vmatmul.mubr.f32.gmra.mxu0 %v3723
    %v3890 = vpop.f32.mrf.mxu0
    %v3891 = vadd.f32 %v3711, %v3890
    %v3892 = vpop.f32.mrf.mxu0
    %3893 = vmatprep.mubr.f32.mxu0 0.0
    %3894 = vmatmul.mubr.f32.gmra.mxu0 %v3726
    %v3895 = vpop.f32.mrf.mxu0
    %v3896 = vadd.f32 %v3711, %v3895
    %v3897 = vpop.f32.mrf.mxu0
    %3898 = vmatprep.mubr.f32.mxu0 0.0
    %3899 = vmatmul.mubr.f32.gmra.mxu0 %v3729
    %v3900 = vpop.f32.mrf.mxu0
    %v3901 = vadd.f32 %v3711, %v3900
    %v3902 = vpop.f32.mrf.mxu0
    %3903 = vmatprep.mubr.f32.mxu0 0.0
    %3904 = vmatmul.mubr.f32.gmra.mxu0 %v3732
    %v3905 = vpop.f32.mrf.mxu0
    %v3906 = vadd.f32 %v3711, %v3905
    %v3907 = vpop.f32.mrf.mxu0
    %3908 = vmatprep.mubr.f32.mxu0 0.0
    %3909 = vmatmul.mubr.f32.gmra.mxu0 %v3735
    %v3910 = vpop.f32.mrf.mxu0
    %v3911 = vadd.f32 %v3711, %v3910
    %v3912 = vpop.f32.mrf.mxu0
    %3913 = vmatprep.mubr.f32.mxu0 0.0
    %3914 = vmatmul.mubr.f32.gmra.mxu0 %v3738
    %v3915 = vpop.f32.mrf.mxu0
    %v3916 = vadd.f32 %v3711, %v3915
    %v3917 = vpop.f32.mrf.mxu0
    %3918 = vmatprep.mubr.f32.mxu0 0.0
    %3919 = vmatmul.mubr.f32.gmra.mxu0 %v3741
    %v3920 = vpop.f32.mrf.mxu0
    %v3921 = vadd.f32 %v3711, %v3920
    %v3922 = vpop.f32.mrf.mxu0
    %3923 = vmatprep.mubr.f32.mxu0 0.0
    %3924 = vmatmul.mubr.f32.gmra.mxu0 %v3744
    %v3925 = vpop.f32.mrf.mxu0
    %v3926 = vadd.f32 %v3711, %v3925
    %v3927 = vpop.f32.mrf.mxu0
    %3928 = vmatprep.mubr.f32.mxu0 0.0
    %3929 = vmatmul.mubr.f32.gmra.mxu0 %v3747
    %v3930 = vpop.f32.mrf.mxu0
    %v3931 = vadd.f32 %v3711, %v3930
    %v3932 = vpop.f32.mrf.mxu0
    %3933 = vmatprep.mubr.f32.mxu0 0.0
    %3934 = vmatmul.mubr.f32.gmra.mxu0 %v3750
    %v3935 = vpop.f32.mrf.mxu0
    %v3936 = vadd.f32 %v3711, %v3935
    %v3937 = vpop.f32.mrf.mxu0
    %3938 = vmatprep.mubr.f32.mxu0 0.0
    %3939 = vmatmul.mubr.f32.gmra.mxu0 %v3753
    %v3940 = vpop.f32.mrf.mxu0
    %v3941 = vadd.f32 %v3711, %v3940
    %v3942 = vpop.f32.mrf.mxu0
    %3943 = vmatprep.mubr.f32.mxu0 0.0
    %3944 = vmatmul.mubr.f32.gmra.mxu0 %v3756
    %v3945 = vpop.f32.mrf.mxu0
    %v3946 = vadd.f32 %v3711, %v3945
    %v3947 = vpop.f32.mrf.mxu0
    %3948 = vmatprep.mubr.f32.mxu0 0.0
    %3949 = vmatmul.mubr.f32.gmra.mxu0 %v3759
    %v3950 = vpop.f32.mrf.mxu0
    %v3951 = vadd.f32 %v3711, %v3950
    %v3952 = vpop.f32.mrf.mxu0
    %3953 = vmatprep.mubr.f32.mxu0 0.0
    %3954 = vmatmul.mubr.f32.gmra.mxu0 %v3762
    %v3955 = vpop.f32.mrf.mxu0
    %v3956 = vadd.f32 %v3711, %v3955
    %v3957 = vpop.f32.mrf.mxu0
    %3958 = vmatprep.mubr.f32.mxu0 0.0
    %3959 = vmatmul.mubr.f32.gmra.mxu0 %v3765
    %v3960 = vpop.f32.mrf.mxu0
    %v3961 = vadd.f32 %v3711, %v3960
    %v3962 = vpop.f32.mrf.mxu0
    %3963 = vmatprep.mubr.f32.mxu0 0.0
    %3964 = vmatmul.mubr.f32.gmra.mxu0 %v3768
    %v3965 = vpop.f32.mrf.mxu0
    %v3966 = vadd.f32 %v3711, %v3965
    %v3967 = vpop.f32.mrf.mxu0
    %3968 = vmatprep.mubr.f32.mxu0 0.0
    %3969 = vmatmul.mubr.f32.gmra.mxu0 %v3771
    %v3970 = vpop.f32.mrf.mxu0
    %v3971 = vadd.f32 %v3711, %v3970
    %v3972 = vpop.f32.mrf.mxu0
    %3973 = vmatprep.mubr.f32.mxu0 0.0
    %3974 = vmatmul.mubr.f32.gmra.mxu0 %v3774
    %v3975 = vpop.f32.mrf.mxu0
    %v3976 = vadd.f32 %v3711, %v3975
    %v3977 = vpop.f32.mrf.mxu0
    %3978 = vmatprep.mubr.f32.mxu0 0.0
    %3979 = vmatmul.mubr.f32.gmra.mxu0 %v3777
    %v3980 = vpop.f32.mrf.mxu0
    %v3981 = vadd.f32 %v3711, %v3980
    %v3982 = vpop.f32.mrf.mxu0
    %3983 = vmatprep.mubr.f32.mxu0 0.0
    %3984 = vmatmul.mubr.f32.gmra.mxu0 %v3780
    %v3985 = vpop.f32.mrf.mxu0
    %v3986 = vadd.f32 %v3711, %v3985
    %v3987 = vpop.f32.mrf.mxu0
    %3988 = vmatprep.mubr.f32.mxu0 0.0
    %3989 = vmatmul.mubr.f32.gmra.mxu0 %v3783
    %v3990 = vpop.f32.mrf.mxu0
    %v3991 = vadd.f32 %v3711, %v3990
    %v3992 = vpop.f32.mrf.mxu0
    %3993 = vmatprep.mubr.f32.mxu0 0.0
    %3994 = vmatmul.mubr.f32.gmra.mxu0 %v3786
    %v3995 = vpop.f32.mrf.mxu0
    %v3996 = vadd.f32 %v3711, %v3995
    %v3997 = vpop.f32.mrf.mxu0
    %3998 = vmatprep.mubr.f32.mxu0 0.0
    %3999 = vmatmul.mubr.f32.gmra.mxu0 %v3789
    %v4000 = vpop.f32.mrf.mxu0
    %v4001 = vadd.f32 %v3711, %v4000
    %v4002 = vpop.f32.mrf.mxu0
    %4003 = vmatprep.mubr.f32.mxu0 0.0
    %4004 = vmatmul.mubr.f32.gmra.mxu0 %v3792
    %v4005 = vpop.f32.mrf.mxu0
    %v4006 = vadd.f32 %v3711, %v4005
    %v4007 = vpop.f32.mrf.mxu0
    %4008 = vmatprep.mubr.f32.mxu0 0.0
    %4009 = vmatmul.mubr.f32.gmra.mxu0 %v3795
    %v4010 = vpop.f32.mrf.mxu0
    %v4011 = vadd.f32 %v3711, %v4010
    %v4012 = vpop.f32.mrf.mxu0
    %4013 = vmatprep.mubr.f32.mxu0 0.0
    %4014 = vmatmul.mubr.f32.gmra.mxu0 %v3798
    %v4015 = vpop.f32.mrf.mxu0
    %v4016 = vadd.f32 %v3711, %v4015
    %v4017 = vpop.f32.mrf.mxu0
    %4018 = vmatprep.mubr.f32.mxu0 0.0
    %4019 = vmatmul.mubr.f32.gmra.mxu0 %v3801
    %v4020 = vpop.f32.mrf.mxu0
    %v4021 = vadd.f32 %v3711, %v4020
    %v4022 = vpop.f32.mrf.mxu0
    %4023 = vmatprep.mubr.f32.mxu0 0.0
    %4024 = vmatmul.mubr.f32.gmra.mxu0 %v3804
    %v4025 = vpop.f32.mrf.mxu0
    %v4026 = vadd.f32 %v3711, %v4025
    %v4027 = vpop.f32.mrf.mxu0
    %4028 = vmatprep.mubr.f32.mxu0 0.0
    %4029 = vmatmul.mubr.f32.gmra.mxu0 %v3807
    %v4030 = vpop.f32.mrf.mxu0
    %v4031 = vadd.f32 %v3711, %v4030
    %v4032 = vpop.f32.mrf.mxu0
    %4033 = vdwg.mxu0
    %v4034 = vpack.c.bf16 %v3671, %v3670
    %v4035 = vpack.c.bf16 %v3673, %v3672
    %v4036 = vpack.c.bf16 %v3675, %v3674
    %v4037 = vpack.c.bf16 %v3677, %v3676
    %v4038 = vpack.c.bf16 %v3679, %v3678
    %v4039 = vpack.c.bf16 %v3681, %v3680
    %v4040 = vpack.c.bf16 %v3683, %v3682
    %v4041 = vpack.c.bf16 %v3685, %v3684
    %v4042 = vpack.c.bf16 %v3687, %v3686
    %v4043 = vpack.c.bf16 %v3689, %v3688
    %v4044 = vpack.c.bf16 %v3691, %v3690
    %v4045 = vpack.c.bf16 %v3693, %v3692
    %v4046 = vpack.c.bf16 %v3695, %v3694
    %v4047 = vpack.c.bf16 %v3697, %v3696
    %v4048 = vpack.c.bf16 %v3699, %v3698
    %v4049 = vpack.c.bf16 %v3701, %v3700
    %4050 = vmatprep.subr.bf16.mxu0 0
    %4051 = vmatpush1.bf16.msra.mxu0 %v4041
    %4052 = vmatprep.subr.bf16.mxu0 0
    %4053 = vmatpush1.bf16.msra.mxu0 %v4040
    %4054 = vmatprep.subr.bf16.mxu0 0
    %4055 = vmatpush1.bf16.msra.mxu0 %v4039
    %4056 = vmatprep.subr.bf16.mxu0 0
    %4057 = vmatpush1.bf16.msra.mxu0 %v4038
    %4058 = vmatprep.subr.bf16.mxu0 0
    %4059 = vmatpush1.bf16.msra.mxu0 %v4037
    %4060 = vmatprep.subr.bf16.mxu0 0
    %4061 = vmatpush1.bf16.msra.mxu0 %v4036
    %4062 = vmatprep.subr.bf16.mxu0 0
    %4063 = vmatpush1.bf16.msra.mxu0 %v4035
    %4064 = vmatprep.subr.bf16.mxu0 0
    %4065 = vmatpush1.bf16.msra.mxu0 %v4034
    %4066 = vmatprep.subr.bf16.mxu0 0
    %4067 = vmatpush2.bf16.msra.mxu0 %v4049
    %4068 = vmatprep.subr.bf16.mxu0 0
    %4069 = vmatpush2.bf16.msra.mxu0 %v4048
    %4070 = vmatprep.subr.bf16.mxu0 0
    %4071 = vmatpush2.bf16.msra.mxu0 %v4047
    %4072 = vmatprep.subr.bf16.mxu0 0
    %4073 = vmatpush2.bf16.msra.mxu0 %v4046
    %4074 = vmatprep.subr.bf16.mxu0 0
    %4075 = vmatpush2.bf16.msra.mxu0 %v4045
    %4076 = vmatprep.subr.bf16.mxu0 0
    %4077 = vmatpush2.bf16.msra.mxu0 %v4044
    %4078 = vmatprep.subr.bf16.mxu0 0
    %4079 = vmatpush2.bf16.msra.mxu0 %v4043
    %4080 = vmatprep.subr.bf16.mxu0 0
    %4081 = vmatpush2.bf16.msra.mxu0 %v4042
    %4082 = vmatprep.mubr.bf16.mxu0 %v732
    %4083 = vmatmul.mubr.bf16.gmra.mxu0 %v731
    %v4084 = vpop.f32.mrf.mxu0
    %v4085 = vadd.f32 0.0, %v4084
    %v4086 = vpop.f32.mrf.mxu0
    %v4087 = vpop.f32.mrf.mxu0
    %v4088 = vadd.f32 0.0, %v4087
    %v4089 = vpop.f32.mrf.mxu0
    %4090 = vmatprep.mubr.bf16.mxu0 %v734
    %4091 = vmatmul.mubr.bf16.gmra.mxu0 %v733
    %v4092 = vpop.f32.mrf.mxu0
    %v4093 = vadd.f32 0.0, %v4092
    %v4094 = vpop.f32.mrf.mxu0
    %v4095 = vpop.f32.mrf.mxu0
    %v4096 = vadd.f32 0.0, %v4095
    %v4097 = vpop.f32.mrf.mxu0
    %4098 = vmatprep.mubr.bf16.mxu0 %v736
    %4099 = vmatmul.mubr.bf16.gmra.mxu0 %v735
    %v4100 = vpop.f32.mrf.mxu0
    %v4101 = vadd.f32 0.0, %v4100
    %v4102 = vpop.f32.mrf.mxu0
    %v4103 = vpop.f32.mrf.mxu0
    %v4104 = vadd.f32 0.0, %v4103
    %v4105 = vpop.f32.mrf.mxu0
    %4106 = vmatprep.mubr.bf16.mxu0 %v738
    %4107 = vmatmul.mubr.bf16.gmra.mxu0 %v737
    %v4108 = vpop.f32.mrf.mxu0
    %v4109 = vadd.f32 0.0, %v4108
    %v4110 = vpop.f32.mrf.mxu0
    %v4111 = vpop.f32.mrf.mxu0
    %v4112 = vadd.f32 0.0, %v4111
    %v4113 = vpop.f32.mrf.mxu0
    %4114 = vmatprep.mubr.bf16.mxu0 %v740
    %4115 = vmatmul.mubr.bf16.gmra.mxu0 %v739
    %v4116 = vpop.f32.mrf.mxu0
    %v4117 = vadd.f32 0.0, %v4116
    %v4118 = vpop.f32.mrf.mxu0
    %v4119 = vpop.f32.mrf.mxu0
    %v4120 = vadd.f32 0.0, %v4119
    %v4121 = vpop.f32.mrf.mxu0
    %4122 = vmatprep.mubr.bf16.mxu0 %v742
    %4123 = vmatmul.mubr.bf16.gmra.mxu0 %v741
    %v4124 = vpop.f32.mrf.mxu0
    %v4125 = vadd.f32 0.0, %v4124
    %v4126 = vpop.f32.mrf.mxu0
    %v4127 = vpop.f32.mrf.mxu0
    %v4128 = vadd.f32 0.0, %v4127
    %v4129 = vpop.f32.mrf.mxu0
    %4130 = vmatprep.mubr.bf16.mxu0 %v744
    %4131 = vmatmul.mubr.bf16.gmra.mxu0 %v743
    %v4132 = vpop.f32.mrf.mxu0
    %v4133 = vadd.f32 0.0, %v4132
    %v4134 = vpop.f32.mrf.mxu0
    %v4135 = vpop.f32.mrf.mxu0
    %v4136 = vadd.f32 0.0, %v4135
    %v4137 = vpop.f32.mrf.mxu0
    %4138 = vmatprep.mubr.bf16.mxu0 %v746
    %4139 = vmatmul.mubr.bf16.gmra.mxu0 %v745
    %v4140 = vpop.f32.mrf.mxu0
    %v4141 = vadd.f32 0.0, %v4140
    %v4142 = vpop.f32.mrf.mxu0
    %v4143 = vpop.f32.mrf.mxu0
    %v4144 = vadd.f32 0.0, %v4143
    %v4145 = vpop.f32.mrf.mxu0
    %4146 = vmatprep.mubr.bf16.mxu0 %v748
    %4147 = vmatmul.mubr.bf16.gmra.mxu0 %v747
    %v4148 = vpop.f32.mrf.mxu0
    %v4149 = vadd.f32 0.0, %v4148
    %v4150 = vpop.f32.mrf.mxu0
    %v4151 = vpop.f32.mrf.mxu0
    %v4152 = vadd.f32 0.0, %v4151
    %v4153 = vpop.f32.mrf.mxu0
    %4154 = vmatprep.mubr.bf16.mxu0 %v750
    %4155 = vmatmul.mubr.bf16.gmra.mxu0 %v749
    %v4156 = vpop.f32.mrf.mxu0
    %v4157 = vadd.f32 0.0, %v4156
    %v4158 = vpop.f32.mrf.mxu0
    %v4159 = vpop.f32.mrf.mxu0
    %v4160 = vadd.f32 0.0, %v4159
    %v4161 = vpop.f32.mrf.mxu0
    %4162 = vmatprep.mubr.bf16.mxu0 %v752
    %4163 = vmatmul.mubr.bf16.gmra.mxu0 %v751
    %v4164 = vpop.f32.mrf.mxu0
    %v4165 = vadd.f32 0.0, %v4164
    %v4166 = vpop.f32.mrf.mxu0
    %v4167 = vpop.f32.mrf.mxu0
    %v4168 = vadd.f32 0.0, %v4167
    %v4169 = vpop.f32.mrf.mxu0
    %4170 = vmatprep.mubr.bf16.mxu0 %v754
    %4171 = vmatmul.mubr.bf16.gmra.mxu0 %v753
    %v4172 = vpop.f32.mrf.mxu0
    %v4173 = vadd.f32 0.0, %v4172
    %v4174 = vpop.f32.mrf.mxu0
    %v4175 = vpop.f32.mrf.mxu0
    %v4176 = vadd.f32 0.0, %v4175
    %v4177 = vpop.f32.mrf.mxu0
    %4178 = vmatprep.mubr.bf16.mxu0 %v756
    %4179 = vmatmul.mubr.bf16.gmra.mxu0 %v755
    %v4180 = vpop.f32.mrf.mxu0
    %v4181 = vadd.f32 0.0, %v4180
    %v4182 = vpop.f32.mrf.mxu0
    %v4183 = vpop.f32.mrf.mxu0
    %v4184 = vadd.f32 0.0, %v4183
    %v4185 = vpop.f32.mrf.mxu0
    %4186 = vmatprep.mubr.bf16.mxu0 %v758
    %4187 = vmatmul.mubr.bf16.gmra.mxu0 %v757
    %v4188 = vpop.f32.mrf.mxu0
    %v4189 = vadd.f32 0.0, %v4188
    %v4190 = vpop.f32.mrf.mxu0
    %v4191 = vpop.f32.mrf.mxu0
    %v4192 = vadd.f32 0.0, %v4191
    %v4193 = vpop.f32.mrf.mxu0
    %4194 = vmatprep.mubr.bf16.mxu0 %v760
    %4195 = vmatmul.mubr.bf16.gmra.mxu0 %v759
    %v4196 = vpop.f32.mrf.mxu0
    %v4197 = vadd.f32 0.0, %v4196
    %v4198 = vpop.f32.mrf.mxu0
    %v4199 = vpop.f32.mrf.mxu0
    %v4200 = vadd.f32 0.0, %v4199
    %v4201 = vpop.f32.mrf.mxu0
    %4202 = vmatprep.mubr.bf16.mxu0 %v762
    %4203 = vmatmul.mubr.bf16.gmra.mxu0 %v761
    %v4204 = vpop.f32.mrf.mxu0
    %v4205 = vadd.f32 0.0, %v4204
    %v4206 = vpop.f32.mrf.mxu0
    %v4207 = vpop.f32.mrf.mxu0
    %v4208 = vadd.f32 0.0, %v4207
    %v4209 = vpop.f32.mrf.mxu0
    %4210 = vdwg.mxu0
    %v4211 = vld [vmem:[%s16] sm:$0xff]
    %v4212 = vld [vmem:[%s16 + $0x8] sm:$0xff]
    %v4213 = vld [vmem:[%s16 + $0x10] sm:$0xff]
    %v4214 = vld [vmem:[%s16 + $0x18] sm:$0xff]
    %v4215 = vld [vmem:[#allocation19] sm:$0x1]
    %v4217 = vlaneseq
    %v4218 = vshrl.u32 %v4217, 7
    %v4219 = vsub.s32 0, %v4218
    %v4220 = vrot.slane %v4215, %v4219
    %v4223 = vsel %vm1361, %v4085, 0
    %v4226 = vsel %vm1361, %v4088, 0
    %v4229 = vsel %vm1361, %v4093, 0
    %v4232 = vsel %vm1361, %v4096, 0
    %v4235 = vsel %vm1361, %v4101, 0
    %v4238 = vsel %vm1361, %v4104, 0
    %v4241 = vsel %vm1361, %v4109, 0
    %v4244 = vsel %vm1361, %v4112, 0
    %v4247 = vsel %vm1361, %v4117, 0
    %v4250 = vsel %vm1361, %v4120, 0
    %v4253 = vsel %vm1361, %v4125, 0
    %v4256 = vsel %vm1361, %v4128, 0
    %v4259 = vsel %vm1361, %v4133, 0
    %v4262 = vsel %vm1361, %v4136, 0
    %v4265 = vsel %vm1361, %v4141, 0
    %v4268 = vsel %vm1361, %v4144, 0
    %v4271 = vsel %vm1361, %v4149, 0
    %v4274 = vsel %vm1361, %v4152, 0
    %v4277 = vsel %vm1361, %v4157, 0
    %v4280 = vsel %vm1361, %v4160, 0
    %v4283 = vsel %vm1361, %v4165, 0
    %v4286 = vsel %vm1361, %v4168, 0
    %v4289 = vsel %vm1361, %v4173, 0
    %v4292 = vsel %vm1361, %v4176, 0
    %v4295 = vsel %vm1361, %v4181, 0
    %v4298 = vsel %vm1361, %v4184, 0
    %v4301 = vsel %vm1361, %v4189, 0
    %v4304 = vsel %vm1361, %v4192, 0
    %v4307 = vsel %vm1361, %v4197, 0
    %v4310 = vsel %vm1361, %v4200, 0
    %v4313 = vsel %vm1361, %v4205, 0
    %v4316 = vsel %vm1361, %v4208, 0
    %4318 = vmatprep.subr.mxu0 0.0
    %4319 = vmatpush1.msra.mxu0 0.0
    %4320 = vmatprep.subr.mxu0 0.0
    %4321 = vmatpush1.msra.mxu0 0.0
    %4322 = vmatprep.subr.mxu0 0.0
    %4323 = vmatpush1.msra.mxu0 0.0
    %4324 = vmatprep.subr.mxu0 0.0
    %4325 = vmatpush1.msra.mxu0 0.0
    %4326 = vmatprep.subr.mxu0 0.0
    %4327 = vmatpush1.msra.mxu0 0.0
    %4328 = vmatprep.subr.mxu0 0.0
    %4329 = vmatpush1.msra.mxu0 0.0
    %4330 = vmatprep.subr.mxu0 0.0
    %4331 = vmatpush1.msra.mxu0 0.0
    %4332 = vmatprep.subr.mxu0 0.0
    %4333 = vmatpush1.msra.mxu0 0.0
    %4334 = vmatprep.subr.mxu0 0.0
    %4335 = vmatpush1.msra.mxu0 0.0
    %4336 = vmatprep.subr.mxu0 0.0
    %4337 = vmatpush1.msra.mxu0 0.0
    %4338 = vmatprep.subr.mxu0 0.0
    %4339 = vmatpush1.msra.mxu0 0.0
    %4340 = vmatprep.subr.mxu0 0.0
    %4341 = vmatpush1.msra.mxu0 0.0
    %4342 = vmatprep.subr.mxu0 0.0
    %4343 = vmatpush1.msra.mxu0 %v4214
    %4344 = vmatprep.subr.mxu0 0.0
    %4345 = vmatpush1.msra.mxu0 %v4213
    %4346 = vmatprep.subr.mxu0 0.0
    %4347 = vmatpush1.msra.mxu0 %v4212
    %4348 = vmatprep.subr.mxu0 0.0
    %4349 = vmatpush1.msra.mxu0 %v4211
    %4350 = vmatprep.subr.mxu0 0.0
    %4351 = vmatpush2.msra.mxu0 0.0
    %4352 = vmatprep.subr.mxu0 0.0
    %4353 = vmatpush2.msra.mxu0 0.0
    %4354 = vmatprep.subr.mxu0 0.0
    %4355 = vmatpush2.msra.mxu0 0.0
    %4356 = vmatprep.subr.mxu0 0.0
    %4357 = vmatpush2.msra.mxu0 0.0
    %4358 = vmatprep.subr.mxu0 0.0
    %4359 = vmatpush2.msra.mxu0 0.0
    %4360 = vmatprep.subr.mxu0 0.0
    %4361 = vmatpush2.msra.mxu0 0.0
    %4362 = vmatprep.subr.mxu0 0.0
    %4363 = vmatpush2.msra.mxu0 0.0
    %4364 = vmatprep.subr.mxu0 0.0
    %4365 = vmatpush2.msra.mxu0 0.0
    %4366 = vmatprep.subr.mxu0 0.0
    %4367 = vmatpush2.msra.mxu0 0.0
    %4368 = vmatprep.subr.mxu0 0.0
    %4369 = vmatpush2.msra.mxu0 0.0
    %4370 = vmatprep.subr.mxu0 0.0
    %4371 = vmatpush2.msra.mxu0 0.0
    %4372 = vmatprep.subr.mxu0 0.0
    %4373 = vmatpush2.msra.mxu0 0.0
    %4374 = vmatprep.subr.mxu0 0.0
    %4375 = vmatpush2.msra.mxu0 0.0
    %4376 = vmatprep.subr.mxu0 0.0
    %4377 = vmatpush2.msra.mxu0 0.0
    %4378 = vmatprep.subr.mxu0 0.0
    %4379 = vmatpush2.msra.mxu0 0.0
    %4380 = vmatprep.subr.mxu0 0.0
    %4381 = vmatpush2.msra.mxu0 0.0
    %4382 = vmatprep.mubr.f32.mxu0 0.0
    %4383 = vmatmul.mubr.f32.gmra.mxu0 %v4223
    %v4384 = vpop.f32.mrf.mxu0
    %v4385 = vadd.f32 %v4220, %v4384
    %v4386 = vpop.f32.mrf.mxu0
    %4387 = vmatprep.mubr.f32.mxu0 0.0
    %4388 = vmatmul.mubr.f32.gmra.mxu0 %v4226
    %v4389 = vpop.f32.mrf.mxu0
    %v4390 = vadd.f32 %v4220, %v4389
    %v4391 = vpop.f32.mrf.mxu0
    %4392 = vmatprep.mubr.f32.mxu0 0.0
    %4393 = vmatmul.mubr.f32.gmra.mxu0 %v4229
    %v4394 = vpop.f32.mrf.mxu0
    %v4395 = vadd.f32 %v4220, %v4394
    %v4396 = vpop.f32.mrf.mxu0
    %4397 = vmatprep.mubr.f32.mxu0 0.0
    %4398 = vmatmul.mubr.f32.gmra.mxu0 %v4232
    %v4399 = vpop.f32.mrf.mxu0
    %v4400 = vadd.f32 %v4220, %v4399
    %v4401 = vpop.f32.mrf.mxu0
    %4402 = vmatprep.mubr.f32.mxu0 0.0
    %4403 = vmatmul.mubr.f32.gmra.mxu0 %v4235
    %v4404 = vpop.f32.mrf.mxu0
    %v4405 = vadd.f32 %v4220, %v4404
    %v4406 = vpop.f32.mrf.mxu0
    %4407 = vmatprep.mubr.f32.mxu0 0.0
    %4408 = vmatmul.mubr.f32.gmra.mxu0 %v4238
    %v4409 = vpop.f32.mrf.mxu0
    %v4410 = vadd.f32 %v4220, %v4409
    %v4411 = vpop.f32.mrf.mxu0
    %4412 = vmatprep.mubr.f32.mxu0 0.0
    %4413 = vmatmul.mubr.f32.gmra.mxu0 %v4241
    %v4414 = vpop.f32.mrf.mxu0
    %v4415 = vadd.f32 %v4220, %v4414
    %v4416 = vpop.f32.mrf.mxu0
    %4417 = vmatprep.mubr.f32.mxu0 0.0
    %4418 = vmatmul.mubr.f32.gmra.mxu0 %v4244
    %v4419 = vpop.f32.mrf.mxu0
    %v4420 = vadd.f32 %v4220, %v4419
    %v4421 = vpop.f32.mrf.mxu0
    %4422 = vmatprep.mubr.f32.mxu0 0.0
    %4423 = vmatmul.mubr.f32.gmra.mxu0 %v4247
    %v4424 = vpop.f32.mrf.mxu0
    %v4425 = vadd.f32 %v4220, %v4424
    %v4426 = vpop.f32.mrf.mxu0
    %4427 = vmatprep.mubr.f32.mxu0 0.0
    %4428 = vmatmul.mubr.f32.gmra.mxu0 %v4250
    %v4429 = vpop.f32.mrf.mxu0
    %v4430 = vadd.f32 %v4220, %v4429
    %v4431 = vpop.f32.mrf.mxu0
    %4432 = vmatprep.mubr.f32.mxu0 0.0
    %4433 = vmatmul.mubr.f32.gmra.mxu0 %v4253
    %v4434 = vpop.f32.mrf.mxu0
    %v4435 = vadd.f32 %v4220, %v4434
    %v4436 = vpop.f32.mrf.mxu0
    %4437 = vmatprep.mubr.f32.mxu0 0.0
    %4438 = vmatmul.mubr.f32.gmra.mxu0 %v4256
    %v4439 = vpop.f32.mrf.mxu0
    %v4440 = vadd.f32 %v4220, %v4439
    %v4441 = vpop.f32.mrf.mxu0
    %4442 = vmatprep.mubr.f32.mxu0 0.0
    %4443 = vmatmul.mubr.f32.gmra.mxu0 %v4259
    %v4444 = vpop.f32.mrf.mxu0
    %v4445 = vadd.f32 %v4220, %v4444
    %v4446 = vpop.f32.mrf.mxu0
    %4447 = vmatprep.mubr.f32.mxu0 0.0
    %4448 = vmatmul.mubr.f32.gmra.mxu0 %v4262
    %v4449 = vpop.f32.mrf.mxu0
    %v4450 = vadd.f32 %v4220, %v4449
    %v4451 = vpop.f32.mrf.mxu0
    %4452 = vmatprep.mubr.f32.mxu0 0.0
    %4453 = vmatmul.mubr.f32.gmra.mxu0 %v4265
    %v4454 = vpop.f32.mrf.mxu0
    %v4455 = vadd.f32 %v4220, %v4454
    %v4456 = vpop.f32.mrf.mxu0
    %4457 = vmatprep.mubr.f32.mxu0 0.0
    %4458 = vmatmul.mubr.f32.gmra.mxu0 %v4268
    %v4459 = vpop.f32.mrf.mxu0
    %v4460 = vadd.f32 %v4220, %v4459
    %v4461 = vpop.f32.mrf.mxu0
    %4462 = vmatprep.mubr.f32.mxu0 0.0
    %4463 = vmatmul.mubr.f32.gmra.mxu0 %v4271
    %v4464 = vpop.f32.mrf.mxu0
    %v4465 = vadd.f32 %v4220, %v4464
    %v4466 = vpop.f32.mrf.mxu0
    %4467 = vmatprep.mubr.f32.mxu0 0.0
    %4468 = vmatmul.mubr.f32.gmra.mxu0 %v4274
    %v4469 = vpop.f32.mrf.mxu0
    %v4470 = vadd.f32 %v4220, %v4469
    %v4471 = vpop.f32.mrf.mxu0
    %4472 = vmatprep.mubr.f32.mxu0 0.0
    %4473 = vmatmul.mubr.f32.gmra.mxu0 %v4277
    %v4474 = vpop.f32.mrf.mxu0
    %v4475 = vadd.f32 %v4220, %v4474
    %v4476 = vpop.f32.mrf.mxu0
    %4477 = vmatprep.mubr.f32.mxu0 0.0
    %4478 = vmatmul.mubr.f32.gmra.mxu0 %v4280
    %v4479 = vpop.f32.mrf.mxu0
    %v4480 = vadd.f32 %v4220, %v4479
    %v4481 = vpop.f32.mrf.mxu0
    %4482 = vmatprep.mubr.f32.mxu0 0.0
    %4483 = vmatmul.mubr.f32.gmra.mxu0 %v4283
    %v4484 = vpop.f32.mrf.mxu0
    %v4485 = vadd.f32 %v4220, %v4484
    %v4486 = vpop.f32.mrf.mxu0
    %4487 = vmatprep.mubr.f32.mxu0 0.0
    %4488 = vmatmul.mubr.f32.gmra.mxu0 %v4286
    %v4489 = vpop.f32.mrf.mxu0
    %v4490 = vadd.f32 %v4220, %v4489
    %v4491 = vpop.f32.mrf.mxu0
    %4492 = vmatprep.mubr.f32.mxu0 0.0
    %4493 = vmatmul.mubr.f32.gmra.mxu0 %v4289
    %v4494 = vpop.f32.mrf.mxu0
    %v4495 = vadd.f32 %v4220, %v4494
    %v4496 = vpop.f32.mrf.mxu0
    %4497 = vmatprep.mubr.f32.mxu0 0.0
    %4498 = vmatmul.mubr.f32.gmra.mxu0 %v4292
    %v4499 = vpop.f32.mrf.mxu0
    %v4500 = vadd.f32 %v4220, %v4499
    %v4501 = vpop.f32.mrf.mxu0
    %4502 = vmatprep.mubr.f32.mxu0 0.0
    %4503 = vmatmul.mubr.f32.gmra.mxu0 %v4295
    %v4504 = vpop.f32.mrf.mxu0
    %v4505 = vadd.f32 %v4220, %v4504
    %v4506 = vpop.f32.mrf.mxu0
    %4507 = vmatprep.mubr.f32.mxu0 0.0
    %4508 = vmatmul.mubr.f32.gmra.mxu0 %v4298
    %v4509 = vpop.f32.mrf.mxu0
    %v4510 = vadd.f32 %v4220, %v4509
    %v4511 = vpop.f32.mrf.mxu0
    %4512 = vmatprep.mubr.f32.mxu0 0.0
    %4513 = vmatmul.mubr.f32.gmra.mxu0 %v4301
    %v4514 = vpop.f32.mrf.mxu0
    %v4515 = vadd.f32 %v4220, %v4514
    %v4516 = vpop.f32.mrf.mxu0
    %4517 = vmatprep.mubr.f32.mxu0 0.0
    %4518 = vmatmul.mubr.f32.gmra.mxu0 %v4304
    %v4519 = vpop.f32.mrf.mxu0
    %v4520 = vadd.f32 %v4220, %v4519
    %v4521 = vpop.f32.mrf.mxu0
    %4522 = vmatprep.mubr.f32.mxu0 0.0
    %4523 = vmatmul.mubr.f32.gmra.mxu0 %v4307
    %v4524 = vpop.f32.mrf.mxu0
    %v4525 = vadd.f32 %v4220, %v4524
    %v4526 = vpop.f32.mrf.mxu0
    %4527 = vmatprep.mubr.f32.mxu0 0.0
    %4528 = vmatmul.mubr.f32.gmra.mxu0 %v4310
    %v4529 = vpop.f32.mrf.mxu0
    %v4530 = vadd.f32 %v4220, %v4529
    %v4531 = vpop.f32.mrf.mxu0
    %4532 = vmatprep.mubr.f32.mxu0 0.0
    %4533 = vmatmul.mubr.f32.gmra.mxu0 %v4313
    %v4534 = vpop.f32.mrf.mxu0
    %v4535 = vadd.f32 %v4220, %v4534
    %v4536 = vpop.f32.mrf.mxu0
    %4537 = vmatprep.mubr.f32.mxu0 0.0
    %4538 = vmatmul.mubr.f32.gmra.mxu0 %v4316
    %v4539 = vpop.f32.mrf.mxu0
    %v4540 = vadd.f32 %v4220, %v4539
    %v4541 = vpop.f32.mrf.mxu0
    %4542 = vdwg.mxu0
    %v4543 = vmax.f32 %v4385, 0.0
    %v4544 = vmax.f32 %v4390, 0.0
    %v4545 = vmax.f32 %v4395, 0.0
    %v4546 = vmax.f32 %v4400, 0.0
    %v4547 = vmax.f32 %v4405, 0.0
    %v4548 = vmax.f32 %v4410, 0.0
    %v4549 = vmax.f32 %v4415, 0.0
    %v4550 = vmax.f32 %v4420, 0.0
    %v4551 = vmax.f32 %v4425, 0.0
    %v4552 = vmax.f32 %v4430, 0.0
    %v4553 = vmax.f32 %v4435, 0.0
    %v4554 = vmax.f32 %v4440, 0.0
    %v4555 = vmax.f32 %v4445, 0.0
    %v4556 = vmax.f32 %v4450, 0.0
    %v4557 = vmax.f32 %v4455, 0.0
    %v4558 = vmax.f32 %v4460, 0.0
    %v4559 = vmax.f32 %v4465, 0.0
    %v4560 = vmax.f32 %v4470, 0.0
    %v4561 = vmax.f32 %v4475, 0.0
    %v4562 = vmax.f32 %v4480, 0.0
    %v4563 = vmax.f32 %v4485, 0.0
    %v4564 = vmax.f32 %v4490, 0.0
    %v4565 = vmax.f32 %v4495, 0.0
    %v4566 = vmax.f32 %v4500, 0.0
    %v4567 = vmax.f32 %v4505, 0.0
    %v4568 = vmax.f32 %v4510, 0.0
    %v4569 = vmax.f32 %v4515, 0.0
    %v4570 = vmax.f32 %v4520, 0.0
    %v4571 = vmax.f32 %v4525, 0.0
    %v4572 = vmax.f32 %v4530, 0.0
    %v4573 = vmax.f32 %v4535, 0.0
    %v4574 = vmax.f32 %v4540, 0.0
    %v4575 = vadd.f32 %v4543, %v3876
    %v4576 = vadd.f32 %v4544, %v3881
    %v4577 = vadd.f32 %v4545, %v3886
    %v4578 = vadd.f32 %v4546, %v3891
    %v4579 = vadd.f32 %v4547, %v3896
    %v4580 = vadd.f32 %v4548, %v3901
    %v4581 = vadd.f32 %v4549, %v3906
    %v4582 = vadd.f32 %v4550, %v3911
    %v4583 = vadd.f32 %v4551, %v3916
    %v4584 = vadd.f32 %v4552, %v3921
    %v4585 = vadd.f32 %v4553, %v3926
    %v4586 = vadd.f32 %v4554, %v3931
    %v4587 = vadd.f32 %v4555, %v3936
    %v4588 = vadd.f32 %v4556, %v3941
    %v4589 = vadd.f32 %v4557, %v3946
    %v4590 = vadd.f32 %v4558, %v3951
    %v4591 = vadd.f32 %v4559, %v3956
    %v4592 = vadd.f32 %v4560, %v3961
    %v4593 = vadd.f32 %v4561, %v3966
    %v4594 = vadd.f32 %v4562, %v3971
    %v4595 = vadd.f32 %v4563, %v3976
    %v4596 = vadd.f32 %v4564, %v3981
    %v4597 = vadd.f32 %v4565, %v3986
    %v4598 = vadd.f32 %v4566, %v3991
    %v4599 = vadd.f32 %v4567, %v3996
    %v4600 = vadd.f32 %v4568, %v4001
    %v4601 = vadd.f32 %v4569, %v4006
    %v4602 = vadd.f32 %v4570, %v4011
    %v4603 = vadd.f32 %v4571, %v4016
    %v4604 = vadd.f32 %v4572, %v4021
    %v4605 = vadd.f32 %v4573, %v4026
    %v4606 = vadd.f32 %v4574, %v4031
    %vm4607 = vcmask 64512
    %4608 = vst.msk [vmem:[%s20] sm:$0xff] %vm4607, %v4575
    %4609 = vst.msk [vmem:[%s20 + $0x8] sm:$0xff] %vm4607, %v4576
    %4610 = vst.msk [vmem:[%s20 + $0x10] sm:$0xff] %vm4607, %v4577
    %4611 = vst.msk [vmem:[%s20 + $0x18] sm:$0xff] %vm4607, %v4578
    %4612 = vst.msk [vmem:[%s20 + $0x20] sm:$0xff] %vm4607, %v4579
    %4613 = vst.msk [vmem:[%s20 + $0x28] sm:$0xff] %vm4607, %v4580
    %4614 = vst.msk [vmem:[%s20 + $0x30] sm:$0xff] %vm4607, %v4581
    %4615 = vst.msk [vmem:[%s20 + $0x38] sm:$0xff] %vm4607, %v4582
    %4616 = vst.msk [vmem:[%s20 + $0x40] sm:$0xff] %vm4607, %v4583
    %4617 = vst.msk [vmem:[%s20 + $0x48] sm:$0xff] %vm4607, %v4584
    %4618 = vst.msk [vmem:[%s20 + $0x50] sm:$0xff] %vm4607, %v4585
    %4619 = vst.msk [vmem:[%s20 + $0x58] sm:$0xff] %vm4607, %v4586
    %4620 = vst.msk [vmem:[%s20 + $0x60] sm:$0xff] %vm4607, %v4587
    %4621 = vst.msk [vmem:[%s20 + $0x68] sm:$0xff] %vm4607, %v4588
    %4622 = vst.msk [vmem:[%s20 + $0x70] sm:$0xff] %vm4607, %v4589
    %4623 = vst.msk [vmem:[%s20 + $0x78] sm:$0xff] %vm4607, %v4590
    %4624 = vst.msk [vmem:[%s20 + $0x80] sm:$0xff] %vm4607, %v4591
    %4625 = vst.msk [vmem:[%s20 + $0x88] sm:$0xff] %vm4607, %v4592
    %4626 = vst.msk [vmem:[%s20 + $0x90] sm:$0xff] %vm4607, %v4593
    %4627 = vst.msk [vmem:[%s20 + $0x98] sm:$0xff] %vm4607, %v4594
    %4628 = vst.msk [vmem:[%s20 + $0xa0] sm:$0xff] %vm4607, %v4595
    %4629 = vst.msk [vmem:[%s20 + $0xa8] sm:$0xff] %vm4607, %v4596
    %4630 = vst.msk [vmem:[%s20 + $0xb0] sm:$0xff] %vm4607, %v4597
    %4631 = vst.msk [vmem:[%s20 + $0xb8] sm:$0xff] %vm4607, %v4598
    %4632 = vst.msk [vmem:[%s20 + $0xc0] sm:$0xff] %vm4607, %v4599
    %4633 = vst.msk [vmem:[%s20 + $0xc8] sm:$0xff] %vm4607, %v4600
    %4634 = vst.msk [vmem:[%s20 + $0xd0] sm:$0xff] %vm4607, %v4601
    %4635 = vst.msk [vmem:[%s20 + $0xd8] sm:$0xff] %vm4607, %v4602
    %4636 = vst.msk [vmem:[%s20 + $0xe0] sm:$0xff] %vm4607, %v4603
    %4637 = vst.msk [vmem:[%s20 + $0xe8] sm:$0xff] %vm4607, %v4604
    %4638 = vst.msk [vmem:[%s20 + $0xf0] sm:$0xff] %vm4607, %v4605
    %4639 = vst.msk [vmem:[%s20 + $0xf8] sm:$0xff] %vm4607, %v4606
    // Predicated region
    $region134: #{tpu_custom_call.1} parent=1 // pred_check
      _
    $region135: #{tpu_custom_call.1} parent=1 // pred_check_branch
      %4641 = sbr.rel (0) target = $region137
    $region136: #{tpu_custom_call.1} parent=1 // pred_region
      _
    $region137: #{tpu_custom_call.1} parent=1 // pred_fallthru
      _
    // Predicated region
    $region138: #{tpu_custom_call.1} parent=1 // pred_check
      _
    $region139: #{tpu_custom_call.1} parent=1 // pred_check_branch
      %4643 = sbr.rel (0) target = $region141
    $region140: #{tpu_custom_call.1} parent=1 // pred_region
      _
    $region141: #{tpu_custom_call.1} parent=1 // pred_fallthru
      _
    %4644 = vsyncpa [#allocation3], 1
    %4645 = vsyncpa [#allocation5], 1
    %4646 = vsyncpa [#allocation8], 1
    %4647 = vsyncpa [#allocation11], 1
    %4648 = vsyncpa [#allocation14], 1
    %4649 = vsyncpa [#allocation17], 1
    %4650 = vsyncpa [#allocation20], 1

</llo_original>
